<compile_context>
chip_gen: v6e
topology: v6e:2x2x1
jax: 0.10.0
libtpu: 0.0.40
codegen_flags: <defaults>
</compile_context>

<pallas_src>
import math
import functools

import jax
import jax.numpy as jnp
from jax import lax
from jax.experimental import pallas as pl
from jax.experimental.pallas import tpu as pltpu


# ----------------------------------------------------------------------------
# Tile selection
# ----------------------------------------------------------------------------

# Conservative tiles: fit comfortably in v7x's 64 MiB VMEM when double-buffered,
# while staying (8,128)-aligned and large enough to keep v5e/v6e MXUs fed.
_TM, _TN, _TK = 256, 256, 512


def _pick_tile(dim, target):
    # Use the full dimension when it is small or does not divide evenly
    # (correctness first); otherwise the aligned target tile.
    if dim <= target or dim % target != 0:
        return dim
    return target


# ----------------------------------------------------------------------------
# Pallas kernels
# ----------------------------------------------------------------------------

def _matmul_bias_kernel(x_ref, w_ref, b_ref, o_ref, acc_ref, *, activation):
    """out = act(x @ w + b); bf16 operands, f32 accumulate. Grid (Mi, Nj, Kk)."""
    @pl.when(pl.program_id(2) == 0)
    def _():
        acc_ref[...] = jnp.zeros_like(acc_ref)

    acc_ref[...] += jnp.dot(x_ref[...], w_ref[...],
                            preferred_element_type=jnp.float32)

    @pl.when(pl.program_id(2) == pl.num_programs(2) - 1)
    def _():
        y = acc_ref[...] + b_ref[...]
        if activation == "relu":
            y = jnp.maximum(y, 0.0)
        o_ref[...] = y.astype(o_ref.dtype)


def _matmul_bias_res_ln_kernel(x_ref, w_ref, b_ref, res_ref, a_ref, g_ref,
                               o_ref, acc_ref, *, eps):
    """out = LayerNorm(res + x @ w + b); full N (=D) on lane axis. Grid (Mi, Kk)."""
    @pl.when(pl.program_id(1) == 0)
    def _():
        acc_ref[...] = jnp.zeros_like(acc_ref)

    acc_ref[...] += jnp.dot(x_ref[...], w_ref[...],
                            preferred_element_type=jnp.float32)

    @pl.when(pl.program_id(1) == pl.num_programs(1) - 1)
    def _():
        y = acc_ref[...] + b_ref[...] + res_ref[...]
        D = y.shape[-1]
        mean = jnp.mean(y, axis=-1, keepdims=True)
        # Matches torch x.std(-1) (Bessel, ddof=1) and eps added to std.
        var = jnp.sum((y - mean) ** 2, axis=-1, keepdims=True) * (1.0 / (D - 1))
        std = jnp.sqrt(var)
        o_ref[...] = a_ref[...] * (y - mean) / (std + eps) + g_ref[...]


def _ln_kernel(x_ref, a_ref, b_ref, o_ref, *, eps):
    x = x_ref[...]
    D = x.shape[-1]
    mean = jnp.mean(x, axis=-1, keepdims=True)
    var = jnp.sum((x - mean) ** 2, axis=-1, keepdims=True) * (1.0 / (D - 1))
    std = jnp.sqrt(var)
    o_ref[...] = a_ref[...] * (x - mean) / (std + eps) + b_ref[...]


def _attn_kernel(q_ref, k_ref, v_ref, bias_ref, o_ref, *, n_heads, d_h, scale):
    """One batch per grid step, all heads in (S, H*dh) layout (no host transposes)."""
    bias = bias_ref[0]                                   # (Sq, Sk) additive f32
    ctxs = []
    for h in range(n_heads):
        lo = h * d_h
        qh = q_ref[0, :, lo:lo + d_h]                    # (Sq, dh) bf16
        kh = k_ref[0, :, lo:lo + d_h]                    # (Sk, dh) bf16
        vh = v_ref[0, :, lo:lo + d_h]                    # (Sk, dh) bf16
        # Contract on dh directly (no explicit transpose of K).
        s = lax.dot_general(qh, kh, (((1,), (1,)), ((), ())),
                            preferred_element_type=jnp.float32) * scale + bias
        s = s - jnp.max(s, axis=-1, keepdims=True)
        e = jnp.exp(s)
        denom = jnp.sum(e, axis=-1, keepdims=True)
        # approx=True would move the divide fully onto the EUP; kept exact here
        # so the kernel matches the f32 softmax normalization bit-for-bit-ish.
        p = e * pl.reciprocal(denom, approx=False)
        ctx = jnp.dot(p.astype(jnp.bfloat16), vh,
                      preferred_element_type=jnp.float32)
        ctxs.append(ctx)
    # Single lane-dense store of the full (Sq, D) context block.
    o_ref[0] = jnp.concatenate(ctxs, axis=-1).astype(o_ref.dtype)


# ----------------------------------------------------------------------------
# pallas_call wrappers
# ----------------------------------------------------------------------------

def matmul_bias(x, w, b, out_dtype, activation=None):
    M, K = x.shape
    N = w.shape[1]
    tm, tn, tk = _pick_tile(M, _TM), _pick_tile(N, _TN), _pick_tile(K, _TK)
    kernel = functools.partial(_matmul_bias_kernel, activation=activation)
    return pl.pallas_call(
        kernel,
        out_shape=jax.ShapeDtypeStruct((M, N), out_dtype),
        grid=(M // tm, N // tn, K // tk),
        in_specs=[
            pl.BlockSpec((tm, tk), lambda i, j, k: (i, k)),
            pl.BlockSpec((tk, tn), lambda i, j, k: (k, j)),
            pl.BlockSpec((1, tn), lambda i, j, k: (0, j)),
        ],
        out_specs=pl.BlockSpec((tm, tn), lambda i, j, k: (i, j)),
        scratch_shapes=[pltpu.VMEM((tm, tn), jnp.float32)],
        compiler_params=pltpu.CompilerParams(
            dimension_semantics=("parallel", "parallel", "arbitrary")),
    )(x, w, b.reshape(1, N))


def matmul_bias_res_ln(x, w, b, res, alpha, beta, eps=1e-6):
    M, K = x.shape
    N = w.shape[1]                     # == d_model, kept full for LN epilogue
    tm, tk = _pick_tile(M, _TM), _pick_tile(K, _TK)
    kernel = functools.partial(_matmul_bias_res_ln_kernel, eps=eps)
    return pl.pallas_call(
        kernel,
        out_shape=jax.ShapeDtypeStruct((M, N), jnp.float32),
        grid=(M // tm, K // tk),
        in_specs=[
            pl.BlockSpec((tm, tk), lambda i, k: (i, k)),
            pl.BlockSpec((tk, N), lambda i, k: (k, 0)),
            pl.BlockSpec((1, N), lambda i, k: (0, 0)),
            pl.BlockSpec((tm, N), lambda i, k: (i, 0)),
            pl.BlockSpec((1, N), lambda i, k: (0, 0)),
            pl.BlockSpec((1, N), lambda i, k: (0, 0)),
        ],
        out_specs=pl.BlockSpec((tm, N), lambda i, k: (i, 0)),
        scratch_shapes=[pltpu.VMEM((tm, N), jnp.float32)],
        compiler_params=pltpu.CompilerParams(
            dimension_semantics=("parallel", "arbitrary")),
    )(x, w, b.reshape(1, N), res, alpha.reshape(1, N), beta.reshape(1, N))


def layer_norm(x2d, alpha, beta, eps=1e-6):
    M, D = x2d.shape
    tm = _pick_tile(M, _TM)
    kernel = functools.partial(_ln_kernel, eps=eps)
    return pl.pallas_call(
        kernel,
        out_shape=jax.ShapeDtypeStruct((M, D), jnp.float32),
        grid=(M // tm,),
        in_specs=[
            pl.BlockSpec((tm, D), lambda i: (i, 0)),
            pl.BlockSpec((1, D), lambda i: (0, 0)),
            pl.BlockSpec((1, D), lambda i: (0, 0)),
        ],
        out_specs=pl.BlockSpec((tm, D), lambda i: (i, 0)),
        compiler_params=pltpu.CompilerParams(dimension_semantics=("parallel",)),
    )(x2d, alpha.reshape(1, D), beta.reshape(1, D))


def attention(q, k, v, bias, n_heads):
    # q: (B, Sq, D) bf16, k/v: (B, Sk, D) bf16, bias: (B, Sq, Sk) f32 additive.
    B, Sq, D = q.shape
    Sk = k.shape[1]
    d_h = D // n_heads
    scale = 1.0 / math.sqrt(d_h)
    kernel = functools.partial(_attn_kernel, n_heads=n_heads, d_h=d_h, scale=scale)
    return pl.pallas_call(
        kernel,
        out_shape=jax.ShapeDtypeStruct((B, Sq, D), jnp.bfloat16),
        grid=(B,),
        in_specs=[
            pl.BlockSpec((1, Sq, D), lambda b: (b, 0, 0)),
            pl.BlockSpec((1, Sk, D), lambda b: (b, 0, 0)),
            pl.BlockSpec((1, Sk, D), lambda b: (b, 0, 0)),
            pl.BlockSpec((1, Sq, Sk), lambda b: (b, 0, 0)),
        ],
        out_specs=pl.BlockSpec((1, Sq, D), lambda b: (b, 0, 0)),
        compiler_params=pltpu.CompilerParams(dimension_semantics=("parallel",)),
    )(q, k, v, bias)


# ----------------------------------------------------------------------------
# Module glue (matching the PyTorch Decoder forward)
# ----------------------------------------------------------------------------

def mha_self(p, x_bf, trg_bias, B, S, D, n_heads):
    qkv = matmul_bias(x_bf, p["w_qkv"], p["b_qkv"], out_dtype=jnp.bfloat16)
    qkv = qkv.reshape(B, S, 3 * D)
    q, k, v = qkv[:, :, :D], qkv[:, :, D:2 * D], qkv[:, :, 2 * D:]
    ctx = attention(q, k, v, trg_bias, n_heads)          # (B, S, D) bf16
    return ctx.reshape(B * S, D)


def mha_cross(p, x_bf, xenc_bf, enc_bias, B, Sq, Sk, D, n_heads):
    q = matmul_bias(x_bf, p["w_q"], p["b_q"], out_dtype=jnp.bfloat16)
    kv = matmul_bias(xenc_bf, p["w_kv"], p["b_kv"], out_dtype=jnp.bfloat16)
    q = q.reshape(B, Sq, D)
    kv = kv.reshape(B, Sk, 2 * D)
    k, v = kv[:, :, :D], kv[:, :, D:]
    ctx = attention(q, k, v, enc_bias, n_heads)          # (B, Sq, D) bf16
    return ctx.reshape(B * Sq, D)


def decoder_block(p, x, xenc_bf, trg_bias, enc_bias, n_heads):
    B, S, D = x.shape
    x2d = x.reshape(B * S, D)
    Sk = xenc_bf.shape[0] // B

    # --- self-attention + residual + norm1 (dropout = identity in eval) ---
    ctx = mha_self(p["mha1"], x2d.astype(jnp.bfloat16), trg_bias, B, S, D, n_heads)
    x2d = matmul_bias_res_ln(ctx, p["mha1"]["w_o"], p["mha1"]["b_o"], x2d,
                             p["norm1_a"], p["norm1_b"])

    # --- cross-attention + residual + norm2 ---
    ctx = mha_cross(p["mha2"], x2d.astype(jnp.bfloat16), xenc_bf, enc_bias,
                    B, S, Sk, D, n_heads)
    x2d = matmul_bias_res_ln(ctx, p["mha2"]["w_o"], p["mha2"]["b_o"], x2d,
                             p["norm2_a"], p["norm2_b"])

    # --- feed-forward + residual + norm3 ---
    h = matmul_bias(x2d.astype(jnp.bfloat16), p["w1"], p["b1"],
                    out_dtype=jnp.bfloat16, activation="relu")
    x2d = matmul_bias_res_ln(h, p["w2"], p["b2"], x2d,
                             p["norm3_a"], p["norm3_b"])
    return x2d.reshape(B, S, D)


def decoder(params, x, x_enc, trg_mask, enc_mask, n_heads):
    # Top-level dropout is identity in eval mode.
    B, S, D = x.shape
    Sk = x_enc.shape[1]
    # Build additive mask biases once; reused by every layer / head.
    trg_bias = jnp.where(trg_mask == 0, -1000000000.0, 0.0).astype(jnp.float32)
    enc_bias = jnp.where(enc_mask == 0, -1000000000.0, 0.0).astype(jnp.float32)
    xenc_bf = x_enc.reshape(B * Sk, D).astype(jnp.bfloat16)
    for p in params["blocks"]:
        x = decoder_block(p, x, xenc_bf, trg_bias, enc_bias, n_heads)
    out = layer_norm(x.reshape(B * S, D), params["norm_a"], params["norm_b"])
    return out.reshape(B, S, D)


decoder_jit = jax.jit(decoder, static_argnums=(5,))


# ----------------------------------------------------------------------------
# Parameter init + packing (fused / bf16 weights for the kernels)
# ----------------------------------------------------------------------------

def init_params(key, d_model, n_heads, n_layers):
    def lin(k, din, dout):
        kw, kb = jax.random.split(k)
        return (0.02 * jax.random.normal(kw, (din, dout), jnp.float32),
                0.02 * jax.random.normal(kb, (dout,), jnp.float32))

    def mha(k):
        ks = jax.random.split(k, 4)
        wq, bq = lin(ks[0], d_model, d_model)
        wk, bk = lin(ks[1], d_model, d_model)
        wv, bv = lin(ks[2], d_model, d_model)
        wo, bo = lin(ks[3], d_model, d_model)
        return dict(wq=wq, bq=bq, wk=wk, bk=bk, wv=wv, bv=bv, wo=wo, bo=bo)

    blocks = []
    keys = jax.random.split(key, n_layers + 1)
    for li in range(n_layers):
        ks = jax.random.split(keys[li], 4)
        w1, b1 = lin(ks[2], d_model, 4 * d_model)
        w2, b2 = lin(ks[3], 4 * d_model, d_model)
        blocks.append(dict(
            mha1=mha(ks[0]), mha2=mha(ks[1]),
            w1=w1, b1=b1, w2=w2, b2=b2,
            norm1_a=jnp.ones((d_model,), jnp.float32),
            norm1_b=jnp.zeros((d_model,), jnp.float32),
            norm2_a=jnp.ones((d_model,), jnp.float32),
            norm2_b=jnp.zeros((d_model,), jnp.float32),
            norm3_a=jnp.ones((d_model,), jnp.float32),
            norm3_b=jnp.zeros((d_model,), jnp.float32),
        ))
    return dict(blocks=blocks,
                norm_a=jnp.ones((d_model,), jnp.float32),
                norm_b=jnp.zeros((d_model,), jnp.float32))


def prepare_params(params):
    """Pre-concatenate QKV / KV weights and pre-cast matmul weights to bf16."""
    bf = lambda a: a.astype(jnp.bfloat16)
    blocks = []
    for p in params["blocks"]:
        m1, m2 = p["mha1"], p["mha2"]
        blocks.append(dict(
            mha1=dict(
                w_qkv=bf(jnp.concatenate([m1["wq"], m1["wk"], m1["wv"]], axis=1)),
                b_qkv=jnp.concatenate([m1["bq"], m1["bk"], m1["bv"]]),
                w_o=bf(m1["wo"]), b_o=m1["bo"]),
            mha2=dict(
                w_q=bf(m2["wq"]), b_q=m2["bq"],
                w_kv=bf(jnp.concatenate([m2["wk"], m2["wv"]], axis=1)),
                b_kv=jnp.concatenate([m2["bk"], m2["bv"]]),
                w_o=bf(m2["wo"]), b_o=m2["bo"]),
            w1=bf(p["w1"]), b1=p["b1"], w2=bf(p["w2"]), b2=p["b2"],
            norm1_a=p["norm1_a"], norm1_b=p["norm1_b"],
            norm2_a=p["norm2_a"], norm2_b=p["norm2_b"],
            norm3_a=p["norm3_a"], norm3_b=p["norm3_b"],
        ))
    return dict(blocks=blocks, norm_a=params["norm_a"], norm_b=params["norm_b"])


# ----------------------------------------------------------------------------
# Pure-JAX reference (mirrors the kernels' bf16-operand / f32-accumulate math)
# ----------------------------------------------------------------------------

def _ref_ln(x, a, b, eps=1e-6):
    D = x.shape[-1]
    mean = jnp.mean(x, axis=-1, keepdims=True)
    var = jnp.sum((x - mean) ** 2, axis=-1, keepdims=True) / (D - 1)
    return a * (x - mean) / (jnp.sqrt(var) + eps) + b


def _ref_proj(x_bf, w, b):
    return jnp.dot(x_bf, w.astype(jnp.bfloat16),
                   preferred_element_type=jnp.float32) + b


def _ref_mha(p, q_in, k_in, v_in, bias, n_heads):
    B, Sq, D = q_in.shape
    Sk = k_in.shape[1]
    d_h = D // n_heads
    scale = 1.0 / math.sqrt(d_h)
    q_bf = q_in.reshape(B * Sq, D).astype(jnp.bfloat16)
    kv_bf = k_in.reshape(B * Sk, D).astype(jnp.bfloat16)
    q = _ref_proj(q_bf, p["wq"], p["bq"]).astype(jnp.bfloat16)
    k = _ref_proj(kv_bf, p["wk"], p["bk"]).astype(jnp.bfloat16)
    v = _ref_proj(kv_bf, p["wv"], p["bv"]).astype(jnp.bfloat16)
    q = q.reshape(B, Sq, n_heads, d_h).transpose(0, 2, 1, 3)
    k = k.reshape(B, Sk, n_heads, d_h).transpose(0, 2, 1, 3)
    v = v.reshape(B, Sk, n_heads, d_h).transpose(0, 2, 1, 3)
    s = jnp.einsum("bhqd,bhkd->bhqk", q, k,
                   preferred_element_type=jnp.float32) * scale
    s = s + bias[:, None, :, :]
    s = s - jnp.max(s, axis=-1, keepdims=True)
    e = jnp.exp(s)
    a = e / jnp.sum(e, axis=-1, keepdims=True)
    ctx = jnp.einsum("bhqk,bhkd->bhqd", a.astype(jnp.bfloat16), v,
                     preferred_element_type=jnp.float32)
    ctx = ctx.astype(jnp.bfloat16).transpose(0, 2, 1, 3).reshape(B * Sq, D)
    out = jnp.dot(ctx, p["wo"].astype(jnp.bfloat16),
                  preferred_element_type=jnp.float32) + p["bo"]
    return out.reshape(B, Sq, D)


def decoder_reference(params, x, x_enc, trg_mask, enc_mask, n_heads):
    trg_bias = jnp.where(trg_mask == 0, -1000000000.0, 0.0).astype(jnp.float32)
    enc_bias = jnp.where(enc_mask == 0, -1000000000.0, 0.0).astype(jnp.float32)
    for p in params["blocks"]:
        x = _ref_ln(x + _ref_mha(p["mha1"], x, x, x, trg_bias, n_heads),
                    p["norm1_a"], p["norm1_b"])
        x = _ref_ln(x + _ref_mha(p["mha2"], x, x_enc, x_enc, enc_bias, n_heads),
                    p["norm2_a"], p["norm2_b"])
        B, S, D = x.shape
        x_bf = x.reshape(B * S, D).astype(jnp.bfloat16)
        h = jnp.maximum(_ref_proj(x_bf, p["w1"], p["b1"]), 0.0).astype(jnp.bfloat16)
        y = (jnp.dot(h, p["w2"].astype(jnp.bfloat16),
                     preferred_element_type=jnp.float32) + p["b2"]).reshape(B, S, D)
        x = _ref_ln(x + y, p["norm3_a"], p["norm3_b"])
    return _ref_ln(x, params["norm_a"], params["norm_b"])


# ----------------------------------------------------------------------------
# Main
# ----------------------------------------------------------------------------

if __name__ == "__main__":
    B, S, S_ENC = 2, 8, 8
    D_MODEL, N_HEADS, N_LAYERS = 32, 4, 2

    root = jax.random.PRNGKey(0)
    k_par, k_x, k_enc = jax.random.split(root, 3)

    raw_params = init_params(k_par, D_MODEL, N_HEADS, N_LAYERS)
    kernel_params = prepare_params(raw_params)

    x = jax.random.normal(k_x, (B, S, D_MODEL), jnp.float32)
    x_enc = jax.random.normal(k_enc, (B, S_ENC, D_MODEL), jnp.float32)

    # causal mask for self-attention, full mask for cross-attention
    trg_mask = jnp.tril(jnp.ones((S, S), jnp.float32))[None].repeat(B, axis=0)
    enc_mask = jnp.ones((B, S, S_ENC), jnp.float32)

    out = decoder_jit(kernel_params, x, x_enc, trg_mask, enc_mask, N_HEADS)
    out = jax.block_until_ready(out)

    ref = decoder_reference(raw_params, x, x_enc, trg_mask, enc_mask, N_HEADS)
    assert out.shape == (B, S, D_MODEL)
    assert jnp.allclose(out, ref, atol=2e-3, rtol=2e-3), "mismatch vs JAX reference"

    print("KERNEL_OK")
</pallas_src>

<mosaic_0001>
module attributes {stable_mosaic.version = 11 : i64} {
  func.func @_matmul_bias_kernel(%arg0: i32, %arg1: i32, %arg2: i32, %arg3: memref<16x32xbf16, #tpu.memory_space<vmem>>, %arg4: memref<32x96xbf16, #tpu.memory_space<vmem>>, %arg5: memref<1x96xf32, #tpu.memory_space<vmem>>, %arg6: memref<16x96xbf16, #tpu.memory_space<vmem>>, %arg7: memref<16x96xf32, #tpu.memory_space<vmem>>) attributes {dimension_semantics = [#tpu.dimension_semantics<parallel>, #tpu.dimension_semantics<parallel>, #tpu.dimension_semantics<arbitrary>], iteration_bounds = array<i64: 1, 1, 1>, scalar_prefetch = 0 : i64, scratch_operands = 1 : i64, tpu.core_type = #tpu.core_type<tc>, window_params = [{transform_indices = @transform_0, window_bounds = array<i64: 16, 32>}, {transform_indices = @transform_1, window_bounds = array<i64: 32, 96>}, {transform_indices = @transform_2, window_bounds = array<i64: 1, 96>}, {transform_indices = @transform_3, window_bounds = array<i64: 16, 96>}]} {
    %c0_i32 = arith.constant 0 : i32
    %0 = arith.cmpi eq, %arg2, %c0_i32 : i32
    %1 = arith.extui %0 : i1 to i32
    %c0_i32_0 = arith.constant 0 : i32
    %2 = arith.cmpi ne, %1, %c0_i32_0 : i32
    scf.if %2 {
      %cst_10 = arith.constant 0.000000e+00 : f32
      %12 = vector.broadcast %cst_10 : f32 to vector<16x96xf32>
      %c0_11 = arith.constant 0 : index
      %c0_12 = arith.constant 0 : index
      %13 = vector.load %arg7[%c0_11, %c0_12] : memref<16x96xf32, #tpu.memory_space<vmem>>, vector<16x96xf32>
      tpu.vector_store %arg7[%c0_11, %c0_12], %12 {strides = array<i32>} : memref<16x96xf32, #tpu.memory_space<vmem>>, vector<16x96xf32>,
    } else {
    }
    %c0 = arith.constant 0 : index
    %c0_1 = arith.constant 0 : index
    %3 = vector.load %arg7[%c0, %c0_1] : memref<16x96xf32, #tpu.memory_space<vmem>>, vector<16x96xf32>
    %c0_2 = arith.constant 0 : index
    %c0_3 = arith.constant 0 : index
    %4 = vector.load %arg3[%c0_2, %c0_3] : memref<16x32xbf16, #tpu.memory_space<vmem>>, vector<16x32xbf16>
    %c0_4 = arith.constant 0 : index
    %c0_5 = arith.constant 0 : index
    %5 = vector.load %arg4[%c0_4, %c0_5] : memref<32x96xbf16, #tpu.memory_space<vmem>>, vector<32x96xbf16>
    %cst = arith.constant dense<0.000000e+00> : vector<16x96xf32>
    %6 = tpu.matmul %4, %5, %cst {dimension_numbers = #tpu.dot_dimension_numbers<[1], [0], [0], [1], [0, 0, 1, 1], [], []>} : vector<16x32xbf16>, vector<32x96xbf16>, vector<16x96xf32> -> vector<16x96xf32>
    %7 = arith.addf %3, %6 : vector<16x96xf32>
    %c0_6 = arith.constant 0 : index
    %c0_7 = arith.constant 0 : index
    %8 = vector.load %arg7[%c0_6, %c0_7] : memref<16x96xf32, #tpu.memory_space<vmem>>, vector<16x96xf32>
    tpu.vector_store %arg7[%c0_6, %c0_7], %7 {strides = array<i32>} : memref<16x96xf32, #tpu.memory_space<vmem>>, vector<16x96xf32>,
    %c0_i32_8 = arith.constant 0 : i32
    %9 = arith.cmpi eq, %arg2, %c0_i32_8 : i32
    %10 = arith.extui %9 : i1 to i32
    %c0_i32_9 = arith.constant 0 : i32
    %11 = arith.cmpi ne, %10, %c0_i32_9 : i32
    scf.if %11 {
      %c0_10 = arith.constant 0 : index
      %c0_11 = arith.constant 0 : index
      %12 = vector.load %arg7[%c0_10, %c0_11] : memref<16x96xf32, #tpu.memory_space<vmem>>, vector<16x96xf32>
      %c0_12 = arith.constant 0 : index
      %c0_13 = arith.constant 0 : index
      %13 = vector.load %arg5[%c0_12, %c0_13] : memref<1x96xf32, #tpu.memory_space<vmem>>, vector<1x96xf32>
      %14 = vector.broadcast %13 : vector<1x96xf32> to vector<16x96xf32>
      %15 = arith.addf %12, %14 : vector<16x96xf32>
      %16 = arith.truncf %15 : vector<16x96xf32> to vector<16x96xbf16>
      %c0_14 = arith.constant 0 : index
      %c0_15 = arith.constant 0 : index
      %17 = vector.load %arg6[%c0_14, %c0_15] : memref<16x96xbf16, #tpu.memory_space<vmem>>, vector<16x96xbf16>
      tpu.vector_store %arg6[%c0_14, %c0_15], %16 {strides = array<i32>} : memref<16x96xbf16, #tpu.memory_space<vmem>>, vector<16x96xbf16>,
    } else {
    }
    return
  }
  func.func @transform_0(%arg0: i32, %arg1: i32, %arg2: i32) -> (i32, i32) {
    %c0_i32 = arith.constant 0 : i32
    return %arg0, %arg2 : i32, i32
  }
  func.func @transform_1(%arg0: i32, %arg1: i32, %arg2: i32) -> (i32, i32) {
    %c0_i32 = arith.constant 0 : i32
    return %arg2, %arg1 : i32, i32
  }
  func.func @transform_2(%arg0: i32, %arg1: i32, %arg2: i32) -> (i32, i32) {
    %c0_i32 = arith.constant 0 : i32
    %c0_i32_0 = arith.constant 0 : i32
    return %c0_i32, %arg1 : i32, i32
  }
  func.func @transform_3(%arg0: i32, %arg1: i32, %arg2: i32) -> (i32, i32) {
    %c0_i32 = arith.constant 0 : i32
    return %arg0, %arg1 : i32, i32
  }
}

module attributes {stable_mosaic.version = 11 : i64} {
  func.func @_attn_kernel(%arg0: i32, %arg1: memref<1x8x32xbf16, #tpu.memory_space<vmem>>, %arg2: memref<1x8x32xbf16, #tpu.memory_space<vmem>>, %arg3: memref<1x8x32xbf16, #tpu.memory_space<vmem>>, %arg4: memref<1x8x8xf32, #tpu.memory_space<vmem>>, %arg5: memref<1x8x32xbf16, #tpu.memory_space<vmem>>) attributes {dimension_semantics = [#tpu.dimension_semantics<parallel>], iteration_bounds = array<i64: 2>, scalar_prefetch = 0 : i64, scratch_operands = 0 : i64, tpu.core_type = #tpu.core_type<tc>, window_params = [{transform_indices = @transform_0, window_bounds = array<i64: 1, 8, 32>}, {transform_indices = @transform_1, window_bounds = array<i64: 1, 8, 32>}, {transform_indices = @transform_2, window_bounds = array<i64: 1, 8, 32>}, {transform_indices = @transform_3, window_bounds = array<i64: 1, 8, 8>}, {transform_indices = @transform_4, window_bounds = array<i64: 1, 8, 32>}]} {
    %c0 = arith.constant 0 : index
    %c0_0 = arith.constant 0 : index
    %c0_1 = arith.constant 0 : index
    %0 = vector.load %arg4[%c0, %c0_0, %c0_1] : memref<1x8x8xf32, #tpu.memory_space<vmem>>, vector<1x8x8xf32>
    %1 = vector.shape_cast %0 : vector<1x8x8xf32> to vector<8x8xf32>
    %c0_2 = arith.constant 0 : index
    %c0_3 = arith.constant 0 : index
    %c0_4 = arith.constant 0 : index
    %2 = vector.load %arg1[%c0_2, %c0_3, %c0_4] : memref<1x8x32xbf16, #tpu.memory_space<vmem>>, vector<1x8x8xbf16>
    %3 = vector.shape_cast %2 : vector<1x8x8xbf16> to vector<8x8xbf16>
    %c0_5 = arith.constant 0 : index
    %c0_6 = arith.constant 0 : index
    %c0_7 = arith.constant 0 : index
    %4 = vector.load %arg2[%c0_5, %c0_6, %c0_7] : memref<1x8x32xbf16, #tpu.memory_space<vmem>>, vector<1x8x8xbf16>
    %5 = vector.shape_cast %4 : vector<1x8x8xbf16> to vector<8x8xbf16>
    %c0_8 = arith.constant 0 : index
    %c0_9 = arith.constant 0 : index
    %c0_10 = arith.constant 0 : index
    %6 = vector.load %arg3[%c0_8, %c0_9, %c0_10] : memref<1x8x32xbf16, #tpu.memory_space<vmem>>, vector<1x8x8xbf16>
    %7 = vector.shape_cast %6 : vector<1x8x8xbf16> to vector<8x8xbf16>
    %cst = arith.constant dense<0.000000e+00> : vector<8x8xf32>
    %8 = tpu.matmul %3, %5, %cst {dimension_numbers = #tpu.dot_dimension_numbers<[1], [1], [0], [0], [0, 0, 1, 0], [], []>} : vector<8x8xbf16>, vector<8x8xbf16>, vector<8x8xf32> -> vector<8x8xf32>
    %cst_11 = arith.constant 0.353553385 : f32
    %9 = vector.broadcast %cst_11 : f32 to vector<8x8xf32>
    %10 = arith.mulf %8, %9 : vector<8x8xf32>
    %11 = arith.addf %10, %1 : vector<8x8xf32>
    %cst_12 = arith.constant dense<0xFF800000> : vector<8xf32>
    %12 = vector.multi_reduction <maximumf>, %11, %cst_12 [1] : vector<8x8xf32> to vector<8xf32>
    %13 = vector.shape_cast %12 : vector<8xf32> to vector<8x1xf32>
    %14 = vector.broadcast %13 : vector<8x1xf32> to vector<8x8xf32>
    %15 = arith.subf %11, %14 : vector<8x8xf32>
    %16 = math.exp %15 : vector<8x8xf32>
    %cst_13 = arith.constant dense<0.000000e+00> : vector<8xf32>
    %17 = vector.multi_reduction <add>, %16, %cst_13 [1] : vector<8x8xf32> to vector<8xf32>
    %18 = vector.shape_cast %17 : vector<8xf32> to vector<8x1xf32>
    %19 = tpu.reciprocal %18 : vector<8x1xf32> -> vector<8x1xf32>
    %20 = vector.broadcast %19 : vector<8x1xf32> to vector<8x8xf32>
    %21 = arith.mulf %16, %20 : vector<8x8xf32>
    %22 = arith.truncf %21 : vector<8x8xf32> to vector<8x8xbf16>
    %cst_14 = arith.constant dense<0.000000e+00> : vector<8x8xf32>
    %23 = tpu.matmul %22, %7, %cst_14 {dimension_numbers = #tpu.dot_dimension_numbers<[1], [0], [0], [1], [0, 0, 1, 1], [], []>} : vector<8x8xbf16>, vector<8x8xbf16>, vector<8x8xf32> -> vector<8x8xf32>
    %c0_15 = arith.constant 0 : index
    %c0_16 = arith.constant 0 : index
    %c8 = arith.constant 8 : index
    %24 = vector.load %arg1[%c0_15, %c0_16, %c8] : memref<1x8x32xbf16, #tpu.memory_space<vmem>>, vector<1x8x8xbf16>
    %25 = vector.shape_cast %24 : vector<1x8x8xbf16> to vector<8x8xbf16>
    %c0_17 = arith.constant 0 : index
    %c0_18 = arith.constant 0 : index
    %c8_19 = arith.constant 8 : index
    %26 = vector.load %arg2[%c0_17, %c0_18, %c8_19] : memref<1x8x32xbf16, #tpu.memory_space<vmem>>, vector<1x8x8xbf16>
    %27 = vector.shape_cast %26 : vector<1x8x8xbf16> to vector<8x8xbf16>
    %c0_20 = arith.constant 0 : index
    %c0_21 = arith.constant 0 : index
    %c8_22 = arith.constant 8 : index
    %28 = vector.load %arg3[%c0_20, %c0_21, %c8_22] : memref<1x8x32xbf16, #tpu.memory_space<vmem>>, vector<1x8x8xbf16>
    %29 = vector.shape_cast %28 : vector<1x8x8xbf16> to vector<8x8xbf16>
    %cst_23 = arith.constant dense<0.000000e+00> : vector<8x8xf32>
    %30 = tpu.matmul %25, %27, %cst_23 {dimension_numbers = #tpu.dot_dimension_numbers<[1], [1], [0], [0], [0, 0, 1, 0], [], []>} : vector<8x8xbf16>, vector<8x8xbf16>, vector<8x8xf32> -> vector<8x8xf32>
    %cst_24 = arith.constant 0.353553385 : f32
    %31 = vector.broadcast %cst_24 : f32 to vector<8x8xf32>
    %32 = arith.mulf %30, %31 : vector<8x8xf32>
    %33 = arith.addf %32, %1 : vector<8x8xf32>
    %cst_25 = arith.constant dense<0xFF800000> : vector<8xf32>
    %34 = vector.multi_reduction <maximumf>, %33, %cst_25 [1] : vector<8x8xf32> to vector<8xf32>
    %35 = vector.shape_cast %34 : vector<8xf32> to vector<8x1xf32>
    %36 = vector.broadcast %35 : vector<8x1xf32> to vector<8x8xf32>
    %37 = arith.subf %33, %36 : vector<8x8xf32>
    %38 = math.exp %37 : vector<8x8xf32>
    %cst_26 = arith.constant dense<0.000000e+00> : vector<8xf32>
    %39 = vector.multi_reduction <add>, %38, %cst_26 [1] : vector<8x8xf32> to vector<8xf32>
    %40 = vector.shape_cast %39 : vector<8xf32> to vector<8x1xf32>
    %41 = tpu.reciprocal %40 : vector<8x1xf32> -> vector<8x1xf32>
    %42 = vector.broadcast %41 : vector<8x1xf32> to vector<8x8xf32>
    %43 = arith.mulf %38, %42 : vector<8x8xf32>
    %44 = arith.truncf %43 : vector<8x8xf32> to vector<8x8xbf16>
    %cst_27 = arith.constant dense<0.000000e+00> : vector<8x8xf32>
    %45 = tpu.matmul %44, %29, %cst_27 {dimension_numbers = #tpu.dot_dimension_numbers<[1], [0], [0], [1], [0, 0, 1, 1], [], []>} : vector<8x8xbf16>, vector<8x8xbf16>, vector<8x8xf32> -> vector<8x8xf32>
    %c0_28 = arith.constant 0 : index
    %c0_29 = arith.constant 0 : index
    %c16 = arith.constant 16 : index
    %46 = vector.load %arg1[%c0_28, %c0_29, %c16] : memref<1x8x32xbf16, #tpu.memory_space<vmem>>, vector<1x8x8xbf16>
    %47 = vector.shape_cast %46 : vector<1x8x8xbf16> to vector<8x8xbf16>
    %c0_30 = arith.constant 0 : index
    %c0_31 = arith.constant 0 : index
    %c16_32 = arith.constant 16 : index
    %48 = vector.load %arg2[%c0_30, %c0_31, %c16_32] : memref<1x8x32xbf16, #tpu.memory_space<vmem>>, vector<1x8x8xbf16>
    %49 = vector.shape_cast %48 : vector<1x8x8xbf16> to vector<8x8xbf16>
    %c0_33 = arith.constant 0 : index
    %c0_34 = arith.constant 0 : index
    %c16_35 = arith.constant 16 : index
    %50 = vector.load %arg3[%c0_33, %c0_34, %c16_35] : memref<1x8x32xbf16, #tpu.memory_space<vmem>>, vector<1x8x8xbf16>
    %51 = vector.shape_cast %50 : vector<1x8x8xbf16> to vector<8x8xbf16>
    %cst_36 = arith.constant dense<0.000000e+00> : vector<8x8xf32>
    %52 = tpu.matmul %47, %49, %cst_36 {dimension_numbers = #tpu.dot_dimension_numbers<[1], [1], [0], [0], [0, 0, 1, 0], [], []>} : vector<8x8xbf16>, vector<8x8xbf16>, vector<8x8xf32> -> vector<8x8xf32>
    %cst_37 = arith.constant 0.353553385 : f32
    %53 = vector.broadcast %cst_37 : f32 to vector<8x8xf32>
    %54 = arith.mulf %52, %53 : vector<8x8xf32>
    %55 = arith.addf %54, %1 : vector<8x8xf32>
    %cst_38 = arith.constant dense<0xFF800000> : vector<8xf32>
    %56 = vector.multi_reduction <maximumf>, %55, %cst_38 [1] : vector<8x8xf32> to vector<8xf32>
    %57 = vector.shape_cast %56 : vector<8xf32> to vector<8x1xf32>
    %58 = vector.broadcast %57 : vector<8x1xf32> to vector<8x8xf32>
    %59 = arith.subf %55, %58 : vector<8x8xf32>
    %60 = math.exp %59 : vector<8x8xf32>
    %cst_39 = arith.constant dense<0.000000e+00> : vector<8xf32>
    %61 = vector.multi_reduction <add>, %60, %cst_39 [1] : vector<8x8xf32> to vector<8xf32>
    %62 = vector.shape_cast %61 : vector<8xf32> to vector<8x1xf32>
    %63 = tpu.reciprocal %62 : vector<8x1xf32> -> vector<8x1xf32>
    %64 = vector.broadcast %63 : vector<8x1xf32> to vector<8x8xf32>
    %65 = arith.mulf %60, %64 : vector<8x8xf32>
    %66 = arith.truncf %65 : vector<8x8xf32> to vector<8x8xbf16>
    %cst_40 = arith.constant dense<0.000000e+00> : vector<8x8xf32>
    %67 = tpu.matmul %66, %51, %cst_40 {dimension_numbers = #tpu.dot_dimension_numbers<[1], [0], [0], [1], [0, 0, 1, 1], [], []>} : vector<8x8xbf16>, vector<8x8xbf16>, vector<8x8xf32> -> vector<8x8xf32>
    %c0_41 = arith.constant 0 : index
    %c0_42 = arith.constant 0 : index
    %c24 = arith.constant 24 : index
    %68 = vector.load %arg1[%c0_41, %c0_42, %c24] : memref<1x8x32xbf16, #tpu.memory_space<vmem>>, vector<1x8x8xbf16>
    %69 = vector.shape_cast %68 : vector<1x8x8xbf16> to vector<8x8xbf16>
    %c0_43 = arith.constant 0 : index
    %c0_44 = arith.constant 0 : index
    %c24_45 = arith.constant 24 : index
    %70 = vector.load %arg2[%c0_43, %c0_44, %c24_45] : memref<1x8x32xbf16, #tpu.memory_space<vmem>>, vector<1x8x8xbf16>
    %71 = vector.shape_cast %70 : vector<1x8x8xbf16> to vector<8x8xbf16>
    %c0_46 = arith.constant 0 : index
    %c0_47 = arith.constant 0 : index
    %c24_48 = arith.constant 24 : index
    %72 = vector.load %arg3[%c0_46, %c0_47, %c24_48] : memref<1x8x32xbf16, #tpu.memory_space<vmem>>, vector<1x8x8xbf16>
    %73 = vector.shape_cast %72 : vector<1x8x8xbf16> to vector<8x8xbf16>
    %cst_49 = arith.constant dense<0.000000e+00> : vector<8x8xf32>
    %74 = tpu.matmul %69, %71, %cst_49 {dimension_numbers = #tpu.dot_dimension_numbers<[1], [1], [0], [0], [0, 0, 1, 0], [], []>} : vector<8x8xbf16>, vector<8x8xbf16>, vector<8x8xf32> -> vector<8x8xf32>
    %cst_50 = arith.constant 0.353553385 : f32
    %75 = vector.broadcast %cst_50 : f32 to vector<8x8xf32>
    %76 = arith.mulf %74, %75 : vector<8x8xf32>
    %77 = arith.addf %76, %1 : vector<8x8xf32>
    %cst_51 = arith.constant dense<0xFF800000> : vector<8xf32>
    %78 = vector.multi_reduction <maximumf>, %77, %cst_51 [1] : vector<8x8xf32> to vector<8xf32>
    %79 = vector.shape_cast %78 : vector<8xf32> to vector<8x1xf32>
    %80 = vector.broadcast %79 : vector<8x1xf32> to vector<8x8xf32>
    %81 = arith.subf %77, %80 : vector<8x8xf32>
    %82 = math.exp %81 : vector<8x8xf32>
    %cst_52 = arith.constant dense<0.000000e+00> : vector<8xf32>
    %83 = vector.multi_reduction <add>, %82, %cst_52 [1] : vector<8x8xf32> to vector<8xf32>
    %84 = vector.shape_cast %83 : vector<8xf32> to vector<8x1xf32>
    %85 = tpu.reciprocal %84 : vector<8x1xf32> -> vector<8x1xf32>
    %86 = vector.broadcast %85 : vector<8x1xf32> to vector<8x8xf32>
    %87 = arith.mulf %82, %86 : vector<8x8xf32>
    %88 = arith.truncf %87 : vector<8x8xf32> to vector<8x8xbf16>
    %cst_53 = arith.constant dense<0.000000e+00> : vector<8x8xf32>
    %89 = tpu.matmul %88, %73, %cst_53 {dimension_numbers = #tpu.dot_dimension_numbers<[1], [0], [0], [1], [0, 0, 1, 1], [], []>} : vector<8x8xbf16>, vector<8x8xbf16>, vector<8x8xf32> -> vector<8x8xf32>
    %90 = tpu.concatenate %23, %45, %67, %89 in 1 : vector<8x8xf32>, vector<8x8xf32>, vector<8x8xf32>, vector<8x8xf32> -> vector<8x32xf32>
    %91 = arith.truncf %90 : vector<8x32xf32> to vector<8x32xbf16>
    %c0_54 = arith.constant 0 : index
    %c0_55 = arith.constant 0 : index
    %c0_56 = arith.constant 0 : index
    %92 = vector.load %arg5[%c0_54, %c0_55, %c0_56] : memref<1x8x32xbf16, #tpu.memory_space<vmem>>, vector<1x8x32xbf16>
    %93 = vector.shape_cast %92 : vector<1x8x32xbf16> to vector<8x32xbf16>
    %94 = vector.shape_cast %91 : vector<8x32xbf16> to vector<1x8x32xbf16>
    tpu.vector_store %arg5[%c0_54, %c0_55, %c0_56], %94 {strides = array<i32>} : memref<1x8x32xbf16, #tpu.memory_space<vmem>>, vector<1x8x32xbf16>,
    return
  }
  func.func @transform_0(%arg0: i32) -> (i32, i32, i32) {
    %c0_i32 = arith.constant 0 : i32
    %c0_i32_0 = arith.constant 0 : i32
    %c0_i32_1 = arith.constant 0 : i32
    return %arg0, %c0_i32, %c0_i32_0 : i32, i32, i32
  }
  func.func @transform_1(%arg0: i32) -> (i32, i32, i32) {
    %c0_i32 = arith.constant 0 : i32
    %c0_i32_0 = arith.constant 0 : i32
    %c0_i32_1 = arith.constant 0 : i32
    return %arg0, %c0_i32, %c0_i32_0 : i32, i32, i32
  }
  func.func @transform_2(%arg0: i32) -> (i32, i32, i32) {
    %c0_i32 = arith.constant 0 : i32
    %c0_i32_0 = arith.constant 0 : i32
    %c0_i32_1 = arith.constant 0 : i32
    return %arg0, %c0_i32, %c0_i32_0 : i32, i32, i32
  }
  func.func @transform_3(%arg0: i32) -> (i32, i32, i32) {
    %c0_i32 = arith.constant 0 : i32
    %c0_i32_0 = arith.constant 0 : i32
    %c0_i32_1 = arith.constant 0 : i32
    return %arg0, %c0_i32, %c0_i32_0 : i32, i32, i32
  }
  func.func @transform_4(%arg0: i32) -> (i32, i32, i32) {
    %c0_i32 = arith.constant 0 : i32
    %c0_i32_0 = arith.constant 0 : i32
    %c0_i32_1 = arith.constant 0 : i32
    return %arg0, %c0_i32, %c0_i32_0 : i32, i32, i32
  }
}

module attributes {stable_mosaic.version = 11 : i64} {
  func.func @_matmul_bias_res_ln_kernel(%arg0: i32, %arg1: i32, %arg2: memref<16x32xbf16, #tpu.memory_space<vmem>>, %arg3: memref<32x32xbf16, #tpu.memory_space<vmem>>, %arg4: memref<1x32xf32, #tpu.memory_space<vmem>>, %arg5: memref<16x32xf32, #tpu.memory_space<vmem>>, %arg6: memref<1x32xf32, #tpu.memory_space<vmem>>, %arg7: memref<1x32xf32, #tpu.memory_space<vmem>>, %arg8: memref<16x32xf32, #tpu.memory_space<vmem>>, %arg9: memref<16x32xf32, #tpu.memory_space<vmem>>) attributes {dimension_semantics = [#tpu.dimension_semantics<parallel>, #tpu.dimension_semantics<arbitrary>], iteration_bounds = array<i64: 1, 1>, scalar_prefetch = 0 : i64, scratch_operands = 1 : i64, tpu.core_type = #tpu.core_type<tc>, window_params = [{transform_indices = @transform_0, window_bounds = array<i64: 16, 32>}, {transform_indices = @transform_1, window_bounds = array<i64: 32, 32>}, {pipeline_mode = #tpu.pipeline_mode<synchronous>, transform_indices = @transform_2, window_bounds = array<i64: 1, 32>}, {transform_indices = @transform_3, window_bounds = array<i64: 16, 32>}, {pipeline_mode = #tpu.pipeline_mode<synchronous>, transform_indices = @transform_4, window_bounds = array<i64: 1, 32>}, {pipeline_mode = #tpu.pipeline_mode<synchronous>, transform_indices = @transform_5, window_bounds = array<i64: 1, 32>}, {transform_indices = @transform_6, window_bounds = array<i64: 16, 32>}]} {
    %c0_i32 = arith.constant 0 : i32
    %0 = arith.cmpi eq, %arg1, %c0_i32 : i32
    %1 = arith.extui %0 : i1 to i32
    %c0_i32_0 = arith.constant 0 : i32
    %2 = arith.cmpi ne, %1, %c0_i32_0 : i32
    scf.if %2 {
      %cst_10 = arith.constant 0.000000e+00 : f32
      %12 = vector.broadcast %cst_10 : f32 to vector<16x32xf32>
      %c0_11 = arith.constant 0 : index
      %c0_12 = arith.constant 0 : index
      %13 = vector.load %arg9[%c0_11, %c0_12] : memref<16x32xf32, #tpu.memory_space<vmem>>, vector<16x32xf32>
      tpu.vector_store %arg9[%c0_11, %c0_12], %12 {strides = array<i32>} : memref<16x32xf32, #tpu.memory_space<vmem>>, vector<16x32xf32>,
    } else {
    }
    %c0 = arith.constant 0 : index
    %c0_1 = arith.constant 0 : index
    %3 = vector.load %arg9[%c0, %c0_1] : memref<16x32xf32, #tpu.memory_space<vmem>>, vector<16x32xf32>
    %c0_2 = arith.constant 0 : index
    %c0_3 = arith.constant 0 : index
    %4 = vector.load %arg2[%c0_2, %c0_3] : memref<16x32xbf16, #tpu.memory_space<vmem>>, vector<16x32xbf16>
    %c0_4 = arith.constant 0 : index
    %c0_5 = arith.constant 0 : index
    %5 = vector.load %arg3[%c0_4, %c0_5] : memref<32x32xbf16, #tpu.memory_space<vmem>>, vector<32x32xbf16>
    %cst = arith.constant dense<0.000000e+00> : vector<16x32xf32>
    %6 = tpu.matmul %4, %5, %cst {dimension_numbers = #tpu.dot_dimension_numbers<[1], [0], [0], [1], [0, 0, 1, 1], [], []>} : vector<16x32xbf16>, vector<32x32xbf16>, vector<16x32xf32> -> vector<16x32xf32>
    %7 = arith.addf %3, %6 : vector<16x32xf32>
    %c0_6 = arith.constant 0 : index
    %c0_7 = arith.constant 0 : index
    %8 = vector.load %arg9[%c0_6, %c0_7] : memref<16x32xf32, #tpu.memory_space<vmem>>, vector<16x32xf32>
    tpu.vector_store %arg9[%c0_6, %c0_7], %7 {strides = array<i32>} : memref<16x32xf32, #tpu.memory_space<vmem>>, vector<16x32xf32>,
    %c0_i32_8 = arith.constant 0 : i32
    %9 = arith.cmpi eq, %arg1, %c0_i32_8 : i32
    %10 = arith.extui %9 : i1 to i32
    %c0_i32_9 = arith.constant 0 : i32
    %11 = arith.cmpi ne, %10, %c0_i32_9 : i32
    scf.if %11 {
      %c0_10 = arith.constant 0 : index
      %c0_11 = arith.constant 0 : index
      %12 = vector.load %arg9[%c0_10, %c0_11] : memref<16x32xf32, #tpu.memory_space<vmem>>, vector<16x32xf32>
      %c0_12 = arith.constant 0 : index
      %c0_13 = arith.constant 0 : index
      %13 = vector.load %arg4[%c0_12, %c0_13] : memref<1x32xf32, #tpu.memory_space<vmem>>, vector<1x32xf32>
      %14 = vector.broadcast %13 : vector<1x32xf32> to vector<16x32xf32>
      %15 = arith.addf %12, %14 : vector<16x32xf32>
      %c0_14 = arith.constant 0 : index
      %c0_15 = arith.constant 0 : index
      %16 = vector.load %arg5[%c0_14, %c0_15] : memref<16x32xf32, #tpu.memory_space<vmem>>, vector<16x32xf32>
      %17 = arith.addf %15, %16 : vector<16x32xf32>
      %cst_16 = arith.constant dense<0.000000e+00> : vector<16xf32>
      %18 = vector.multi_reduction <add>, %17, %cst_16 [1] : vector<16x32xf32> to vector<16xf32>
      %19 = vector.shape_cast %18 : vector<16xf32> to vector<16x1xf32>
      %cst_17 = arith.constant 3.200000e+01 : f32
      %20 = vector.broadcast %cst_17 : f32 to vector<16x1xf32>
      %21 = arith.divf %19, %20 : vector<16x1xf32>
      %22 = vector.broadcast %21 : vector<16x1xf32> to vector<16x32xf32>
      %23 = arith.subf %17, %22 : vector<16x32xf32>
      %24 = arith.mulf %23, %23 : vector<16x32xf32>
      %cst_18 = arith.constant dense<0.000000e+00> : vector<16xf32>
      %25 = vector.multi_reduction <add>, %24, %cst_18 [1] : vector<16x32xf32> to vector<16xf32>
      %26 = vector.shape_cast %25 : vector<16xf32> to vector<16x1xf32>
      %cst_19 = arith.constant 0.0322580636 : f32
      %27 = vector.broadcast %cst_19 : f32 to vector<16x1xf32>
      %28 = arith.mulf %26, %27 : vector<16x1xf32>
      %29 = math.sqrt %28 : vector<16x1xf32>
      %c0_20 = arith.constant 0 : index
      %c0_21 = arith.constant 0 : index
      %30 = vector.load %arg6[%c0_20, %c0_21] : memref<1x32xf32, #tpu.memory_space<vmem>>, vector<1x32xf32>
      %31 = vector.broadcast %21 : vector<16x1xf32> to vector<16x32xf32>
      %32 = arith.subf %17, %31 : vector<16x32xf32>
      %33 = vector.broadcast %30 : vector<1x32xf32> to vector<16x32xf32>
      %34 = arith.mulf %33, %32 : vector<16x32xf32>
      %cst_22 = arith.constant 9.99999997E-7 : f32
      %35 = vector.broadcast %cst_22 : f32 to vector<16x1xf32>
      %36 = arith.addf %29, %35 : vector<16x1xf32>
      %37 = vector.broadcast %36 : vector<16x1xf32> to vector<16x32xf32>
      %38 = arith.divf %34, %37 : vector<16x32xf32>
      %c0_23 = arith.constant 0 : index
      %c0_24 = arith.constant 0 : index
      %39 = vector.load %arg7[%c0_23, %c0_24] : memref<1x32xf32, #tpu.memory_space<vmem>>, vector<1x32xf32>
      %40 = vector.broadcast %39 : vector<1x32xf32> to vector<16x32xf32>
      %41 = arith.addf %38, %40 : vector<16x32xf32>
      %c0_25 = arith.constant 0 : index
      %c0_26 = arith.constant 0 : index
      %42 = vector.load %arg8[%c0_25, %c0_26] : memref<16x32xf32, #tpu.memory_space<vmem>>, vector<16x32xf32>
      tpu.vector_store %arg8[%c0_25, %c0_26], %41 {strides = array<i32>} : memref<16x32xf32, #tpu.memory_space<vmem>>, vector<16x32xf32>,
    } else {
    }
    return
  }
  func.func @transform_0(%arg0: i32, %arg1: i32) -> (i32, i32) {
    %c0_i32 = arith.constant 0 : i32
    return %arg0, %arg1 : i32, i32
  }
  func.func @transform_1(%arg0: i32, %arg1: i32) -> (i32, i32) {
    %c0_i32 = arith.constant 0 : i32
    %c0_i32_0 = arith.constant 0 : i32
    return %arg1, %c0_i32 : i32, i32
  }
  func.func @transform_2(%arg0: i32, %arg1: i32) -> (i32, i32) {
    %c0_i32 = arith.constant 0 : i32
    %c0_i32_0 = arith.constant 0 : i32
    %c0_i32_1 = arith.constant 0 : i32
    return %c0_i32, %c0_i32_0 : i32, i32
  }
  func.func @transform_3(%arg0: i32, %arg1: i32) -> (i32, i32) {
    %c0_i32 = arith.constant 0 : i32
    %c0_i32_0 = arith.constant 0 : i32
    return %arg0, %c0_i32 : i32, i32
  }
  func.func @transform_4(%arg0: i32, %arg1: i32) -> (i32, i32) {
    %c0_i32 = arith.constant 0 : i32
    %c0_i32_0 = arith.constant 0 : i32
    %c0_i32_1 = arith.constant 0 : i32
    return %c0_i32, %c0_i32_0 : i32, i32
  }
  func.func @transform_5(%arg0: i32, %arg1: i32) -> (i32, i32) {
    %c0_i32 = arith.constant 0 : i32
    %c0_i32_0 = arith.constant 0 : i32
    %c0_i32_1 = arith.constant 0 : i32
    return %c0_i32, %c0_i32_0 : i32, i32
  }
  func.func @transform_6(%arg0: i32, %arg1: i32) -> (i32, i32) {
    %c0_i32 = arith.constant 0 : i32
    %c0_i32_0 = arith.constant 0 : i32
    return %arg0, %c0_i32 : i32, i32
  }
}

module attributes {stable_mosaic.version = 11 : i64} {
  func.func @_matmul_bias_kernel(%arg0: i32, %arg1: i32, %arg2: i32, %arg3: memref<16x32xbf16, #tpu.memory_space<vmem>>, %arg4: memref<32x32xbf16, #tpu.memory_space<vmem>>, %arg5: memref<1x32xf32, #tpu.memory_space<vmem>>, %arg6: memref<16x32xbf16, #tpu.memory_space<vmem>>, %arg7: memref<16x32xf32, #tpu.memory_space<vmem>>) attributes {dimension_semantics = [#tpu.dimension_semantics<parallel>, #tpu.dimension_semantics<parallel>, #tpu.dimension_semantics<arbitrary>], iteration_bounds = array<i64: 1, 1, 1>, scalar_prefetch = 0 : i64, scratch_operands = 1 : i64, tpu.core_type = #tpu.core_type<tc>, window_params = [{transform_indices = @transform_0, window_bounds = array<i64: 16, 32>}, {transform_indices = @transform_1, window_bounds = array<i64: 32, 32>}, {transform_indices = @transform_2, window_bounds = array<i64: 1, 32>}, {transform_indices = @transform_3, window_bounds = array<i64: 16, 32>}]} {
    %c0_i32 = arith.constant 0 : i32
    %0 = arith.cmpi eq, %arg2, %c0_i32 : i32
    %1 = arith.extui %0 : i1 to i32
    %c0_i32_0 = arith.constant 0 : i32
    %2 = arith.cmpi ne, %1, %c0_i32_0 : i32
    scf.if %2 {
      %cst_10 = arith.constant 0.000000e+00 : f32
      %12 = vector.broadcast %cst_10 : f32 to vector<16x32xf32>
      %c0_11 = arith.constant 0 : index
      %c0_12 = arith.constant 0 : index
      %13 = vector.load %arg7[%c0_11, %c0_12] : memref<16x32xf32, #tpu.memory_space<vmem>>, vector<16x32xf32>
      tpu.vector_store %arg7[%c0_11, %c0_12], %12 {strides = array<i32>} : memref<16x32xf32, #tpu.memory_space<vmem>>, vector<16x32xf32>,
    } else {
    }
    %c0 = arith.constant 0 : index
    %c0_1 = arith.constant 0 : index
    %3 = vector.load %arg7[%c0, %c0_1] : memref<16x32xf32, #tpu.memory_space<vmem>>, vector<16x32xf32>
    %c0_2 = arith.constant 0 : index
    %c0_3 = arith.constant 0 : index
    %4 = vector.load %arg3[%c0_2, %c0_3] : memref<16x32xbf16, #tpu.memory_space<vmem>>, vector<16x32xbf16>
    %c0_4 = arith.constant 0 : index
    %c0_5 = arith.constant 0 : index
    %5 = vector.load %arg4[%c0_4, %c0_5] : memref<32x32xbf16, #tpu.memory_space<vmem>>, vector<32x32xbf16>
    %cst = arith.constant dense<0.000000e+00> : vector<16x32xf32>
    %6 = tpu.matmul %4, %5, %cst {dimension_numbers = #tpu.dot_dimension_numbers<[1], [0], [0], [1], [0, 0, 1, 1], [], []>} : vector<16x32xbf16>, vector<32x32xbf16>, vector<16x32xf32> -> vector<16x32xf32>
    %7 = arith.addf %3, %6 : vector<16x32xf32>
    %c0_6 = arith.constant 0 : index
    %c0_7 = arith.constant 0 : index
    %8 = vector.load %arg7[%c0_6, %c0_7] : memref<16x32xf32, #tpu.memory_space<vmem>>, vector<16x32xf32>
    tpu.vector_store %arg7[%c0_6, %c0_7], %7 {strides = array<i32>} : memref<16x32xf32, #tpu.memory_space<vmem>>, vector<16x32xf32>,
    %c0_i32_8 = arith.constant 0 : i32
    %9 = arith.cmpi eq, %arg2, %c0_i32_8 : i32
    %10 = arith.extui %9 : i1 to i32
    %c0_i32_9 = arith.constant 0 : i32
    %11 = arith.cmpi ne, %10, %c0_i32_9 : i32
    scf.if %11 {
      %c0_10 = arith.constant 0 : index
      %c0_11 = arith.constant 0 : index
      %12 = vector.load %arg7[%c0_10, %c0_11] : memref<16x32xf32, #tpu.memory_space<vmem>>, vector<16x32xf32>
      %c0_12 = arith.constant 0 : index
      %c0_13 = arith.constant 0 : index
      %13 = vector.load %arg5[%c0_12, %c0_13] : memref<1x32xf32, #tpu.memory_space<vmem>>, vector<1x32xf32>
      %14 = vector.broadcast %13 : vector<1x32xf32> to vector<16x32xf32>
      %15 = arith.addf %12, %14 : vector<16x32xf32>
      %16 = arith.truncf %15 : vector<16x32xf32> to vector<16x32xbf16>
      %c0_14 = arith.constant 0 : index
      %c0_15 = arith.constant 0 : index
      %17 = vector.load %arg6[%c0_14, %c0_15] : memref<16x32xbf16, #tpu.memory_space<vmem>>, vector<16x32xbf16>
      tpu.vector_store %arg6[%c0_14, %c0_15], %16 {strides = array<i32>} : memref<16x32xbf16, #tpu.memory_space<vmem>>, vector<16x32xbf16>,
    } else {
    }
    return
  }
  func.func @transform_0(%arg0: i32, %arg1: i32, %arg2: i32) -> (i32, i32) {
    %c0_i32 = arith.constant 0 : i32
    return %arg0, %arg2 : i32, i32
  }
  func.func @transform_1(%arg0: i32, %arg1: i32, %arg2: i32) -> (i32, i32) {
    %c0_i32 = arith.constant 0 : i32
    return %arg2, %arg1 : i32, i32
  }
  func.func @transform_2(%arg0: i32, %arg1: i32, %arg2: i32) -> (i32, i32) {
    %c0_i32 = arith.constant 0 : i32
    %c0_i32_0 = arith.constant 0 : i32
    return %c0_i32, %arg1 : i32, i32
  }
  func.func @transform_3(%arg0: i32, %arg1: i32, %arg2: i32) -> (i32, i32) {
    %c0_i32 = arith.constant 0 : i32
    return %arg0, %arg1 : i32, i32
  }
}

module attributes {stable_mosaic.version = 11 : i64} {
  func.func @_matmul_bias_kernel(%arg0: i32, %arg1: i32, %arg2: i32, %arg3: memref<16x32xbf16, #tpu.memory_space<vmem>>, %arg4: memref<32x128xbf16, #tpu.memory_space<vmem>>, %arg5: memref<1x128xf32, #tpu.memory_space<vmem>>, %arg6: memref<16x128xbf16, #tpu.memory_space<vmem>>, %arg7: memref<16x128xf32, #tpu.memory_space<vmem>>) attributes {dimension_semantics = [#tpu.dimension_semantics<parallel>, #tpu.dimension_semantics<parallel>, #tpu.dimension_semantics<arbitrary>], iteration_bounds = array<i64: 1, 1, 1>, scalar_prefetch = 0 : i64, scratch_operands = 1 : i64, tpu.core_type = #tpu.core_type<tc>, window_params = [{transform_indices = @transform_0, window_bounds = array<i64: 16, 32>}, {transform_indices = @transform_1, window_bounds = array<i64: 32, 128>}, {transform_indices = @transform_2, window_bounds = array<i64: 1, 128>}, {transform_indices = @transform_3, window_bounds = array<i64: 16, 128>}]} {
    %c0_i32 = arith.constant 0 : i32
    %0 = arith.cmpi eq, %arg2, %c0_i32 : i32
    %1 = arith.extui %0 : i1 to i32
    %c0_i32_0 = arith.constant 0 : i32
    %2 = arith.cmpi ne, %1, %c0_i32_0 : i32
    scf.if %2 {
      %cst_10 = arith.constant 0.000000e+00 : f32
      %12 = vector.broadcast %cst_10 : f32 to vector<16x128xf32>
      %c0_11 = arith.constant 0 : index
      %c0_12 = arith.constant 0 : index
      %13 = vector.load %arg7[%c0_11, %c0_12] : memref<16x128xf32, #tpu.memory_space<vmem>>, vector<16x128xf32>
      tpu.vector_store %arg7[%c0_11, %c0_12], %12 {strides = array<i32>} : memref<16x128xf32, #tpu.memory_space<vmem>>, vector<16x128xf32>,
    } else {
    }
    %c0 = arith.constant 0 : index
    %c0_1 = arith.constant 0 : index
    %3 = vector.load %arg7[%c0, %c0_1] : memref<16x128xf32, #tpu.memory_space<vmem>>, vector<16x128xf32>
    %c0_2 = arith.constant 0 : index
    %c0_3 = arith.constant 0 : index
    %4 = vector.load %arg3[%c0_2, %c0_3] : memref<16x32xbf16, #tpu.memory_space<vmem>>, vector<16x32xbf16>
    %c0_4 = arith.constant 0 : index
    %c0_5 = arith.constant 0 : index
    %5 = vector.load %arg4[%c0_4, %c0_5] : memref<32x128xbf16, #tpu.memory_space<vmem>>, vector<32x128xbf16>
    %cst = arith.constant dense<0.000000e+00> : vector<16x128xf32>
    %6 = tpu.matmul %4, %5, %cst {dimension_numbers = #tpu.dot_dimension_numbers<[1], [0], [0], [1], [0, 0, 1, 1], [], []>} : vector<16x32xbf16>, vector<32x128xbf16>, vector<16x128xf32> -> vector<16x128xf32>
    %7 = arith.addf %3, %6 : vector<16x128xf32>
    %c0_6 = arith.constant 0 : index
    %c0_7 = arith.constant 0 : index
    %8 = vector.load %arg7[%c0_6, %c0_7] : memref<16x128xf32, #tpu.memory_space<vmem>>, vector<16x128xf32>
    tpu.vector_store %arg7[%c0_6, %c0_7], %7 {strides = array<i32>} : memref<16x128xf32, #tpu.memory_space<vmem>>, vector<16x128xf32>,
    %c0_i32_8 = arith.constant 0 : i32
    %9 = arith.cmpi eq, %arg2, %c0_i32_8 : i32
    %10 = arith.extui %9 : i1 to i32
    %c0_i32_9 = arith.constant 0 : i32
    %11 = arith.cmpi ne, %10, %c0_i32_9 : i32
    scf.if %11 {
      %c0_10 = arith.constant 0 : index
      %c0_11 = arith.constant 0 : index
      %12 = vector.load %arg7[%c0_10, %c0_11] : memref<16x128xf32, #tpu.memory_space<vmem>>, vector<16x128xf32>
      %c0_12 = arith.constant 0 : index
      %c0_13 = arith.constant 0 : index
      %13 = vector.load %arg5[%c0_12, %c0_13] : memref<1x128xf32, #tpu.memory_space<vmem>>, vector<1x128xf32>
      %14 = vector.broadcast %13 : vector<1x128xf32> to vector<16x128xf32>
      %15 = arith.addf %12, %14 : vector<16x128xf32>
      %cst_14 = arith.constant 0.000000e+00 : f32
      %16 = vector.broadcast %cst_14 : f32 to vector<16x128xf32>
      %17 = arith.maximumf %15, %16 : vector<16x128xf32>
      %18 = arith.truncf %17 : vector<16x128xf32> to vector<16x128xbf16>
      %c0_15 = arith.constant 0 : index
      %c0_16 = arith.constant 0 : index
      %19 = vector.load %arg6[%c0_15, %c0_16] : memref<16x128xbf16, #tpu.memory_space<vmem>>, vector<16x128xbf16>
      tpu.vector_store %arg6[%c0_15, %c0_16], %18 {strides = array<i32>} : memref<16x128xbf16, #tpu.memory_space<vmem>>, vector<16x128xbf16>,
    } else {
    }
    return
  }
  func.func @transform_0(%arg0: i32, %arg1: i32, %arg2: i32) -> (i32, i32) {
    %c0_i32 = arith.constant 0 : i32
    return %arg0, %arg2 : i32, i32
  }
  func.func @transform_1(%arg0: i32, %arg1: i32, %arg2: i32) -> (i32, i32) {
    %c0_i32 = arith.constant 0 : i32
    return %arg2, %arg1 : i32, i32
  }
  func.func @transform_2(%arg0: i32, %arg1: i32, %arg2: i32) -> (i32, i32) {
    %c0_i32 = arith.constant 0 : i32
    %c0_i32_0 = arith.constant 0 : i32
    return %c0_i32, %arg1 : i32, i32
  }
  func.func @transform_3(%arg0: i32, %arg1: i32, %arg2: i32) -> (i32, i32) {
    %c0_i32 = arith.constant 0 : i32
    return %arg0, %arg1 : i32, i32
  }
}

module attributes {stable_mosaic.version = 11 : i64} {
  func.func @_ln_kernel(%arg0: i32, %arg1: memref<16x32xf32, #tpu.memory_space<vmem>>, %arg2: memref<1x32xf32, #tpu.memory_space<vmem>>, %arg3: memref<1x32xf32, #tpu.memory_space<vmem>>, %arg4: memref<16x32xf32, #tpu.memory_space<vmem>>) attributes {dimension_semantics = [#tpu.dimension_semantics<parallel>], iteration_bounds = array<i64: 1>, scalar_prefetch = 0 : i64, scratch_operands = 0 : i64, tpu.core_type = #tpu.core_type<tc>, window_params = [{transform_indices = @transform_0, window_bounds = array<i64: 16, 32>}, {pipeline_mode = #tpu.pipeline_mode<synchronous>, transform_indices = @transform_1, window_bounds = array<i64: 1, 32>}, {pipeline_mode = #tpu.pipeline_mode<synchronous>, transform_indices = @transform_2, window_bounds = array<i64: 1, 32>}, {transform_indices = @transform_3, window_bounds = array<i64: 16, 32>}]} {
    %c0 = arith.constant 0 : index
    %c0_0 = arith.constant 0 : index
    %0 = vector.load %arg1[%c0, %c0_0] : memref<16x32xf32, #tpu.memory_space<vmem>>, vector<16x32xf32>
    %cst = arith.constant dense<0.000000e+00> : vector<16xf32>
    %1 = vector.multi_reduction <add>, %0, %cst [1] : vector<16x32xf32> to vector<16xf32>
    %2 = vector.shape_cast %1 : vector<16xf32> to vector<16x1xf32>
    %cst_1 = arith.constant 3.200000e+01 : f32
    %3 = vector.broadcast %cst_1 : f32 to vector<16x1xf32>
    %4 = arith.divf %2, %3 : vector<16x1xf32>
    %5 = vector.broadcast %4 : vector<16x1xf32> to vector<16x32xf32>
    %6 = arith.subf %0, %5 : vector<16x32xf32>
    %7 = arith.mulf %6, %6 : vector<16x32xf32>
    %cst_2 = arith.constant dense<0.000000e+00> : vector<16xf32>
    %8 = vector.multi_reduction <add>, %7, %cst_2 [1] : vector<16x32xf32> to vector<16xf32>
    %9 = vector.shape_cast %8 : vector<16xf32> to vector<16x1xf32>
    %cst_3 = arith.constant 0.0322580636 : f32
    %10 = vector.broadcast %cst_3 : f32 to vector<16x1xf32>
    %11 = arith.mulf %9, %10 : vector<16x1xf32>
    %12 = math.sqrt %11 : vector<16x1xf32>
    %c0_4 = arith.constant 0 : index
    %c0_5 = arith.constant 0 : index
    %13 = vector.load %arg2[%c0_4, %c0_5] : memref<1x32xf32, #tpu.memory_space<vmem>>, vector<1x32xf32>
    %14 = vector.broadcast %4 : vector<16x1xf32> to vector<16x32xf32>
    %15 = arith.subf %0, %14 : vector<16x32xf32>
    %16 = vector.broadcast %13 : vector<1x32xf32> to vector<16x32xf32>
    %17 = arith.mulf %16, %15 : vector<16x32xf32>
    %cst_6 = arith.constant 9.99999997E-7 : f32
    %18 = vector.broadcast %cst_6 : f32 to vector<16x1xf32>
    %19 = arith.addf %12, %18 : vector<16x1xf32>
    %20 = vector.broadcast %19 : vector<16x1xf32> to vector<16x32xf32>
    %21 = arith.divf %17, %20 : vector<16x32xf32>
    %c0_7 = arith.constant 0 : index
    %c0_8 = arith.constant 0 : index
    %22 = vector.load %arg3[%c0_7, %c0_8] : memref<1x32xf32, #tpu.memory_space<vmem>>, vector<1x32xf32>
    %23 = vector.broadcast %22 : vector<1x32xf32> to vector<16x32xf32>
    %24 = arith.addf %21, %23 : vector<16x32xf32>
    %c0_9 = arith.constant 0 : index
    %c0_10 = arith.constant 0 : index
    %25 = vector.load %arg4[%c0_9, %c0_10] : memref<16x32xf32, #tpu.memory_space<vmem>>, vector<16x32xf32>
    tpu.vector_store %arg4[%c0_9, %c0_10], %24 {strides = array<i32>} : memref<16x32xf32, #tpu.memory_space<vmem>>, vector<16x32xf32>,
    return
  }
  func.func @transform_0(%arg0: i32) -> (i32, i32) {
    %c0_i32 = arith.constant 0 : i32
    %c0_i32_0 = arith.constant 0 : i32
    return %arg0, %c0_i32 : i32, i32
  }
  func.func @transform_1(%arg0: i32) -> (i32, i32) {
    %c0_i32 = arith.constant 0 : i32
    %c0_i32_0 = arith.constant 0 : i32
    %c0_i32_1 = arith.constant 0 : i32
    return %c0_i32, %c0_i32_0 : i32, i32
  }
  func.func @transform_2(%arg0: i32) -> (i32, i32) {
    %c0_i32 = arith.constant 0 : i32
    %c0_i32_0 = arith.constant 0 : i32
    %c0_i32_1 = arith.constant 0 : i32
    return %c0_i32, %c0_i32_0 : i32, i32
  }
  func.func @transform_3(%arg0: i32) -> (i32, i32) {
    %c0_i32 = arith.constant 0 : i32
    %c0_i32_0 = arith.constant 0 : i32
    return %arg0, %c0_i32 : i32, i32
  }
}

module attributes {stable_mosaic.version = 11 : i64} {
  func.func @_matmul_bias_kernel(%arg0: i32, %arg1: i32, %arg2: i32, %arg3: memref<16x32xbf16, #tpu.memory_space<vmem>>, %arg4: memref<32x64xbf16, #tpu.memory_space<vmem>>, %arg5: memref<1x64xf32, #tpu.memory_space<vmem>>, %arg6: memref<16x64xbf16, #tpu.memory_space<vmem>>, %arg7: memref<16x64xf32, #tpu.memory_space<vmem>>) attributes {dimension_semantics = [#tpu.dimension_semantics<parallel>, #tpu.dimension_semantics<parallel>, #tpu.dimension_semantics<arbitrary>], iteration_bounds = array<i64: 1, 1, 1>, scalar_prefetch = 0 : i64, scratch_operands = 1 : i64, tpu.core_type = #tpu.core_type<tc>, window_params = [{transform_indices = @transform_0, window_bounds = array<i64: 16, 32>}, {transform_indices = @transform_1, window_bounds = array<i64: 32, 64>}, {transform_indices = @transform_2, window_bounds = array<i64: 1, 64>}, {transform_indices = @transform_3, window_bounds = array<i64: 16, 64>}]} {
    %c0_i32 = arith.constant 0 : i32
    %0 = arith.cmpi eq, %arg2, %c0_i32 : i32
    %1 = arith.extui %0 : i1 to i32
    %c0_i32_0 = arith.constant 0 : i32
    %2 = arith.cmpi ne, %1, %c0_i32_0 : i32
    scf.if %2 {
      %cst_10 = arith.constant 0.000000e+00 : f32
      %12 = vector.broadcast %cst_10 : f32 to vector<16x64xf32>
      %c0_11 = arith.constant 0 : index
      %c0_12 = arith.constant 0 : index
      %13 = vector.load %arg7[%c0_11, %c0_12] : memref<16x64xf32, #tpu.memory_space<vmem>>, vector<16x64xf32>
      tpu.vector_store %arg7[%c0_11, %c0_12], %12 {strides = array<i32>} : memref<16x64xf32, #tpu.memory_space<vmem>>, vector<16x64xf32>,
    } else {
    }
    %c0 = arith.constant 0 : index
    %c0_1 = arith.constant 0 : index
    %3 = vector.load %arg7[%c0, %c0_1] : memref<16x64xf32, #tpu.memory_space<vmem>>, vector<16x64xf32>
    %c0_2 = arith.constant 0 : index
    %c0_3 = arith.constant 0 : index
    %4 = vector.load %arg3[%c0_2, %c0_3] : memref<16x32xbf16, #tpu.memory_space<vmem>>, vector<16x32xbf16>
    %c0_4 = arith.constant 0 : index
    %c0_5 = arith.constant 0 : index
    %5 = vector.load %arg4[%c0_4, %c0_5] : memref<32x64xbf16, #tpu.memory_space<vmem>>, vector<32x64xbf16>
    %cst = arith.constant dense<0.000000e+00> : vector<16x64xf32>
    %6 = tpu.matmul %4, %5, %cst {dimension_numbers = #tpu.dot_dimension_numbers<[1], [0], [0], [1], [0, 0, 1, 1], [], []>} : vector<16x32xbf16>, vector<32x64xbf16>, vector<16x64xf32> -> vector<16x64xf32>
    %7 = arith.addf %3, %6 : vector<16x64xf32>
    %c0_6 = arith.constant 0 : index
    %c0_7 = arith.constant 0 : index
    %8 = vector.load %arg7[%c0_6, %c0_7] : memref<16x64xf32, #tpu.memory_space<vmem>>, vector<16x64xf32>
    tpu.vector_store %arg7[%c0_6, %c0_7], %7 {strides = array<i32>} : memref<16x64xf32, #tpu.memory_space<vmem>>, vector<16x64xf32>,
    %c0_i32_8 = arith.constant 0 : i32
    %9 = arith.cmpi eq, %arg2, %c0_i32_8 : i32
    %10 = arith.extui %9 : i1 to i32
    %c0_i32_9 = arith.constant 0 : i32
    %11 = arith.cmpi ne, %10, %c0_i32_9 : i32
    scf.if %11 {
      %c0_10 = arith.constant 0 : index
      %c0_11 = arith.constant 0 : index
      %12 = vector.load %arg7[%c0_10, %c0_11] : memref<16x64xf32, #tpu.memory_space<vmem>>, vector<16x64xf32>
      %c0_12 = arith.constant 0 : index
      %c0_13 = arith.constant 0 : index
      %13 = vector.load %arg5[%c0_12, %c0_13] : memref<1x64xf32, #tpu.memory_space<vmem>>, vector<1x64xf32>
      %14 = vector.broadcast %13 : vector<1x64xf32> to vector<16x64xf32>
      %15 = arith.addf %12, %14 : vector<16x64xf32>
      %16 = arith.truncf %15 : vector<16x64xf32> to vector<16x64xbf16>
      %c0_14 = arith.constant 0 : index
      %c0_15 = arith.constant 0 : index
      %17 = vector.load %arg6[%c0_14, %c0_15] : memref<16x64xbf16, #tpu.memory_space<vmem>>, vector<16x64xbf16>
      tpu.vector_store %arg6[%c0_14, %c0_15], %16 {strides = array<i32>} : memref<16x64xbf16, #tpu.memory_space<vmem>>, vector<16x64xbf16>,
    } else {
    }
    return
  }
  func.func @transform_0(%arg0: i32, %arg1: i32, %arg2: i32) -> (i32, i32) {
    %c0_i32 = arith.constant 0 : i32
    return %arg0, %arg2 : i32, i32
  }
  func.func @transform_1(%arg0: i32, %arg1: i32, %arg2: i32) -> (i32, i32) {
    %c0_i32 = arith.constant 0 : i32
    return %arg2, %arg1 : i32, i32
  }
  func.func @transform_2(%arg0: i32, %arg1: i32, %arg2: i32) -> (i32, i32) {
    %c0_i32 = arith.constant 0 : i32
    %c0_i32_0 = arith.constant 0 : i32
    return %c0_i32, %arg1 : i32, i32
  }
  func.func @transform_3(%arg0: i32, %arg1: i32, %arg2: i32) -> (i32, i32) {
    %c0_i32 = arith.constant 0 : i32
    return %arg0, %arg1 : i32, i32
  }
}

module attributes {stable_mosaic.version = 11 : i64} {
  func.func @_matmul_bias_res_ln_kernel(%arg0: i32, %arg1: i32, %arg2: memref<16x128xbf16, #tpu.memory_space<vmem>>, %arg3: memref<128x32xbf16, #tpu.memory_space<vmem>>, %arg4: memref<1x32xf32, #tpu.memory_space<vmem>>, %arg5: memref<16x32xf32, #tpu.memory_space<vmem>>, %arg6: memref<1x32xf32, #tpu.memory_space<vmem>>, %arg7: memref<1x32xf32, #tpu.memory_space<vmem>>, %arg8: memref<16x32xf32, #tpu.memory_space<vmem>>, %arg9: memref<16x32xf32, #tpu.memory_space<vmem>>) attributes {dimension_semantics = [#tpu.dimension_semantics<parallel>, #tpu.dimension_semantics<arbitrary>], iteration_bounds = array<i64: 1, 1>, scalar_prefetch = 0 : i64, scratch_operands = 1 : i64, tpu.core_type = #tpu.core_type<tc>, window_params = [{transform_indices = @transform_0, window_bounds = array<i64: 16, 128>}, {transform_indices = @transform_1, window_bounds = array<i64: 128, 32>}, {pipeline_mode = #tpu.pipeline_mode<synchronous>, transform_indices = @transform_2, window_bounds = array<i64: 1, 32>}, {transform_indices = @transform_3, window_bounds = array<i64: 16, 32>}, {pipeline_mode = #tpu.pipeline_mode<synchronous>, transform_indices = @transform_4, window_bounds = array<i64: 1, 32>}, {pipeline_mode = #tpu.pipeline_mode<synchronous>, transform_indices = @transform_5, window_bounds = array<i64: 1, 32>}, {transform_indices = @transform_6, window_bounds = array<i64: 16, 32>}]} {
    %c0_i32 = arith.constant 0 : i32
    %0 = arith.cmpi eq, %arg1, %c0_i32 : i32
    %1 = arith.extui %0 : i1 to i32
    %c0_i32_0 = arith.constant 0 : i32
    %2 = arith.cmpi ne, %1, %c0_i32_0 : i32
    scf.if %2 {
      %cst_10 = arith.constant 0.000000e+00 : f32
      %12 = vector.broadcast %cst_10 : f32 to vector<16x32xf32>
      %c0_11 = arith.constant 0 : index
      %c0_12 = arith.constant 0 : index
      %13 = vector.load %arg9[%c0_11, %c0_12] : memref<16x32xf32, #tpu.memory_space<vmem>>, vector<16x32xf32>
      tpu.vector_store %arg9[%c0_11, %c0_12], %12 {strides = array<i32>} : memref<16x32xf32, #tpu.memory_space<vmem>>, vector<16x32xf32>,
    } else {
    }
    %c0 = arith.constant 0 : index
    %c0_1 = arith.constant 0 : index
    %3 = vector.load %arg9[%c0, %c0_1] : memref<16x32xf32, #tpu.memory_space<vmem>>, vector<16x32xf32>
    %c0_2 = arith.constant 0 : index
    %c0_3 = arith.constant 0 : index
    %4 = vector.load %arg2[%c0_2, %c0_3] : memref<16x128xbf16, #tpu.memory_space<vmem>>, vector<16x128xbf16>
    %c0_4 = arith.constant 0 : index
    %c0_5 = arith.constant 0 : index
    %5 = vector.load %arg3[%c0_4, %c0_5] : memref<128x32xbf16, #tpu.memory_space<vmem>>, vector<128x32xbf16>
    %cst = arith.constant dense<0.000000e+00> : vector<16x32xf32>
    %6 = tpu.matmul %4, %5, %cst {dimension_numbers = #tpu.dot_dimension_numbers<[1], [0], [0], [1], [0, 0, 1, 1], [], []>} : vector<16x128xbf16>, vector<128x32xbf16>, vector<16x32xf32> -> vector<16x32xf32>
    %7 = arith.addf %3, %6 : vector<16x32xf32>
    %c0_6 = arith.constant 0 : index
    %c0_7 = arith.constant 0 : index
    %8 = vector.load %arg9[%c0_6, %c0_7] : memref<16x32xf32, #tpu.memory_space<vmem>>, vector<16x32xf32>
    tpu.vector_store %arg9[%c0_6, %c0_7], %7 {strides = array<i32>} : memref<16x32xf32, #tpu.memory_space<vmem>>, vector<16x32xf32>,
    %c0_i32_8 = arith.constant 0 : i32
    %9 = arith.cmpi eq, %arg1, %c0_i32_8 : i32
    %10 = arith.extui %9 : i1 to i32
    %c0_i32_9 = arith.constant 0 : i32
    %11 = arith.cmpi ne, %10, %c0_i32_9 : i32
    scf.if %11 {
      %c0_10 = arith.constant 0 : index
      %c0_11 = arith.constant 0 : index
      %12 = vector.load %arg9[%c0_10, %c0_11] : memref<16x32xf32, #tpu.memory_space<vmem>>, vector<16x32xf32>
      %c0_12 = arith.constant 0 : index
      %c0_13 = arith.constant 0 : index
      %13 = vector.load %arg4[%c0_12, %c0_13] : memref<1x32xf32, #tpu.memory_space<vmem>>, vector<1x32xf32>
      %14 = vector.broadcast %13 : vector<1x32xf32> to vector<16x32xf32>
      %15 = arith.addf %12, %14 : vector<16x32xf32>
      %c0_14 = arith.constant 0 : index
      %c0_15 = arith.constant 0 : index
      %16 = vector.load %arg5[%c0_14, %c0_15] : memref<16x32xf32, #tpu.memory_space<vmem>>, vector<16x32xf32>
      %17 = arith.addf %15, %16 : vector<16x32xf32>
      %cst_16 = arith.constant dense<0.000000e+00> : vector<16xf32>
      %18 = vector.multi_reduction <add>, %17, %cst_16 [1] : vector<16x32xf32> to vector<16xf32>
      %19 = vector.shape_cast %18 : vector<16xf32> to vector<16x1xf32>
      %cst_17 = arith.constant 3.200000e+01 : f32
      %20 = vector.broadcast %cst_17 : f32 to vector<16x1xf32>
      %21 = arith.divf %19, %20 : vector<16x1xf32>
      %22 = vector.broadcast %21 : vector<16x1xf32> to vector<16x32xf32>
      %23 = arith.subf %17, %22 : vector<16x32xf32>
      %24 = arith.mulf %23, %23 : vector<16x32xf32>
      %cst_18 = arith.constant dense<0.000000e+00> : vector<16xf32>
      %25 = vector.multi_reduction <add>, %24, %cst_18 [1] : vector<16x32xf32> to vector<16xf32>
      %26 = vector.shape_cast %25 : vector<16xf32> to vector<16x1xf32>
      %cst_19 = arith.constant 0.0322580636 : f32
      %27 = vector.broadcast %cst_19 : f32 to vector<16x1xf32>
      %28 = arith.mulf %26, %27 : vector<16x1xf32>
      %29 = math.sqrt %28 : vector<16x1xf32>
      %c0_20 = arith.constant 0 : index
      %c0_21 = arith.constant 0 : index
      %30 = vector.load %arg6[%c0_20, %c0_21] : memref<1x32xf32, #tpu.memory_space<vmem>>, vector<1x32xf32>
      %31 = vector.broadcast %21 : vector<16x1xf32> to vector<16x32xf32>
      %32 = arith.subf %17, %31 : vector<16x32xf32>
      %33 = vector.broadcast %30 : vector<1x32xf32> to vector<16x32xf32>
      %34 = arith.mulf %33, %32 : vector<16x32xf32>
      %cst_22 = arith.constant 9.99999997E-7 : f32
      %35 = vector.broadcast %cst_22 : f32 to vector<16x1xf32>
      %36 = arith.addf %29, %35 : vector<16x1xf32>
      %37 = vector.broadcast %36 : vector<16x1xf32> to vector<16x32xf32>
      %38 = arith.divf %34, %37 : vector<16x32xf32>
      %c0_23 = arith.constant 0 : index
      %c0_24 = arith.constant 0 : index
      %39 = vector.load %arg7[%c0_23, %c0_24] : memref<1x32xf32, #tpu.memory_space<vmem>>, vector<1x32xf32>
      %40 = vector.broadcast %39 : vector<1x32xf32> to vector<16x32xf32>
      %41 = arith.addf %38, %40 : vector<16x32xf32>
      %c0_25 = arith.constant 0 : index
      %c0_26 = arith.constant 0 : index
      %42 = vector.load %arg8[%c0_25, %c0_26] : memref<16x32xf32, #tpu.memory_space<vmem>>, vector<16x32xf32>
      tpu.vector_store %arg8[%c0_25, %c0_26], %41 {strides = array<i32>} : memref<16x32xf32, #tpu.memory_space<vmem>>, vector<16x32xf32>,
    } else {
    }
    return
  }
  func.func @transform_0(%arg0: i32, %arg1: i32) -> (i32, i32) {
    %c0_i32 = arith.constant 0 : i32
    return %arg0, %arg1 : i32, i32
  }
  func.func @transform_1(%arg0: i32, %arg1: i32) -> (i32, i32) {
    %c0_i32 = arith.constant 0 : i32
    %c0_i32_0 = arith.constant 0 : i32
    return %arg1, %c0_i32 : i32, i32
  }
  func.func @transform_2(%arg0: i32, %arg1: i32) -> (i32, i32) {
    %c0_i32 = arith.constant 0 : i32
    %c0_i32_0 = arith.constant 0 : i32
    %c0_i32_1 = arith.constant 0 : i32
    return %c0_i32, %c0_i32_0 : i32, i32
  }
  func.func @transform_3(%arg0: i32, %arg1: i32) -> (i32, i32) {
    %c0_i32 = arith.constant 0 : i32
    %c0_i32_0 = arith.constant 0 : i32
    return %arg0, %c0_i32 : i32, i32
  }
  func.func @transform_4(%arg0: i32, %arg1: i32) -> (i32, i32) {
    %c0_i32 = arith.constant 0 : i32
    %c0_i32_0 = arith.constant 0 : i32
    %c0_i32_1 = arith.constant 0 : i32
    return %c0_i32, %c0_i32_0 : i32, i32
  }
  func.func @transform_5(%arg0: i32, %arg1: i32) -> (i32, i32) {
    %c0_i32 = arith.constant 0 : i32
    %c0_i32_0 = arith.constant 0 : i32
    %c0_i32_1 = arith.constant 0 : i32
    return %c0_i32, %c0_i32_0 : i32, i32
  }
  func.func @transform_6(%arg0: i32, %arg1: i32) -> (i32, i32) {
    %c0_i32 = arith.constant 0 : i32
    %c0_i32_0 = arith.constant 0 : i32
    return %arg0, %c0_i32 : i32, i32
  }
}

</mosaic_0001>

<llo_original>
// kernel: decoder.19
$region0: #{decoder.19}
  #allocation0 [shape = 'u32[]', space=smem, size = 0x4, offset = 0x4, fixed_abs, tag = 'smem constant byte address 0x4 - core index']
  #allocation1 [shape = 'u32[144,128]{1,0:T(1,128)}', space=vmem, size = 0x12000, scoped, tag = 'internal scratch']
  #allocation2 [shape = 'f32[16,96]{1,0:T(8,128)}', space=vmem, size = 0x2000, scoped, tag = 'scratch operand']
  %s0 = inlined_call_operand.vmem [shape: bf16[16,32], index: 0, kind: input, shape index: {}]
  %s1 = inlined_call_operand.vmem [shape: bf16[32,96], index: 1, kind: input, shape index: {}]
  %s2 = inlined_call_operand.vmem [shape: f32[1,96], index: 2, kind: input, shape index: {}]
  %s3 = inlined_call_operand.vmem [shape: bf16[16,96], index: 3, kind: output, shape index: {}]
  %s4 = sld [smem:[#allocation0]]
  $region30: #{decoder.19} parent=0
    _
  %s6 = ssub.s32 1, %s4
  %s7 = scalar_select 0, %s6, %s4
  // Predicated region
  $region2: #{decoder.19} parent=0 // pred_check
    _
  $region3: #{decoder.19} parent=0 // pred_check_branch
    %9 = sbr.rel (0) target = $region5
  $region4: #{decoder.19} parent=0 // pred_region
    _
  $region5: #{decoder.19} parent=0 // pred_fallthru
    _
  // Predicated region
  $region6: #{decoder.19} parent=0 // pred_check
    _
  $region7: #{decoder.19} parent=0 // pred_check_branch
    %11 = sbr.rel (0) target = $region9
  $region8: #{decoder.19} parent=0 // pred_region
    _
  $region9: #{decoder.19} parent=0 // pred_fallthru
    _
  // Predicated region
  $region10: #{decoder.19} parent=0 // pred_check
    _
  $region11: #{decoder.19} parent=0 // pred_check_branch
    %13 = sbr.rel (0) target = $region13
  $region12: #{decoder.19} parent=0 // pred_region
    _
  $region13: #{decoder.19} parent=0 // pred_fallthru
    _
  %p15 = scmp.eq.s32.totalorder 0, 0
  // Predicated region
  $region14: #{decoder.19} parent=0 // pred_check
    %p16 = pneg %p15
  $region15: #{decoder.19} parent=0 // pred_check_branch
    %18 = sbr.rel (%p16) target = $region17
  $region16: #{decoder.19} parent=0 // pred_region
    %vm19 = vcmask 785408
    %20 = vst.msk [vmem:[#allocation2] sm:$0xff] %vm19, 0.0
    %21 = vst.msk [vmem:[#allocation2 + $0x8] sm:$0xff] %vm19, 0.0
  $region17: #{decoder.19} parent=0 // pred_fallthru
    _
  %v22 = vld [vmem:[#allocation2] sm:$0xff]
  %v23 = vld [vmem:[#allocation2 + $0x8] sm:$0xff]
  %v24 = vld [vmem:[%s0] sm:$0xf]
  %v25 = vld [vmem:[%s0 + $0x4] sm:$0xf]
  %v26 = vld [vmem:[%s1] sm:$0xf]
  %v27 = vld [vmem:[%s1 + $0x4] sm:$0xf]
  %v28 = vld [vmem:[%s1 + $0x8] sm:$0xf]
  %v29 = vld [vmem:[%s1 + $0xc] sm:$0xf]
  %v32 = vunpack.c.l.b16 %v24
  %v33 = vunpack.c.l.b16 %v25
  %v34 = vpack.c.b16 %v33, %v32
  %v39 = vunpack.c.l.b16 %v26
  %v40 = vunpack.c.l.b16 %v27
  %v41 = vunpack.c.l.b16 %v28
  %v42 = vunpack.c.l.b16 %v29
  %v43 = vpack.c.b16 %v40, %v39
  %v44 = vpack.c.b16 %v42, %v41
  %vm47 = vcmask 261120
  %v49 = vsel %vm47, %v34, 0
  %51 = vmatprep.subr.bf16.mxu0 0
  %52 = vmatpush1.bf16.msra.mxu0 0
  %53 = vmatprep.subr.bf16.mxu0 0
  %54 = vmatpush1.bf16.msra.mxu0 0
  %55 = vmatprep.subr.bf16.mxu0 0
  %56 = vmatpush1.bf16.msra.mxu0 0
  %57 = vmatprep.subr.bf16.mxu0 0
  %58 = vmatpush1.bf16.msra.mxu0 0
  %59 = vmatprep.subr.bf16.mxu0 0
  %60 = vmatpush1.bf16.msra.mxu0 0
  %61 = vmatprep.subr.bf16.mxu0 0
  %62 = vmatpush1.bf16.msra.mxu0 0
  %63 = vmatprep.subr.bf16.mxu0 0
  %64 = vmatpush1.bf16.msra.mxu0 %v44
  %65 = vmatprep.subr.bf16.mxu0 0
  %66 = vmatpush1.bf16.msra.mxu0 %v43
  %67 = vmatprep.subr.bf16.mxu0 0
  %68 = vmatpush2.bf16.msra.mxu0 0
  %69 = vmatprep.subr.bf16.mxu0 0
  %70 = vmatpush2.bf16.msra.mxu0 0
  %71 = vmatprep.subr.bf16.mxu0 0
  %72 = vmatpush2.bf16.msra.mxu0 0
  %73 = vmatprep.subr.bf16.mxu0 0
  %74 = vmatpush2.bf16.msra.mxu0 0
  %75 = vmatprep.subr.bf16.mxu0 0
  %76 = vmatpush2.bf16.msra.mxu0 0
  %77 = vmatprep.subr.bf16.mxu0 0
  %78 = vmatpush2.bf16.msra.mxu0 0
  %79 = vmatprep.subr.bf16.mxu0 0
  %80 = vmatpush2.bf16.msra.mxu0 0
  %81 = vmatprep.subr.bf16.mxu0 0
  %82 = vmatpush2.bf16.msra.mxu0 0
  %83 = vmatprep.mubr.bf16.mxu0 0
  %84 = vmatmul.mubr.bf16.gmra.mxu0 %v49
  %v85 = vpop.f32.mrf.mxu0
  %v86 = vadd.f32 0.0, %v85
  %v87 = vpop.f32.mrf.mxu0
  %v88 = vpop.f32.mrf.mxu0
  %v89 = vadd.f32 0.0, %v88
  %v90 = vpop.f32.mrf.mxu0
  %91 = vdwg.mxu0
  %v92 = vadd.f32 %v22, %v86
  %v93 = vadd.f32 %v23, %v89
  %vm94 = vcmask 785408
  %95 = vst.msk [vmem:[#allocation2] sm:$0xff] %vm94, %v92
  %96 = vst.msk [vmem:[#allocation2 + $0x8] sm:$0xff] %vm94, %v93
  // Predicated region
  $region18: #{decoder.19} parent=0 // pred_check
    %p97 = pneg %p15
  $region19: #{decoder.19} parent=0 // pred_check_branch
    %99 = sbr.rel (%p97) target = $region21
  $region20: #{decoder.19} parent=0 // pred_region
    %v100 = vld [vmem:[#allocation2] sm:$0xff]
    %v101 = vld [vmem:[#allocation2 + $0x8] sm:$0xff]
    %v102 = vld [vmem:[%s2] sm:$0x1]
    %v104 = vlaneseq
    %v105 = vshrl.u32 %v104, 7
    %v106 = vsub.s32 0, %v105
    %v107 = vrot.slane %v102, %v106
    %v109 = vadd.f32 %v100, %v107
    %v110 = vadd.f32 %v101, %v107
    %v111 = vpack.c.bf16 %v110, %v109
    %v113 = vunpack.c.l.b16 %v111
    %v114 = vunpack.c.h.b16 %v111
    %v115 = vpack.c.b16 %v113, %v113
    %v116 = vpack.c.b16 %v114, %v114
    %vm119 = vcmask 781312
    %120 = vst.msk [vmem:[%s3] sm:$0xf] %vm119, %v115
    %121 = vst.msk [vmem:[%s3 + $0x4] sm:$0xf] %vm119, %v116
  $region21: #{decoder.19} parent=0 // pred_fallthru
    _
  // Predicated region
  $region22: #{decoder.19} parent=0 // pred_check
    _
  $region23: #{decoder.19} parent=0 // pred_check_branch
    %123 = sbr.rel (0) target = $region25
  $region24: #{decoder.19} parent=0 // pred_region
    _
  $region25: #{decoder.19} parent=0 // pred_fallthru
    _
  // Predicated region
  $region26: #{decoder.19} parent=0 // pred_check
    _
  $region27: #{decoder.19} parent=0 // pred_check_branch
    %125 = sbr.rel (0) target = $region29
  $region28: #{decoder.19} parent=0 // pred_region
    _
  $region29: #{decoder.19} parent=0 // pred_fallthru
    _

// kernel: decoder.20
$region0: #{decoder.20}
  #allocation0 [shape = 'u32[]', space=smem, size = 0x4, offset = 0x4, fixed_abs, tag = 'smem constant byte address 0x4 - core index']
  #allocation1 [shape = 'u32[144,128]{1,0:T(1,128)}', space=vmem, size = 0x12000, scoped, tag = 'internal scratch']
  %s0 = inlined_call_operand.vmem [shape: bf16[2,8,32], index: 0, kind: input, shape index: {}]
  %s1 = inlined_call_operand.vmem [shape: bf16[2,8,32], index: 1, kind: input, shape index: {}]
  %s2 = inlined_call_operand.vmem [shape: bf16[2,8,32], index: 2, kind: input, shape index: {}]
  %s3 = inlined_call_operand.vmem [shape: f32[2,8,8], index: 3, kind: input, shape index: {}]
  %s4 = inlined_call_operand.vmem [shape: bf16[2,8,32], index: 4, kind: output, shape index: {}]
  %s5 = sld [smem:[#allocation0]]
  $region49: #{decoder.20} parent=0
    _
  %s7 = ssub.s32 1, %s5
  %s8 = scalar_select 0, %s7, %s5
  loop: start=0, step=1, limit=4
  $region2: #{decoder.20} parent=0 // loop_pre_header
    _
  $region3: #{decoder.20} parent=0 // loop_header
    %s10 = sphi 0, %s14
    %p11 = scmp.ge.s32.totalorder %s10, 4
    %s20 = sphi 0, %s22
    %s23 = sphi 0, %s20
    %s24 = sphi 0, %s23
    %s40 = sphi 0, %s24
    %s46 = sphi 0, %s48
    %s49 = sphi 0, %s46
    %s50 = sphi 0, %s49
    %s66 = sphi 0, %s50
    %s72 = sphi 0, %s74
    %s75 = sphi 0, %s72
    %s76 = sphi 0, %s75
    %s92 = sphi 0, %s76
    %s98 = sphi 0, %s100
    %s101 = sphi 0, %s98
    %s102 = sphi 0, %s101
    %s118 = sphi 0, %s102
    %s124 = sphi 0, %s126
    %s127 = sphi 0, %s124
    %s128 = sphi 0, %s127
    %s144 = sphi 0, %s128
  $region4: #{decoder.20} parent=0 // loop_header_branch
    %13 = sbr.rel (%p11) target = $region8
  $region5: #{decoder.20} parent=0 // loop_body
    %s15 = ssub.s32 %s10, 1
    %s16 = ssub.s32 %s10, 2
    %s17 = sadd.s32 %s10, 1
    %s18 = ssub.s32 %s10, %s17
    %p19 = scmp.eq.s32.totalorder %s18, 0
    %s21 = sadd.s32 %s20, 1
    %s22 = scalar_select %p19, %s20, %s21
    %p25 = pneg %p19
    %p26 = scmp.eq.s32.totalorder %s10, 1
    %p27 = por %p25, %p26
    %p28 = scmp.ne.s32.totalorder %s20, %s23
    %p29 = scmp.eq.s32.totalorder %s10, 0
    %p30 = por %p28, %p29
    %p31 = scmp.ne.s32.totalorder %s20, %s23
    %p32 = scmp.eq.s32.totalorder %s15, 1
    %p33 = por %p31, %p32
    %p34 = scmp.ne.s32.totalorder %s23, %s24
    %p35 = scmp.eq.s32.totalorder %s15, 0
    %p36 = por %p34, %p35
    %p37 = scmp.ne.s32.totalorder %s23, %s24
    %p38 = scmp.eq.s32.totalorder %s16, 1
    %p39 = por %p37, %p38
    %p41 = scmp.ne.s32.totalorder %s24, %s40
    %p42 = scmp.eq.s32.totalorder %s16, 0
    %p43 = por %p41, %p42
    %s44 = ssub.s32 %s10, %s17
    %p45 = scmp.eq.s32.totalorder %s44, 0
    %s47 = sadd.s32 %s46, 1
    %s48 = scalar_select %p45, %s46, %s47
    %p51 = pneg %p45
    %p52 = scmp.eq.s32.totalorder %s10, 1
    %p53 = por %p51, %p52
    %p54 = scmp.ne.s32.totalorder %s46, %s49
    %p55 = scmp.eq.s32.totalorder %s10, 0
    %p56 = por %p54, %p55
    %p57 = scmp.ne.s32.totalorder %s46, %s49
    %p58 = scmp.eq.s32.totalorder %s15, 1
    %p59 = por %p57, %p58
    %p60 = scmp.ne.s32.totalorder %s49, %s50
    %p61 = scmp.eq.s32.totalorder %s15, 0
    %p62 = por %p60, %p61
    %p63 = scmp.ne.s32.totalorder %s49, %s50
    %p64 = scmp.eq.s32.totalorder %s16, 1
    %p65 = por %p63, %p64
    %p67 = scmp.ne.s32.totalorder %s50, %s66
    %p68 = scmp.eq.s32.totalorder %s16, 0
    %p69 = por %p67, %p68
    %s70 = ssub.s32 %s10, %s17
    %p71 = scmp.eq.s32.totalorder %s70, 0
    %s73 = sadd.s32 %s72, 1
    %s74 = scalar_select %p71, %s72, %s73
    %p77 = pneg %p71
    %p78 = scmp.eq.s32.totalorder %s10, 1
    %p79 = por %p77, %p78
    %p80 = scmp.ne.s32.totalorder %s72, %s75
    %p81 = scmp.eq.s32.totalorder %s10, 0
    %p82 = por %p80, %p81
    %p83 = scmp.ne.s32.totalorder %s72, %s75
    %p84 = scmp.eq.s32.totalorder %s15, 1
    %p85 = por %p83, %p84
    %p86 = scmp.ne.s32.totalorder %s75, %s76
    %p87 = scmp.eq.s32.totalorder %s15, 0
    %p88 = por %p86, %p87
    %p89 = scmp.ne.s32.totalorder %s75, %s76
    %p90 = scmp.eq.s32.totalorder %s16, 1
    %p91 = por %p89, %p90
    %p93 = scmp.ne.s32.totalorder %s76, %s92
    %p94 = scmp.eq.s32.totalorder %s16, 0
    %p95 = por %p93, %p94
    %s96 = ssub.s32 %s10, %s17
    %p97 = scmp.eq.s32.totalorder %s96, 0
    %s99 = sadd.s32 %s98, 1
    %s100 = scalar_select %p97, %s98, %s99
    %p103 = pneg %p97
    %p104 = scmp.eq.s32.totalorder %s10, 1
    %p105 = por %p103, %p104
    %p106 = scmp.ne.s32.totalorder %s98, %s101
    %p107 = scmp.eq.s32.totalorder %s10, 0
    %p108 = por %p106, %p107
    %p109 = scmp.ne.s32.totalorder %s98, %s101
    %p110 = scmp.eq.s32.totalorder %s15, 1
    %p111 = por %p109, %p110
    %p112 = scmp.ne.s32.totalorder %s101, %s102
    %p113 = scmp.eq.s32.totalorder %s15, 0
    %p114 = por %p112, %p113
    %p115 = scmp.ne.s32.totalorder %s101, %s102
    %p116 = scmp.eq.s32.totalorder %s16, 1
    %p117 = por %p115, %p116
    %p119 = scmp.ne.s32.totalorder %s102, %s118
    %p120 = scmp.eq.s32.totalorder %s16, 0
    %p121 = por %p119, %p120
    %s122 = ssub.s32 %s10, %s17
    %p123 = scmp.eq.s32.totalorder %s122, 0
    %s125 = sadd.s32 %s124, 1
    %s126 = scalar_select %p123, %s124, %s125
    %p129 = pneg %p123
    %p130 = scmp.eq.s32.totalorder %s10, 1
    %p131 = por %p129, %p130
    %p132 = scmp.ne.s32.totalorder %s124, %s127
    %p133 = scmp.eq.s32.totalorder %s10, 0
    %p134 = por %p132, %p133
    %p135 = scmp.ne.s32.totalorder %s124, %s127
    %p136 = scmp.eq.s32.totalorder %s15, 1
    %p137 = por %p135, %p136
    %p138 = scmp.ne.s32.totalorder %s127, %s128
    %p139 = scmp.eq.s32.totalorder %s15, 0
    %p140 = por %p138, %p139
    %p141 = scmp.ne.s32.totalorder %s127, %s128
    %p142 = scmp.eq.s32.totalorder %s16, 1
    %p143 = por %p141, %p142
    %p145 = scmp.ne.s32.totalorder %s128, %s144
    %p146 = scmp.eq.s32.totalorder %s16, 0
    %p147 = por %p145, %p146
    %p148 = scmp.le.s32.totalorder 1, %s10
    %p149 = scmp.lt.s32.totalorder %s10, 3
    %p150 = pnand %p148, %p149
    %p151 = pneg %p150
    // Predicated region
    $region9: #{decoder.20} parent=5 // pred_check
      _
    $region10: #{decoder.20} parent=5 // pred_check_branch
      %153 = sbr.rel (%p150) target = $region12
    $region11: #{decoder.20} parent=5 // pred_region
      %s154 = ssub.s32 %s10, 1
    $region12: #{decoder.20} parent=5 // pred_fallthru
      _
    %p155 = scmp.lt.s32.totalorder %s10, 2
    // Predicated region
    $region13: #{decoder.20} parent=5 // pred_check
      %p156 = pneg %p155
    $region14: #{decoder.20} parent=5 // pred_check_branch
      %158 = sbr.rel (%p156) target = $region16
    $region15: #{decoder.20} parent=5 // pred_region
      // Predicated region
      $region17: #{decoder.20} parent=15 // pred_check
        %p159 = pneg %p30
      $region18: #{decoder.20} parent=15 // pred_check_branch
        %161 = sbr.rel (%p159) target = $region20
      $region19: #{decoder.20} parent=15 // pred_region
        %p162 = scmp.lt.s32.totalorder %s10, 1
        %s163 = scalar_select %p162, %s10, 1
        %s164 = smul.addr %s163, 4
        %s165 = scalar_lea.vmem %s0, %s164
      $region20: #{decoder.20} parent=15 // pred_fallthru
        _
      // Predicated region
      $region21: #{decoder.20} parent=15 // pred_check
        %p166 = pneg %p56
      $region22: #{decoder.20} parent=15 // pred_check_branch
        %168 = sbr.rel (%p166) target = $region24
      $region23: #{decoder.20} parent=15 // pred_region
        %p169 = scmp.lt.s32.totalorder %s10, 1
        %s170 = scalar_select %p169, %s10, 1
        %s171 = smul.addr %s170, 4
        %s172 = scalar_lea.vmem %s1, %s171
      $region24: #{decoder.20} parent=15 // pred_fallthru
        _
      // Predicated region
      $region25: #{decoder.20} parent=15 // pred_check
        %p173 = pneg %p82
      $region26: #{decoder.20} parent=15 // pred_check_branch
        %175 = sbr.rel (%p173) target = $region28
      $region27: #{decoder.20} parent=15 // pred_region
        %p176 = scmp.lt.s32.totalorder %s10, 1
        %s177 = scalar_select %p176, %s10, 1
        %s178 = smul.addr %s177, 4
        %s179 = scalar_lea.vmem %s2, %s178
      $region28: #{decoder.20} parent=15 // pred_fallthru
        _
      // Predicated region
      $region29: #{decoder.20} parent=15 // pred_check
        %p180 = pneg %p108
      $region30: #{decoder.20} parent=15 // pred_check_branch
        %182 = sbr.rel (%p180) target = $region32
      $region31: #{decoder.20} parent=15 // pred_region
        %p183 = scmp.lt.s32.totalorder %s10, 1
        %s184 = scalar_select %p183, %s10, 1
        %s185 = smul.addr %s184, 8
        %s186 = scalar_lea.vmem %s3, %s185
      $region32: #{decoder.20} parent=15 // pred_fallthru
        _
    $region16: #{decoder.20} parent=5 // pred_fallthru
      _
    %p187 = scmp.le.s32.totalorder 1, %s10
    %p188 = scmp.lt.s32.totalorder %s10, 3
    %p189 = pnand %p187, %p188
    %p190 = pneg %p189
    // Predicated region
    $region33: #{decoder.20} parent=5 // pred_check
      _
    $region34: #{decoder.20} parent=5 // pred_check_branch
      %192 = sbr.rel (%p189) target = $region36
    $region35: #{decoder.20} parent=5 // pred_region
      %s193 = ssub.s32 %s10, 1
      %p194 = scmp.lt.s32.totalorder %s15, 1
      %s195 = scalar_select %p194, %s15, 1
      %s196 = smul.addr %s195, 4
      %s197 = scalar_lea.vmem %s0, %s196
      %p198 = pneg %p36
      %p199 = pneg %p33
      %p200 = scmp.lt.s32.totalorder %s15, 1
      %s201 = scalar_select %p200, %s15, 1
      %s202 = smul.addr %s201, 4
      %s203 = scalar_lea.vmem %s1, %s202
      %p204 = pneg %p62
      %p205 = pneg %p59
      %p206 = scmp.lt.s32.totalorder %s15, 1
      %s207 = scalar_select %p206, %s15, 1
      %s208 = smul.addr %s207, 4
      %s209 = scalar_lea.vmem %s2, %s208
      %p210 = pneg %p88
      %p211 = pneg %p85
      %p212 = scmp.lt.s32.totalorder %s15, 1
      %s213 = scalar_select %p212, %s15, 1
      %s214 = smul.addr %s213, 8
      %s215 = scalar_lea.vmem %s3, %s214
      %p216 = pneg %p114
      %p217 = pneg %p111
      %p218 = pneg %p140
      %p219 = pneg %p137
      %p220 = scmp.lt.s32.totalorder %s15, 1
      %s221 = scalar_select %p220, %s15, 1
      %s222 = smul.addr %s221, 4
      %s223 = scalar_lea.vmem %s4, %s222
      %p224 = scmp.lt.s32.totalorder %s15, 1
      %s225 = scalar_select %p224, %s15, 1
      %s226 = smul.addr %s225, 4
      %s227 = scalar_lea.vmem %s0, %s226
      %p228 = scmp.lt.s32.totalorder %s15, 1
      %s229 = scalar_select %p228, %s15, 1
      %s230 = smul.addr %s229, 4
      %s231 = scalar_lea.vmem %s1, %s230
      %p232 = scmp.lt.s32.totalorder %s15, 1
      %s233 = scalar_select %p232, %s15, 1
      %s234 = smul.addr %s233, 4
      %s235 = scalar_lea.vmem %s2, %s234
      %p236 = scmp.lt.s32.totalorder %s15, 1
      %s237 = scalar_select %p236, %s15, 1
      %s238 = smul.addr %s237, 8
      %s239 = scalar_lea.vmem %s3, %s238
      %p240 = scmp.lt.s32.totalorder %s15, 1
      %s241 = scalar_select %p240, %s15, 1
      %s242 = smul.addr %s241, 4
      %s243 = scalar_lea.vmem %s4, %s242
      %v245 = vld [vmem:[%s239] sm:$0xff]
      %v246 = vld [vmem:[%s227] sm:$0xf]
      %v247 = vld [vmem:[%s231] sm:$0xf]
      %v248 = vld [vmem:[%s235] sm:$0xf]
      %vm249 = vcmask 64512
      %v251 = vsel %vm249, %v246, 0
      %v254 = vsel %vm249, %v247, 0
      %256 = vmatprep.subr.bf16.mxu0 0
      %257 = vmatpush1.bf16.xpose.msra.mxu0 0
      %258 = vmatprep.subr.bf16.mxu0 0
      %259 = vmatpush1.bf16.xpose.msra.mxu0 0
      %260 = vmatprep.subr.bf16.mxu0 0
      %261 = vmatpush1.bf16.xpose.msra.mxu0 0
      %262 = vmatprep.subr.bf16.mxu0 0
      %263 = vmatpush1.bf16.xpose.msra.mxu0 0
      %264 = vmatprep.subr.bf16.mxu0 0
      %265 = vmatpush1.bf16.xpose.msra.mxu0 0
      %266 = vmatprep.subr.bf16.mxu0 0
      %267 = vmatpush1.bf16.xpose.msra.mxu0 0
      %268 = vmatprep.subr.bf16.mxu0 0
      %269 = vmatpush1.bf16.xpose.msra.mxu0 0
      %270 = vmatprep.subr.bf16.mxu0 0
      %271 = vmatpush1.bf16.xpose.msra.mxu0 %v254
      %272 = vmatprep.subr.bf16.mxu0 0
      %273 = vmatpush2.bf16.xpose.msra.mxu0 0
      %274 = vmatprep.subr.bf16.mxu0 0
      %275 = vmatpush2.bf16.xpose.msra.mxu0 0
      %276 = vmatprep.subr.bf16.mxu0 0
      %277 = vmatpush2.bf16.xpose.msra.mxu0 0
      %278 = vmatprep.subr.bf16.mxu0 0
      %279 = vmatpush2.bf16.xpose.msra.mxu0 0
      %280 = vmatprep.subr.bf16.mxu0 0
      %281 = vmatpush2.bf16.xpose.msra.mxu0 0
      %282 = vmatprep.subr.bf16.mxu0 0
      %283 = vmatpush2.bf16.xpose.msra.mxu0 0
      %284 = vmatprep.subr.bf16.mxu0 0
      %285 = vmatpush2.bf16.xpose.msra.mxu0 0
      %286 = vmatprep.subr.bf16.mxu0 0
      %287 = vmatpush2.bf16.xpose.msra.mxu0 0
      %288 = vmatprep.mubr.bf16.mxu0 0
      %289 = vmatmul.mubr.bf16.gmra.mxu0 %v251
      %v290 = vpop.f32.mrf.mxu0
      %v291 = vadd.f32 0.0, %v290
      %v292 = vpop.f32.mrf.mxu0
      %v293 = vpop.f32.mrf.mxu0
      %v294 = vpop.f32.mrf.mxu0
      %295 = vdwg.mxu0
      %v296 = vmul.f32 %v291, 0.35355338
      %v297 = vadd.f32 %v296, %v245
      %v298 = vsel %vm249, %v297, -inf
      %299 = vmax.xlane.f32.xlu0 %v298
      %v300 = vpop.xlane.xlu0 %299
      %v301 = vsub.f32 %v297, %v300
      %v302 = vmul.f32 %v301, 1.442695
      %v303 = vpow.pop %v302
      %v304 = vsel %vm249, %v303, 0.0
      %305 = vadd.xlane.f32.xlu0 %v304
      %v306 = vpop.xlane.xlu0 %305
      %v307 = vrcp.pop %v306
      %v308 = vmul.f32 %v303, %v307
      %v309 = vpack.c.bf16 %v308, %v308
      %v311 = vsel %vm249, %v309, 0
      %vm313 = vcmask 1043456
      %v315 = vsel %vm313, %v248, 0
      %317 = vmatprep.subr.bf16.mxu0 0
      %318 = vmatpush1.bf16.msra.mxu0 0
      %319 = vmatprep.subr.bf16.mxu0 0
      %320 = vmatpush1.bf16.msra.mxu0 0
      %321 = vmatprep.subr.bf16.mxu0 0
      %322 = vmatpush1.bf16.msra.mxu0 0
      %323 = vmatprep.subr.bf16.mxu0 0
      %324 = vmatpush1.bf16.msra.mxu0 0
      %325 = vmatprep.subr.bf16.mxu0 0
      %326 = vmatpush1.bf16.msra.mxu0 0
      %327 = vmatprep.subr.bf16.mxu0 0
      %328 = vmatpush1.bf16.msra.mxu0 0
      %329 = vmatprep.subr.bf16.mxu0 0
      %330 = vmatpush1.bf16.msra.mxu0 0
      %331 = vmatprep.subr.bf16.mxu0 0
      %332 = vmatpush1.bf16.msra.mxu0 %v315
      %333 = vmatprep.subr.bf16.mxu0 0
      %334 = vmatpush2.bf16.msra.mxu0 0
      %335 = vmatprep.subr.bf16.mxu0 0
      %336 = vmatpush2.bf16.msra.mxu0 0
      %337 = vmatprep.subr.bf16.mxu0 0
      %338 = vmatpush2.bf16.msra.mxu0 0
      %339 = vmatprep.subr.bf16.mxu0 0
      %340 = vmatpush2.bf16.msra.mxu0 0
      %341 = vmatprep.subr.bf16.mxu0 0
      %342 = vmatpush2.bf16.msra.mxu0 0
      %343 = vmatprep.subr.bf16.mxu0 0
      %344 = vmatpush2.bf16.msra.mxu0 0
      %345 = vmatprep.subr.bf16.mxu0 0
      %346 = vmatpush2.bf16.msra.mxu0 0
      %347 = vmatprep.subr.bf16.mxu0 0
      %348 = vmatpush2.bf16.msra.mxu0 0
      %349 = vmatprep.mubr.bf16.mxu0 0
      %350 = vmatmul.mubr.bf16.gmra.mxu0 %v311
      %v351 = vpop.f32.mrf.mxu0
      %v352 = vadd.f32 0.0, %v351
      %v353 = vpop.f32.mrf.mxu0
      %v354 = vpop.f32.mrf.mxu0
      %v355 = vpop.f32.mrf.mxu0
      %356 = vdwg.mxu0
      %v358 = vunpack.c.l.b16 %v246
      %v359 = vpack.c.b16 %v358, %v358
      %360 = vrot.lane.b32.xlu0 %v359, 120
      %v361 = vpop.permute.xlu0 %360
      %v363 = vunpack.c.l.b16 %v247
      %v364 = vpack.c.b16 %v363, %v363
      %365 = vrot.lane.b32.xlu0 %v364, 120
      %v366 = vpop.permute.xlu0 %365
      %v368 = vsel %vm249, %v361, 0
      %v371 = vsel %vm249, %v366, 0
      %373 = vmatprep.subr.bf16.mxu0 0
      %374 = vmatpush1.bf16.xpose.msra.mxu0 0
      %375 = vmatprep.subr.bf16.mxu0 0
      %376 = vmatpush1.bf16.xpose.msra.mxu0 0
      %377 = vmatprep.subr.bf16.mxu0 0
      %378 = vmatpush1.bf16.xpose.msra.mxu0 0
      %379 = vmatprep.subr.bf16.mxu0 0
      %380 = vmatpush1.bf16.xpose.msra.mxu0 0
      %381 = vmatprep.subr.bf16.mxu0 0
      %382 = vmatpush1.bf16.xpose.msra.mxu0 0
      %383 = vmatprep.subr.bf16.mxu0 0
      %384 = vmatpush1.bf16.xpose.msra.mxu0 0
      %385 = vmatprep.subr.bf16.mxu0 0
      %386 = vmatpush1.bf16.xpose.msra.mxu0 0
      %387 = vmatprep.subr.bf16.mxu0 0
      %388 = vmatpush1.bf16.xpose.msra.mxu0 %v371
      %389 = vmatprep.subr.bf16.mxu0 0
      %390 = vmatpush2.bf16.xpose.msra.mxu0 0
      %391 = vmatprep.subr.bf16.mxu0 0
      %392 = vmatpush2.bf16.xpose.msra.mxu0 0
      %393 = vmatprep.subr.bf16.mxu0 0
      %394 = vmatpush2.bf16.xpose.msra.mxu0 0
      %395 = vmatprep.subr.bf16.mxu0 0
      %396 = vmatpush2.bf16.xpose.msra.mxu0 0
      %397 = vmatprep.subr.bf16.mxu0 0
      %398 = vmatpush2.bf16.xpose.msra.mxu0 0
      %399 = vmatprep.subr.bf16.mxu0 0
      %400 = vmatpush2.bf16.xpose.msra.mxu0 0
      %401 = vmatprep.subr.bf16.mxu0 0
      %402 = vmatpush2.bf16.xpose.msra.mxu0 0
      %403 = vmatprep.subr.bf16.mxu0 0
      %404 = vmatpush2.bf16.xpose.msra.mxu0 0
      %405 = vmatprep.mubr.bf16.mxu0 0
      %406 = vmatmul.mubr.bf16.gmra.mxu0 %v368
      %v407 = vpop.f32.mrf.mxu0
      %v408 = vadd.f32 0.0, %v407
      %v409 = vpop.f32.mrf.mxu0
      %v410 = vpop.f32.mrf.mxu0
      %v411 = vpop.f32.mrf.mxu0
      %412 = vdwg.mxu0
      %v413 = vmul.f32 %v408, 0.35355338
      %v414 = vadd.f32 %v413, %v245
      %v415 = vsel %vm249, %v414, -inf
      %416 = vmax.xlane.f32.xlu0 %v415
      %v417 = vpop.xlane.xlu0 %416
      %v418 = vsub.f32 %v414, %v417
      %v419 = vmul.f32 %v418, 1.442695
      %v420 = vpow.pop %v419
      %v421 = vsel %vm249, %v420, 0.0
      %422 = vadd.xlane.f32.xlu0 %v421
      %v423 = vpop.xlane.xlu0 %422
      %v424 = vrcp.pop %v423
      %v425 = vmul.f32 %v420, %v424
      %v426 = vpack.c.bf16 %v425, %v425
      %v428 = vunpack.c.l.b16 %v248
      %v429 = vpack.c.b16 %v428, %v428
      %430 = vrot.lane.b32.xlu0 %v429, 120
      %v431 = vpop.permute.xlu0 %430
      %v433 = vsel %vm249, %v426, 0
      %v436 = vsel %vm313, %v431, 0
      %438 = vmatprep.subr.bf16.mxu0 0
      %439 = vmatpush1.bf16.msra.mxu0 0
      %440 = vmatprep.subr.bf16.mxu0 0
      %441 = vmatpush1.bf16.msra.mxu0 0
      %442 = vmatprep.subr.bf16.mxu0 0
      %443 = vmatpush1.bf16.msra.mxu0 0
      %444 = vmatprep.subr.bf16.mxu0 0
      %445 = vmatpush1.bf16.msra.mxu0 0
      %446 = vmatprep.subr.bf16.mxu0 0
      %447 = vmatpush1.bf16.msra.mxu0 0
      %448 = vmatprep.subr.bf16.mxu0 0
      %449 = vmatpush1.bf16.msra.mxu0 0
      %450 = vmatprep.subr.bf16.mxu0 0
      %451 = vmatpush1.bf16.msra.mxu0 0
      %452 = vmatprep.subr.bf16.mxu0 0
      %453 = vmatpush1.bf16.msra.mxu0 %v436
      %454 = vmatprep.subr.bf16.mxu0 0
      %455 = vmatpush2.bf16.msra.mxu0 0
      %456 = vmatprep.subr.bf16.mxu0 0
      %457 = vmatpush2.bf16.msra.mxu0 0
      %458 = vmatprep.subr.bf16.mxu0 0
      %459 = vmatpush2.bf16.msra.mxu0 0
      %460 = vmatprep.subr.bf16.mxu0 0
      %461 = vmatpush2.bf16.msra.mxu0 0
      %462 = vmatprep.subr.bf16.mxu0 0
      %463 = vmatpush2.bf16.msra.mxu0 0
      %464 = vmatprep.subr.bf16.mxu0 0
      %465 = vmatpush2.bf16.msra.mxu0 0
      %466 = vmatprep.subr.bf16.mxu0 0
      %467 = vmatpush2.bf16.msra.mxu0 0
      %468 = vmatprep.subr.bf16.mxu0 0
      %469 = vmatpush2.bf16.msra.mxu0 0
      %470 = vmatprep.mubr.bf16.mxu0 0
      %471 = vmatmul.mubr.bf16.gmra.mxu0 %v433
      %v472 = vpop.f32.mrf.mxu0
      %v473 = vadd.f32 0.0, %v472
      %v474 = vpop.f32.mrf.mxu0
      %v475 = vpop.f32.mrf.mxu0
      %v476 = vpop.f32.mrf.mxu0
      %477 = vdwg.mxu0
      %478 = vrot.lane.b32.xlu0 %v359, 112
      %v479 = vpop.permute.xlu0 %478
      %480 = vrot.lane.b32.xlu0 %v364, 112
      %v481 = vpop.permute.xlu0 %480
      %v483 = vsel %vm249, %v479, 0
      %v486 = vsel %vm249, %v481, 0
      %488 = vmatprep.subr.bf16.mxu0 0
      %489 = vmatpush1.bf16.xpose.msra.mxu0 0
      %490 = vmatprep.subr.bf16.mxu0 0
      %491 = vmatpush1.bf16.xpose.msra.mxu0 0
      %492 = vmatprep.subr.bf16.mxu0 0
      %493 = vmatpush1.bf16.xpose.msra.mxu0 0
      %494 = vmatprep.subr.bf16.mxu0 0
      %495 = vmatpush1.bf16.xpose.msra.mxu0 0
      %496 = vmatprep.subr.bf16.mxu0 0
      %497 = vmatpush1.bf16.xpose.msra.mxu0 0
      %498 = vmatprep.subr.bf16.mxu0 0
      %499 = vmatpush1.bf16.xpose.msra.mxu0 0
      %500 = vmatprep.subr.bf16.mxu0 0
      %501 = vmatpush1.bf16.xpose.msra.mxu0 0
      %502 = vmatprep.subr.bf16.mxu0 0
      %503 = vmatpush1.bf16.xpose.msra.mxu0 %v486
      %504 = vmatprep.subr.bf16.mxu0 0
      %505 = vmatpush2.bf16.xpose.msra.mxu0 0
      %506 = vmatprep.subr.bf16.mxu0 0
      %507 = vmatpush2.bf16.xpose.msra.mxu0 0
      %508 = vmatprep.subr.bf16.mxu0 0
      %509 = vmatpush2.bf16.xpose.msra.mxu0 0
      %510 = vmatprep.subr.bf16.mxu0 0
      %511 = vmatpush2.bf16.xpose.msra.mxu0 0
      %512 = vmatprep.subr.bf16.mxu0 0
      %513 = vmatpush2.bf16.xpose.msra.mxu0 0
      %514 = vmatprep.subr.bf16.mxu0 0
      %515 = vmatpush2.bf16.xpose.msra.mxu0 0
      %516 = vmatprep.subr.bf16.mxu0 0
      %517 = vmatpush2.bf16.xpose.msra.mxu0 0
      %518 = vmatprep.subr.bf16.mxu0 0
      %519 = vmatpush2.bf16.xpose.msra.mxu0 0
      %520 = vmatprep.mubr.bf16.mxu0 0
      %521 = vmatmul.mubr.bf16.gmra.mxu0 %v483
      %v522 = vpop.f32.mrf.mxu0
      %v523 = vadd.f32 0.0, %v522
      %v524 = vpop.f32.mrf.mxu0
      %v525 = vpop.f32.mrf.mxu0
      %v526 = vpop.f32.mrf.mxu0
      %527 = vdwg.mxu0
      %v528 = vmul.f32 %v523, 0.35355338
      %v529 = vadd.f32 %v528, %v245
      %v530 = vsel %vm249, %v529, -inf
      %531 = vmax.xlane.f32.xlu0 %v530
      %v532 = vpop.xlane.xlu0 %531
      %v533 = vsub.f32 %v529, %v532
      %v534 = vmul.f32 %v533, 1.442695
      %v535 = vpow.pop %v534
      %v536 = vsel %vm249, %v535, 0.0
      %537 = vadd.xlane.f32.xlu0 %v536
      %v538 = vpop.xlane.xlu0 %537
      %v539 = vrcp.pop %v538
      %v540 = vmul.f32 %v535, %v539
      %v541 = vpack.c.bf16 %v540, %v540
      %542 = vrot.lane.b32.xlu0 %v429, 112
      %v543 = vpop.permute.xlu0 %542
      %v545 = vsel %vm249, %v541, 0
      %v548 = vsel %vm313, %v543, 0
      %550 = vmatprep.subr.bf16.mxu0 0
      %551 = vmatpush1.bf16.msra.mxu0 0
      %552 = vmatprep.subr.bf16.mxu0 0
      %553 = vmatpush1.bf16.msra.mxu0 0
      %554 = vmatprep.subr.bf16.mxu0 0
      %555 = vmatpush1.bf16.msra.mxu0 0
      %556 = vmatprep.subr.bf16.mxu0 0
      %557 = vmatpush1.bf16.msra.mxu0 0
      %558 = vmatprep.subr.bf16.mxu0 0
      %559 = vmatpush1.bf16.msra.mxu0 0
      %560 = vmatprep.subr.bf16.mxu0 0
      %561 = vmatpush1.bf16.msra.mxu0 0
      %562 = vmatprep.subr.bf16.mxu0 0
      %563 = vmatpush1.bf16.msra.mxu0 0
      %564 = vmatprep.subr.bf16.mxu0 0
      %565 = vmatpush1.bf16.msra.mxu0 %v548
      %566 = vmatprep.subr.bf16.mxu0 0
      %567 = vmatpush2.bf16.msra.mxu0 0
      %568 = vmatprep.subr.bf16.mxu0 0
      %569 = vmatpush2.bf16.msra.mxu0 0
      %570 = vmatprep.subr.bf16.mxu0 0
      %571 = vmatpush2.bf16.msra.mxu0 0
      %572 = vmatprep.subr.bf16.mxu0 0
      %573 = vmatpush2.bf16.msra.mxu0 0
      %574 = vmatprep.subr.bf16.mxu0 0
      %575 = vmatpush2.bf16.msra.mxu0 0
      %576 = vmatprep.subr.bf16.mxu0 0
      %577 = vmatpush2.bf16.msra.mxu0 0
      %578 = vmatprep.subr.bf16.mxu0 0
      %579 = vmatpush2.bf16.msra.mxu0 0
      %580 = vmatprep.subr.bf16.mxu0 0
      %581 = vmatpush2.bf16.msra.mxu0 0
      %582 = vmatprep.mubr.bf16.mxu0 0
      %583 = vmatmul.mubr.bf16.gmra.mxu0 %v545
      %v584 = vpop.f32.mrf.mxu0
      %v585 = vadd.f32 0.0, %v584
      %v586 = vpop.f32.mrf.mxu0
      %v587 = vpop.f32.mrf.mxu0
      %v588 = vpop.f32.mrf.mxu0
      %589 = vdwg.mxu0
      %590 = vrot.lane.b32.xlu0 %v359, 104
      %v591 = vpop.permute.xlu0 %590
      %592 = vrot.lane.b32.xlu0 %v364, 104
      %v593 = vpop.permute.xlu0 %592
      %v595 = vsel %vm249, %v591, 0
      %v598 = vsel %vm249, %v593, 0
      %600 = vmatprep.subr.bf16.mxu0 0
      %601 = vmatpush1.bf16.xpose.msra.mxu0 0
      %602 = vmatprep.subr.bf16.mxu0 0
      %603 = vmatpush1.bf16.xpose.msra.mxu0 0
      %604 = vmatprep.subr.bf16.mxu0 0
      %605 = vmatpush1.bf16.xpose.msra.mxu0 0
      %606 = vmatprep.subr.bf16.mxu0 0
      %607 = vmatpush1.bf16.xpose.msra.mxu0 0
      %608 = vmatprep.subr.bf16.mxu0 0
      %609 = vmatpush1.bf16.xpose.msra.mxu0 0
      %610 = vmatprep.subr.bf16.mxu0 0
      %611 = vmatpush1.bf16.xpose.msra.mxu0 0
      %612 = vmatprep.subr.bf16.mxu0 0
      %613 = vmatpush1.bf16.xpose.msra.mxu0 0
      %614 = vmatprep.subr.bf16.mxu0 0
      %615 = vmatpush1.bf16.xpose.msra.mxu0 %v598
      %616 = vmatprep.subr.bf16.mxu0 0
      %617 = vmatpush2.bf16.xpose.msra.mxu0 0
      %618 = vmatprep.subr.bf16.mxu0 0
      %619 = vmatpush2.bf16.xpose.msra.mxu0 0
      %620 = vmatprep.subr.bf16.mxu0 0
      %621 = vmatpush2.bf16.xpose.msra.mxu0 0
      %622 = vmatprep.subr.bf16.mxu0 0
      %623 = vmatpush2.bf16.xpose.msra.mxu0 0
      %624 = vmatprep.subr.bf16.mxu0 0
      %625 = vmatpush2.bf16.xpose.msra.mxu0 0
      %626 = vmatprep.subr.bf16.mxu0 0
      %627 = vmatpush2.bf16.xpose.msra.mxu0 0
      %628 = vmatprep.subr.bf16.mxu0 0
      %629 = vmatpush2.bf16.xpose.msra.mxu0 0
      %630 = vmatprep.subr.bf16.mxu0 0
      %631 = vmatpush2.bf16.xpose.msra.mxu0 0
      %632 = vmatprep.mubr.bf16.mxu0 0
      %633 = vmatmul.mubr.bf16.gmra.mxu0 %v595
      %v634 = vpop.f32.mrf.mxu0
      %v635 = vadd.f32 0.0, %v634
      %v636 = vpop.f32.mrf.mxu0
      %v637 = vpop.f32.mrf.mxu0
      %v638 = vpop.f32.mrf.mxu0
      %639 = vdwg.mxu0
      %v640 = vmul.f32 %v635, 0.35355338
      %v641 = vadd.f32 %v640, %v245
      %v642 = vsel %vm249, %v641, -inf
      %643 = vmax.xlane.f32.xlu0 %v642
      %v644 = vpop.xlane.xlu0 %643
      %v645 = vsub.f32 %v641, %v644
      %v646 = vmul.f32 %v645, 1.442695
      %v647 = vpow.pop %v646
      %v648 = vsel %vm249, %v647, 0.0
      %649 = vadd.xlane.f32.xlu0 %v648
      %v650 = vpop.xlane.xlu0 %649
      %v651 = vrcp.pop %v650
      %v652 = vmul.f32 %v647, %v651
      %v653 = vpack.c.bf16 %v652, %v652
      %654 = vrot.lane.b32.xlu0 %v429, 104
      %v655 = vpop.permute.xlu0 %654
      %v657 = vsel %vm249, %v653, 0
      %v660 = vsel %vm313, %v655, 0
      %662 = vmatprep.subr.bf16.mxu0 0
      %663 = vmatpush1.bf16.msra.mxu0 0
      %664 = vmatprep.subr.bf16.mxu0 0
      %665 = vmatpush1.bf16.msra.mxu0 0
      %666 = vmatprep.subr.bf16.mxu0 0
      %667 = vmatpush1.bf16.msra.mxu0 0
      %668 = vmatprep.subr.bf16.mxu0 0
      %669 = vmatpush1.bf16.msra.mxu0 0
      %670 = vmatprep.subr.bf16.mxu0 0
      %671 = vmatpush1.bf16.msra.mxu0 0
      %672 = vmatprep.subr.bf16.mxu0 0
      %673 = vmatpush1.bf16.msra.mxu0 0
      %674 = vmatprep.subr.bf16.mxu0 0
      %675 = vmatpush1.bf16.msra.mxu0 0
      %676 = vmatprep.subr.bf16.mxu0 0
      %677 = vmatpush1.bf16.msra.mxu0 %v660
      %678 = vmatprep.subr.bf16.mxu0 0
      %679 = vmatpush2.bf16.msra.mxu0 0
      %680 = vmatprep.subr.bf16.mxu0 0
      %681 = vmatpush2.bf16.msra.mxu0 0
      %682 = vmatprep.subr.bf16.mxu0 0
      %683 = vmatpush2.bf16.msra.mxu0 0
      %684 = vmatprep.subr.bf16.mxu0 0
      %685 = vmatpush2.bf16.msra.mxu0 0
      %686 = vmatprep.subr.bf16.mxu0 0
      %687 = vmatpush2.bf16.msra.mxu0 0
      %688 = vmatprep.subr.bf16.mxu0 0
      %689 = vmatpush2.bf16.msra.mxu0 0
      %690 = vmatprep.subr.bf16.mxu0 0
      %691 = vmatpush2.bf16.msra.mxu0 0
      %692 = vmatprep.subr.bf16.mxu0 0
      %693 = vmatpush2.bf16.msra.mxu0 0
      %694 = vmatprep.mubr.bf16.mxu0 0
      %695 = vmatmul.mubr.bf16.gmra.mxu0 %v657
      %v696 = vpop.f32.mrf.mxu0
      %v697 = vadd.f32 0.0, %v696
      %v698 = vpop.f32.mrf.mxu0
      %v699 = vpop.f32.mrf.mxu0
      %v700 = vpop.f32.mrf.mxu0
      %701 = vdwg.mxu0
      %703 = vrot.lane.b32.xlu0 %v473, 8
      %v704 = vpop.permute.xlu0 %703
      %707 = vrot.lane.b32.xlu0 %v585, 16
      %v708 = vpop.permute.xlu0 %707
      %711 = vrot.lane.b32.xlu0 %v697, 24
      %v712 = vpop.permute.xlu0 %711
      %v714 = vsel %vm249, %v352, %v704
      %vm715 = vcmask 130048
      %v716 = vsel %vm715, %v714, %v708
      %vm717 = vcmask 195584
      %v718 = vsel %vm717, %v716, %v712
      %v719 = vpack.c.bf16 %v718, %v718
      %vm720 = vcmask 257024
      %721 = vst.msk [vmem:[%s243] sm:$0xf] %vm720, %v719
      %p722 = scmp.lt.s32.totalorder %s15, 1
      %s723 = scalar_select %p722, %s15, 1
      %s724 = smul.addr %s723, 4
      %s725 = scalar_lea.vmem %s4, %s724
      // Predicated region
      $region37: #{decoder.20} parent=35 // pred_check
        %p726 = pneg %p137
      $region38: #{decoder.20} parent=35 // pred_check_branch
        %728 = sbr.rel (%p726) target = $region40
      $region39: #{decoder.20} parent=35 // pred_region
        _
      $region40: #{decoder.20} parent=35 // pred_fallthru
        _
    $region36: #{decoder.20} parent=5 // pred_fallthru
      _
    %p729 = scmp.le.s32.totalorder 2, %s10
    // Predicated region
    $region41: #{decoder.20} parent=5 // pred_check
      %p730 = pneg %p729
    $region42: #{decoder.20} parent=5 // pred_check_branch
      %732 = sbr.rel (%p730) target = $region44
    $region43: #{decoder.20} parent=5 // pred_region
      %s733 = ssub.s32 %s10, 2
      // Predicated region
      $region45: #{decoder.20} parent=43 // pred_check
        %p734 = pneg %p143
      $region46: #{decoder.20} parent=43 // pred_check_branch
        %736 = sbr.rel (%p734) target = $region48
      $region47: #{decoder.20} parent=43 // pred_region
        %p737 = scmp.lt.s32.totalorder %s16, 1
        %s738 = scalar_select %p737, %s16, 1
        %s739 = smul.addr %s738, 4
        %s740 = scalar_lea.vmem %s4, %s739
      $region48: #{decoder.20} parent=43 // pred_fallthru
        _
    $region44: #{decoder.20} parent=5 // pred_fallthru
      _
  $region6: #{decoder.20} parent=0 // loop_footer
    %s14 = sadd.s32 1, %s10
  $region7: #{decoder.20} parent=0 // loop_footer_branch
    %9 = sbr.rel target = $region3
  $region8: #{decoder.20} parent=0 // loop_exit
    _

// kernel: decoder.22
$region0: #{decoder.22}
  #allocation0 [shape = 'u32[]', space=smem, size = 0x4, offset = 0x4, fixed_abs, tag = 'smem constant byte address 0x4 - core index']
  #allocation1 [shape = 'u32[144,128]{1,0:T(1,128)}', space=vmem, size = 0x12000, scoped, tag = 'internal scratch']
  #allocation2 [shape = 'f32[16,32]{1,0:T(8,128)}', space=vmem, size = 0x2000, scoped, tag = 'scratch operand']
  %s0 = inlined_call_operand.vmem [shape: bf16[16,32], index: 0, kind: input, shape index: {}]
  %s1 = inlined_call_operand.vmem [shape: bf16[32,32], index: 1, kind: input, shape index: {}]
  %s2 = inlined_call_operand.vmem [shape: f32[1,32], index: 2, kind: input, shape index: {}]
  %s3 = inlined_call_operand.vmem [shape: bf16[16,32], index: 3, kind: output, shape index: {}]
  %s4 = sld [smem:[#allocation0]]
  $region30: #{decoder.22} parent=0
    _
  %s6 = ssub.s32 1, %s4
  %s7 = scalar_select 0, %s6, %s4
  // Predicated region
  $region2: #{decoder.22} parent=0 // pred_check
    _
  $region3: #{decoder.22} parent=0 // pred_check_branch
    %9 = sbr.rel (0) target = $region5
  $region4: #{decoder.22} parent=0 // pred_region
    _
  $region5: #{decoder.22} parent=0 // pred_fallthru
    _
  // Predicated region
  $region6: #{decoder.22} parent=0 // pred_check
    _
  $region7: #{decoder.22} parent=0 // pred_check_branch
    %11 = sbr.rel (0) target = $region9
  $region8: #{decoder.22} parent=0 // pred_region
    _
  $region9: #{decoder.22} parent=0 // pred_fallthru
    _
  // Predicated region
  $region10: #{decoder.22} parent=0 // pred_check
    _
  $region11: #{decoder.22} parent=0 // pred_check_branch
    %13 = sbr.rel (0) target = $region13
  $region12: #{decoder.22} parent=0 // pred_region
    _
  $region13: #{decoder.22} parent=0 // pred_fallthru
    _
  %p15 = scmp.eq.s32.totalorder 0, 0
  // Predicated region
  $region14: #{decoder.22} parent=0 // pred_check
    %p16 = pneg %p15
  $region15: #{decoder.22} parent=0 // pred_check_branch
    %18 = sbr.rel (%p16) target = $region17
  $region16: #{decoder.22} parent=0 // pred_region
    %vm19 = vcmask 261120
    %20 = vst.msk [vmem:[#allocation2] sm:$0xff] %vm19, 0.0
    %21 = vst.msk [vmem:[#allocation2 + $0x8] sm:$0xff] %vm19, 0.0
  $region17: #{decoder.22} parent=0 // pred_fallthru
    _
  %v22 = vld [vmem:[#allocation2] sm:$0xff]
  %v23 = vld [vmem:[#allocation2 + $0x8] sm:$0xff]
  %v24 = vld [vmem:[%s0] sm:$0xf]
  %v25 = vld [vmem:[%s0 + $0x4] sm:$0xf]
  %v26 = vld [vmem:[%s1] sm:$0xf]
  %v27 = vld [vmem:[%s1 + $0x4] sm:$0xf]
  %v28 = vld [vmem:[%s1 + $0x8] sm:$0xf]
  %v29 = vld [vmem:[%s1 + $0xc] sm:$0xf]
  %v32 = vunpack.c.l.b16 %v24
  %v33 = vunpack.c.l.b16 %v25
  %v34 = vpack.c.b16 %v33, %v32
  %v39 = vunpack.c.l.b16 %v26
  %v40 = vunpack.c.l.b16 %v27
  %v41 = vunpack.c.l.b16 %v28
  %v42 = vunpack.c.l.b16 %v29
  %v43 = vpack.c.b16 %v40, %v39
  %v44 = vpack.c.b16 %v42, %v41
  %vm47 = vcmask 261120
  %v49 = vsel %vm47, %v34, 0
  %51 = vmatprep.subr.bf16.mxu0 0
  %52 = vmatpush1.bf16.msra.mxu0 0
  %53 = vmatprep.subr.bf16.mxu0 0
  %54 = vmatpush1.bf16.msra.mxu0 0
  %55 = vmatprep.subr.bf16.mxu0 0
  %56 = vmatpush1.bf16.msra.mxu0 0
  %57 = vmatprep.subr.bf16.mxu0 0
  %58 = vmatpush1.bf16.msra.mxu0 0
  %59 = vmatprep.subr.bf16.mxu0 0
  %60 = vmatpush1.bf16.msra.mxu0 0
  %61 = vmatprep.subr.bf16.mxu0 0
  %62 = vmatpush1.bf16.msra.mxu0 0
  %63 = vmatprep.subr.bf16.mxu0 0
  %64 = vmatpush1.bf16.msra.mxu0 %v44
  %65 = vmatprep.subr.bf16.mxu0 0
  %66 = vmatpush1.bf16.msra.mxu0 %v43
  %67 = vmatprep.subr.bf16.mxu0 0
  %68 = vmatpush2.bf16.msra.mxu0 0
  %69 = vmatprep.subr.bf16.mxu0 0
  %70 = vmatpush2.bf16.msra.mxu0 0
  %71 = vmatprep.subr.bf16.mxu0 0
  %72 = vmatpush2.bf16.msra.mxu0 0
  %73 = vmatprep.subr.bf16.mxu0 0
  %74 = vmatpush2.bf16.msra.mxu0 0
  %75 = vmatprep.subr.bf16.mxu0 0
  %76 = vmatpush2.bf16.msra.mxu0 0
  %77 = vmatprep.subr.bf16.mxu0 0
  %78 = vmatpush2.bf16.msra.mxu0 0
  %79 = vmatprep.subr.bf16.mxu0 0
  %80 = vmatpush2.bf16.msra.mxu0 0
  %81 = vmatprep.subr.bf16.mxu0 0
  %82 = vmatpush2.bf16.msra.mxu0 0
  %83 = vmatprep.mubr.bf16.mxu0 0
  %84 = vmatmul.mubr.bf16.gmra.mxu0 %v49
  %v85 = vpop.f32.mrf.mxu0
  %v86 = vadd.f32 0.0, %v85
  %v87 = vpop.f32.mrf.mxu0
  %v88 = vpop.f32.mrf.mxu0
  %v89 = vadd.f32 0.0, %v88
  %v90 = vpop.f32.mrf.mxu0
  %91 = vdwg.mxu0
  %v92 = vadd.f32 %v22, %v86
  %v93 = vadd.f32 %v23, %v89
  %94 = vst.msk [vmem:[#allocation2] sm:$0xff] %vm47, %v92
  %95 = vst.msk [vmem:[#allocation2 + $0x8] sm:$0xff] %vm47, %v93
  // Predicated region
  $region18: #{decoder.22} parent=0 // pred_check
    %p96 = pneg %p15
  $region19: #{decoder.22} parent=0 // pred_check_branch
    %98 = sbr.rel (%p96) target = $region21
  $region20: #{decoder.22} parent=0 // pred_region
    %v99 = vld [vmem:[#allocation2] sm:$0xff]
    %v100 = vld [vmem:[#allocation2 + $0x8] sm:$0xff]
    %v101 = vld [vmem:[%s2] sm:$0x1]
    %v103 = vlaneseq
    %v104 = vshrl.u32 %v103, 7
    %v105 = vsub.s32 0, %v104
    %v106 = vrot.slane %v101, %v105
    %v108 = vadd.f32 %v99, %v106
    %v109 = vadd.f32 %v100, %v106
    %v110 = vpack.c.bf16 %v109, %v108
    %v112 = vunpack.c.l.b16 %v110
    %v113 = vunpack.c.h.b16 %v110
    %v114 = vpack.c.b16 %v112, %v112
    %v115 = vpack.c.b16 %v113, %v113
    %vm118 = vcmask 257024
    %119 = vst.msk [vmem:[%s3] sm:$0xf] %vm118, %v114
    %120 = vst.msk [vmem:[%s3 + $0x4] sm:$0xf] %vm118, %v115
  $region21: #{decoder.22} parent=0 // pred_fallthru
    _
  // Predicated region
  $region22: #{decoder.22} parent=0 // pred_check
    _
  $region23: #{decoder.22} parent=0 // pred_check_branch
    %122 = sbr.rel (0) target = $region25
  $region24: #{decoder.22} parent=0 // pred_region
    _
  $region25: #{decoder.22} parent=0 // pred_fallthru
    _
  // Predicated region
  $region26: #{decoder.22} parent=0 // pred_check
    _
  $region27: #{decoder.22} parent=0 // pred_check_branch
    %124 = sbr.rel (0) target = $region29
  $region28: #{decoder.22} parent=0 // pred_region
    _
  $region29: #{decoder.22} parent=0 // pred_fallthru
    _

// kernel: decoder.21
$region0: #{decoder.21}
  #allocation0 [shape = 'u32[]', space=smem, size = 0x4, offset = 0x4, fixed_abs, tag = 'smem constant byte address 0x4 - core index']
  #allocation1 [shape = 'u32[144,128]{1,0:T(1,128)}', space=vmem, size = 0x12000, scoped, tag = 'internal scratch']
  #allocation2 [shape = 'f32[16,32]{1,0:T(8,128)}', space=vmem, size = 0x2000, scoped, tag = 'scratch operand']
  %s0 = inlined_call_operand.vmem [shape: bf16[16,32], index: 0, kind: input, shape index: {}]
  %s1 = inlined_call_operand.vmem [shape: bf16[32,32], index: 1, kind: input, shape index: {}]
  %s2 = inlined_call_operand.vmem [shape: f32[1,32], index: 2, kind: input, shape index: {}]
  %s3 = inlined_call_operand.vmem [shape: f32[16,32], index: 3, kind: input, shape index: {}]
  %s4 = inlined_call_operand.vmem [shape: f32[1,32], index: 4, kind: input, shape index: {}]
  %s5 = inlined_call_operand.vmem [shape: f32[1,32], index: 5, kind: input, shape index: {}]
  %s6 = inlined_call_operand.vmem [shape: f32[16,32], index: 6, kind: output, shape index: {}]
  %s7 = sld [smem:[#allocation0]]
  $region42: #{decoder.21} parent=0
    _
  %s9 = ssub.s32 1, %s7
  %s10 = scalar_select 0, %s9, %s7
  // Predicated region
  $region2: #{decoder.21} parent=0 // pred_check
    _
  $region3: #{decoder.21} parent=0 // pred_check_branch
    %12 = sbr.rel (0) target = $region5
  $region4: #{decoder.21} parent=0 // pred_region
    _
  $region5: #{decoder.21} parent=0 // pred_fallthru
    _
  // Predicated region
  $region6: #{decoder.21} parent=0 // pred_check
    _
  $region7: #{decoder.21} parent=0 // pred_check_branch
    %14 = sbr.rel (0) target = $region9
  $region8: #{decoder.21} parent=0 // pred_region
    _
  $region9: #{decoder.21} parent=0 // pred_fallthru
    _
  // Predicated region
  $region10: #{decoder.21} parent=0 // pred_check
    _
  $region11: #{decoder.21} parent=0 // pred_check_branch
    %16 = sbr.rel (0) target = $region13
  $region12: #{decoder.21} parent=0 // pred_region
    _
  $region13: #{decoder.21} parent=0 // pred_fallthru
    _
  // Predicated region
  $region14: #{decoder.21} parent=0 // pred_check
    _
  $region15: #{decoder.21} parent=0 // pred_check_branch
    %18 = sbr.rel (0) target = $region17
  $region16: #{decoder.21} parent=0 // pred_region
    _
  $region17: #{decoder.21} parent=0 // pred_fallthru
    _
  // Predicated region
  $region18: #{decoder.21} parent=0 // pred_check
    _
  $region19: #{decoder.21} parent=0 // pred_check_branch
    %20 = sbr.rel (0) target = $region21
  $region20: #{decoder.21} parent=0 // pred_region
    _
  $region21: #{decoder.21} parent=0 // pred_fallthru
    _
  // Predicated region
  $region22: #{decoder.21} parent=0 // pred_check
    _
  $region23: #{decoder.21} parent=0 // pred_check_branch
    %22 = sbr.rel (0) target = $region25
  $region24: #{decoder.21} parent=0 // pred_region
    _
  $region25: #{decoder.21} parent=0 // pred_fallthru
    _
  %p24 = scmp.eq.s32.totalorder 0, 0
  // Predicated region
  $region26: #{decoder.21} parent=0 // pred_check
    %p25 = pneg %p24
  $region27: #{decoder.21} parent=0 // pred_check_branch
    %27 = sbr.rel (%p25) target = $region29
  $region28: #{decoder.21} parent=0 // pred_region
    %vm28 = vcmask 261120
    %29 = vst.msk [vmem:[#allocation2] sm:$0xff] %vm28, 0.0
    %30 = vst.msk [vmem:[#allocation2 + $0x8] sm:$0xff] %vm28, 0.0
  $region29: #{decoder.21} parent=0 // pred_fallthru
    _
  %v31 = vld [vmem:[#allocation2] sm:$0xff]
  %v32 = vld [vmem:[#allocation2 + $0x8] sm:$0xff]
  %v33 = vld [vmem:[%s0] sm:$0xf]
  %v34 = vld [vmem:[%s0 + $0x4] sm:$0xf]
  %v35 = vld [vmem:[%s1] sm:$0xf]
  %v36 = vld [vmem:[%s1 + $0x4] sm:$0xf]
  %v37 = vld [vmem:[%s1 + $0x8] sm:$0xf]
  %v38 = vld [vmem:[%s1 + $0xc] sm:$0xf]
  %v41 = vunpack.c.l.b16 %v33
  %v42 = vunpack.c.l.b16 %v34
  %v43 = vpack.c.b16 %v42, %v41
  %v48 = vunpack.c.l.b16 %v35
  %v49 = vunpack.c.l.b16 %v36
  %v50 = vunpack.c.l.b16 %v37
  %v51 = vunpack.c.l.b16 %v38
  %v52 = vpack.c.b16 %v49, %v48
  %v53 = vpack.c.b16 %v51, %v50
  %vm56 = vcmask 261120
  %v58 = vsel %vm56, %v43, 0
  %60 = vmatprep.subr.bf16.mxu0 0
  %61 = vmatpush1.bf16.msra.mxu0 0
  %62 = vmatprep.subr.bf16.mxu0 0
  %63 = vmatpush1.bf16.msra.mxu0 0
  %64 = vmatprep.subr.bf16.mxu0 0
  %65 = vmatpush1.bf16.msra.mxu0 0
  %66 = vmatprep.subr.bf16.mxu0 0
  %67 = vmatpush1.bf16.msra.mxu0 0
  %68 = vmatprep.subr.bf16.mxu0 0
  %69 = vmatpush1.bf16.msra.mxu0 0
  %70 = vmatprep.subr.bf16.mxu0 0
  %71 = vmatpush1.bf16.msra.mxu0 0
  %72 = vmatprep.subr.bf16.mxu0 0
  %73 = vmatpush1.bf16.msra.mxu0 %v53
  %74 = vmatprep.subr.bf16.mxu0 0
  %75 = vmatpush1.bf16.msra.mxu0 %v52
  %76 = vmatprep.subr.bf16.mxu0 0
  %77 = vmatpush2.bf16.msra.mxu0 0
  %78 = vmatprep.subr.bf16.mxu0 0
  %79 = vmatpush2.bf16.msra.mxu0 0
  %80 = vmatprep.subr.bf16.mxu0 0
  %81 = vmatpush2.bf16.msra.mxu0 0
  %82 = vmatprep.subr.bf16.mxu0 0
  %83 = vmatpush2.bf16.msra.mxu0 0
  %84 = vmatprep.subr.bf16.mxu0 0
  %85 = vmatpush2.bf16.msra.mxu0 0
  %86 = vmatprep.subr.bf16.mxu0 0
  %87 = vmatpush2.bf16.msra.mxu0 0
  %88 = vmatprep.subr.bf16.mxu0 0
  %89 = vmatpush2.bf16.msra.mxu0 0
  %90 = vmatprep.subr.bf16.mxu0 0
  %91 = vmatpush2.bf16.msra.mxu0 0
  %92 = vmatprep.mubr.bf16.mxu0 0
  %93 = vmatmul.mubr.bf16.gmra.mxu0 %v58
  %v94 = vpop.f32.mrf.mxu0
  %v95 = vadd.f32 0.0, %v94
  %v96 = vpop.f32.mrf.mxu0
  %v97 = vpop.f32.mrf.mxu0
  %v98 = vadd.f32 0.0, %v97
  %v99 = vpop.f32.mrf.mxu0
  %100 = vdwg.mxu0
  %v101 = vadd.f32 %v31, %v95
  %v102 = vadd.f32 %v32, %v98
  %103 = vst.msk [vmem:[#allocation2] sm:$0xff] %vm56, %v101
  %104 = vst.msk [vmem:[#allocation2 + $0x8] sm:$0xff] %vm56, %v102
  // Predicated region
  $region30: #{decoder.21} parent=0 // pred_check
    %p105 = pneg %p24
  $region31: #{decoder.21} parent=0 // pred_check_branch
    %107 = sbr.rel (%p105) target = $region33
  $region32: #{decoder.21} parent=0 // pred_region
    %v108 = vld [vmem:[#allocation2] sm:$0xff]
    %v109 = vld [vmem:[#allocation2 + $0x8] sm:$0xff]
    %v110 = vld [vmem:[%s2] sm:$0x1]
    %v112 = vlaneseq
    %v113 = vshrl.u32 %v112, 7
    %v114 = vsub.s32 0, %v113
    %v115 = vrot.slane %v110, %v114
    %v117 = vadd.f32 %v108, %v115
    %v118 = vadd.f32 %v109, %v115
    %v119 = vld [vmem:[%s3] sm:$0xff]
    %v120 = vld [vmem:[%s3 + $0x8] sm:$0xff]
    %v121 = vadd.f32 %v117, %v119
    %v122 = vadd.f32 %v118, %v120
    %v123 = vsel %vm56, %v121, 0.0
    %124 = vadd.xlane.f32.xlu0 %v123
    %v125 = vpop.xlane.xlu0 %124
    %v126 = vsel %vm56, %v122, 0.0
    %127 = vadd.xlane.f32.xlu0 %v126
    %v128 = vpop.xlane.xlu0 %127
    %v129 = vrcp.pop 32.0
    %v130 = vmul.f32 %v125, %v129
    %v131 = vmul.f32 %v128, %v129
    %v132 = vsub.f32 %v121, %v130
    %v133 = vsub.f32 %v122, %v131
    %v134 = vmul.f32 %v132, %v132
    %v135 = vmul.f32 %v133, %v133
    %v136 = vsel %vm56, %v134, 0.0
    %137 = vadd.xlane.f32.xlu0 %v136
    %v138 = vpop.xlane.xlu0 %137
    %v139 = vsel %vm56, %v135, 0.0
    %140 = vadd.xlane.f32.xlu0 %v139
    %v141 = vpop.xlane.xlu0 %140
    %v142 = vmul.f32 %v138, 0.032258064
    %v143 = vmul.f32 %v141, 0.032258064
    %v144 = vrsqrt.pop %v142
    %v145 = vmul.f32 %v142, %v144
    %vm146 = vcmp.eq.f32.partialorder %v142, inf
    %v147 = vsel %vm146, %v142, %v145
    %vm148 = vcmp.eq.f32.partialorder %v142, 0.0
    %v149 = vand.u32 %v142, 2147483648
    %v150 = vsel %vm148, %v149, %v147
    %v151 = vrsqrt.pop %v143
    %v152 = vmul.f32 %v143, %v151
    %vm153 = vcmp.eq.f32.partialorder %v143, inf
    %v154 = vsel %vm153, %v143, %v152
    %vm155 = vcmp.eq.f32.partialorder %v143, 0.0
    %v156 = vand.u32 %v143, 2147483648
    %v157 = vsel %vm155, %v156, %v154
    %v158 = vld [vmem:[%s4] sm:$0x1]
    %v160 = vlaneseq
    %v161 = vshrl.u32 %v160, 7
    %v162 = vsub.s32 0, %v161
    %v163 = vrot.slane %v158, %v162
    %v165 = vmul.f32 %v163, %v132
    %v166 = vmul.f32 %v163, %v133
    %v167 = vadd.f32 %v150, 1e-06
    %v168 = vadd.f32 %v157, 1e-06
    %v169 = vrcp.pop %v167
    %v170 = vmul.f32 %v165, %v169
    %v171 = vrcp.pop %v168
    %v172 = vmul.f32 %v166, %v171
    %v173 = vld [vmem:[%s5] sm:$0x1]
    %v175 = vlaneseq
    %v176 = vshrl.u32 %v175, 7
    %v177 = vsub.s32 0, %v176
    %v178 = vrot.slane %v173, %v177
    %v180 = vadd.f32 %v170, %v178
    %v181 = vadd.f32 %v172, %v178
    %182 = vst.msk [vmem:[%s6] sm:$0xff] %vm56, %v180
    %183 = vst.msk [vmem:[%s6 + $0x8] sm:$0xff] %vm56, %v181
  $region33: #{decoder.21} parent=0 // pred_fallthru
    _
  // Predicated region
  $region34: #{decoder.21} parent=0 // pred_check
    _
  $region35: #{decoder.21} parent=0 // pred_check_branch
    %185 = sbr.rel (0) target = $region37
  $region36: #{decoder.21} parent=0 // pred_region
    _
  $region37: #{decoder.21} parent=0 // pred_fallthru
    _
  // Predicated region
  $region38: #{decoder.21} parent=0 // pred_check
    _
  $region39: #{decoder.21} parent=0 // pred_check_branch
    %187 = sbr.rel (0) target = $region41
  $region40: #{decoder.21} parent=0 // pred_region
    _
  $region41: #{decoder.21} parent=0 // pred_fallthru
    _

// kernel: decoder.26
$region0: #{decoder.26}
  #allocation0 [shape = 'u32[]', space=smem, size = 0x4, offset = 0x4, fixed_abs, tag = 'smem constant byte address 0x4 - core index']
  #allocation1 [shape = 'u32[144,128]{1,0:T(1,128)}', space=vmem, size = 0x12000, scoped, tag = 'internal scratch']
  #allocation2 [shape = 'f32[16,128]{1,0:T(8,128)}', space=vmem, size = 0x2000, scoped, tag = 'scratch operand']
  %s0 = inlined_call_operand.vmem [shape: bf16[16,32], index: 0, kind: input, shape index: {}]
  %s1 = inlined_call_operand.vmem [shape: bf16[32,128], index: 1, kind: input, shape index: {}]
  %s2 = inlined_call_operand.vmem [shape: f32[1,128], index: 2, kind: input, shape index: {}]
  %s3 = inlined_call_operand.vmem [shape: bf16[16,128], index: 3, kind: output, shape index: {}]
  %s4 = sld [smem:[#allocation0]]
  $region30: #{decoder.26} parent=0
    _
  %s6 = ssub.s32 1, %s4
  %s7 = scalar_select 0, %s6, %s4
  // Predicated region
  $region2: #{decoder.26} parent=0 // pred_check
    _
  $region3: #{decoder.26} parent=0 // pred_check_branch
    %9 = sbr.rel (0) target = $region5
  $region4: #{decoder.26} parent=0 // pred_region
    _
  $region5: #{decoder.26} parent=0 // pred_fallthru
    _
  // Predicated region
  $region6: #{decoder.26} parent=0 // pred_check
    _
  $region7: #{decoder.26} parent=0 // pred_check_branch
    %11 = sbr.rel (0) target = $region9
  $region8: #{decoder.26} parent=0 // pred_region
    _
  $region9: #{decoder.26} parent=0 // pred_fallthru
    _
  // Predicated region
  $region10: #{decoder.26} parent=0 // pred_check
    _
  $region11: #{decoder.26} parent=0 // pred_check_branch
    %13 = sbr.rel (0) target = $region13
  $region12: #{decoder.26} parent=0 // pred_region
    _
  $region13: #{decoder.26} parent=0 // pred_fallthru
    _
  %p15 = scmp.eq.s32.totalorder 0, 0
  // Predicated region
  $region14: #{decoder.26} parent=0 // pred_check
    %p16 = pneg %p15
  $region15: #{decoder.26} parent=0 // pred_check_branch
    %18 = sbr.rel (%p16) target = $region17
  $region16: #{decoder.26} parent=0 // pred_region
    %19 = vst [vmem:[#allocation2] sm:$0xff] 0.0
    %20 = vst [vmem:[#allocation2 + $0x8] sm:$0xff] 0.0
  $region17: #{decoder.26} parent=0 // pred_fallthru
    _
  %v21 = vld [vmem:[#allocation2] sm:$0xff]
  %v22 = vld [vmem:[#allocation2 + $0x8] sm:$0xff]
  %v23 = vld [vmem:[%s0] sm:$0xf]
  %v24 = vld [vmem:[%s0 + $0x4] sm:$0xf]
  %v25 = vld [vmem:[%s1] sm:$0xf]
  %v26 = vld [vmem:[%s1 + $0x4] sm:$0xf]
  %v27 = vld [vmem:[%s1 + $0x8] sm:$0xf]
  %v28 = vld [vmem:[%s1 + $0xc] sm:$0xf]
  %v31 = vunpack.c.l.b16 %v23
  %v32 = vunpack.c.l.b16 %v24
  %v33 = vpack.c.b16 %v32, %v31
  %v38 = vunpack.c.l.b16 %v25
  %v39 = vunpack.c.l.b16 %v26
  %v40 = vunpack.c.l.b16 %v27
  %v41 = vunpack.c.l.b16 %v28
  %v42 = vpack.c.b16 %v39, %v38
  %v43 = vpack.c.b16 %v41, %v40
  %vm46 = vcmask 261120
  %v48 = vsel %vm46, %v33, 0
  %50 = vmatprep.subr.bf16.mxu0 0
  %51 = vmatpush1.bf16.msra.mxu0 0
  %52 = vmatprep.subr.bf16.mxu0 0
  %53 = vmatpush1.bf16.msra.mxu0 0
  %54 = vmatprep.subr.bf16.mxu0 0
  %55 = vmatpush1.bf16.msra.mxu0 0
  %56 = vmatprep.subr.bf16.mxu0 0
  %57 = vmatpush1.bf16.msra.mxu0 0
  %58 = vmatprep.subr.bf16.mxu0 0
  %59 = vmatpush1.bf16.msra.mxu0 0
  %60 = vmatprep.subr.bf16.mxu0 0
  %61 = vmatpush1.bf16.msra.mxu0 0
  %62 = vmatprep.subr.bf16.mxu0 0
  %63 = vmatpush1.bf16.msra.mxu0 %v43
  %64 = vmatprep.subr.bf16.mxu0 0
  %65 = vmatpush1.bf16.msra.mxu0 %v42
  %66 = vmatprep.subr.bf16.mxu0 0
  %67 = vmatpush2.bf16.msra.mxu0 0
  %68 = vmatprep.subr.bf16.mxu0 0
  %69 = vmatpush2.bf16.msra.mxu0 0
  %70 = vmatprep.subr.bf16.mxu0 0
  %71 = vmatpush2.bf16.msra.mxu0 0
  %72 = vmatprep.subr.bf16.mxu0 0
  %73 = vmatpush2.bf16.msra.mxu0 0
  %74 = vmatprep.subr.bf16.mxu0 0
  %75 = vmatpush2.bf16.msra.mxu0 0
  %76 = vmatprep.subr.bf16.mxu0 0
  %77 = vmatpush2.bf16.msra.mxu0 0
  %78 = vmatprep.subr.bf16.mxu0 0
  %79 = vmatpush2.bf16.msra.mxu0 0
  %80 = vmatprep.subr.bf16.mxu0 0
  %81 = vmatpush2.bf16.msra.mxu0 0
  %82 = vmatprep.mubr.bf16.mxu0 0
  %83 = vmatmul.mubr.bf16.gmra.mxu0 %v48
  %v84 = vpop.f32.mrf.mxu0
  %v85 = vadd.f32 0.0, %v84
  %v86 = vpop.f32.mrf.mxu0
  %v87 = vpop.f32.mrf.mxu0
  %v88 = vadd.f32 0.0, %v87
  %v89 = vpop.f32.mrf.mxu0
  %90 = vdwg.mxu0
  %v91 = vadd.f32 %v21, %v85
  %v92 = vadd.f32 %v22, %v88
  %93 = vst [vmem:[#allocation2] sm:$0xff] %v91
  %94 = vst [vmem:[#allocation2 + $0x8] sm:$0xff] %v92
  // Predicated region
  $region18: #{decoder.26} parent=0 // pred_check
    %p95 = pneg %p15
  $region19: #{decoder.26} parent=0 // pred_check_branch
    %97 = sbr.rel (%p95) target = $region21
  $region20: #{decoder.26} parent=0 // pred_region
    %v98 = vld [vmem:[#allocation2] sm:$0xff]
    %v99 = vld [vmem:[#allocation2 + $0x8] sm:$0xff]
    %v100 = vld [vmem:[%s2] sm:$0x1]
    %v102 = vlaneseq
    %v103 = vshrl.u32 %v102, 7
    %v104 = vsub.s32 0, %v103
    %v105 = vrot.slane %v100, %v104
    %v107 = vadd.f32 %v98, %v105
    %v108 = vadd.f32 %v99, %v105
    %v109 = vmax.f32 %v107, 0.0
    %v110 = vmax.f32 %v108, 0.0
    %v111 = vpack.c.bf16 %v110, %v109
    %v113 = vunpack.c.l.b16 %v111
    %v114 = vunpack.c.h.b16 %v111
    %v115 = vpack.c.b16 %v113, %v113
    %v116 = vpack.c.b16 %v114, %v114
    %119 = vst [vmem:[%s3] sm:$0xf] %v115
    %120 = vst [vmem:[%s3 + $0x4] sm:$0xf] %v116
  $region21: #{decoder.26} parent=0 // pred_fallthru
    _
  // Predicated region
  $region22: #{decoder.26} parent=0 // pred_check
    _
  $region23: #{decoder.26} parent=0 // pred_check_branch
    %122 = sbr.rel (0) target = $region25
  $region24: #{decoder.26} parent=0 // pred_region
    _
  $region25: #{decoder.26} parent=0 // pred_fallthru
    _
  // Predicated region
  $region26: #{decoder.26} parent=0 // pred_check
    _
  $region27: #{decoder.26} parent=0 // pred_check_branch
    %124 = sbr.rel (0) target = $region29
  $region28: #{decoder.26} parent=0 // pred_region
    _
  $region29: #{decoder.26} parent=0 // pred_fallthru
    _

// kernel: decoder.37
$region0: #{decoder.37}
  #allocation0 [shape = 'u32[]', space=smem, size = 0x4, offset = 0x4, fixed_abs, tag = 'smem constant byte address 0x4 - core index']
  #allocation1 [shape = 'u32[144,128]{1,0:T(1,128)}', space=vmem, size = 0x12000, scoped, tag = 'internal scratch']
  %s0 = inlined_call_operand.vmem [shape: f32[16,32], index: 0, kind: input, shape index: {}]
  %s1 = inlined_call_operand.vmem [shape: f32[1,32], index: 1, kind: input, shape index: {}]
  %s2 = inlined_call_operand.vmem [shape: f32[1,32], index: 2, kind: input, shape index: {}]
  %s3 = inlined_call_operand.hbm [shape: f32[16,32], index: 3, kind: output, shape index: {}]
  %s4 = sld [smem:[#allocation0]]
  $region22: #{decoder.37} parent=0
    _
  %s6 = ssub.s32 1, %s4
  %s7 = scalar_select 0, %s6, %s4
  $region1: #{decoder.37} parent=0
    #allocation2 [shape = 'u8[8192]{0}', space=vmem, size = 0x2000, scoped, tag = 'output window, operand 0, single buffered']
    #allocation3 [shape = 's32[1]{0}', space=sflag, size = 0x4, scoped, tag = 'scoped memory for decoder.37']
    %8 = vsyncpa [#allocation3], 0
    // Predicated region
    $region2: #{decoder.37} parent=1 // pred_check
      _
    $region3: #{decoder.37} parent=1 // pred_check_branch
      %10 = sbr.rel (0) target = $region5
    $region4: #{decoder.37} parent=1 // pred_region
      _
    $region5: #{decoder.37} parent=1 // pred_fallthru
      _
    // Predicated region
    $region6: #{decoder.37} parent=1 // pred_check
      _
    $region7: #{decoder.37} parent=1 // pred_check_branch
      %12 = sbr.rel (0) target = $region9
    $region8: #{decoder.37} parent=1 // pred_region
      _
    $region9: #{decoder.37} parent=1 // pred_fallthru
      _
    // Predicated region
    $region10: #{decoder.37} parent=1 // pred_check
      _
    $region11: #{decoder.37} parent=1 // pred_check_branch
      %14 = sbr.rel (0) target = $region13
    $region12: #{decoder.37} parent=1 // pred_region
      _
    $region13: #{decoder.37} parent=1 // pred_fallthru
      _
    %v15 = vld [vmem:[%s0] sm:$0xff]
    %v16 = vld [vmem:[%s0 + $0x8] sm:$0xff]
    %vm17 = vcmask 261120
    %v18 = vsel %vm17, %v15, 0.0
    %19 = vadd.xlane.f32.xlu0 %v18
    %v20 = vpop.xlane.xlu0 %19
    %v21 = vsel %vm17, %v16, 0.0
    %22 = vadd.xlane.f32.xlu0 %v21
    %v23 = vpop.xlane.xlu0 %22
    %v24 = vrcp.pop 32.0
    %v25 = vmul.f32 %v20, %v24
    %v26 = vmul.f32 %v23, %v24
    %v27 = vsub.f32 %v15, %v25
    %v28 = vsub.f32 %v16, %v26
    %v29 = vmul.f32 %v27, %v27
    %v30 = vmul.f32 %v28, %v28
    %v31 = vsel %vm17, %v29, 0.0
    %32 = vadd.xlane.f32.xlu0 %v31
    %v33 = vpop.xlane.xlu0 %32
    %v34 = vsel %vm17, %v30, 0.0
    %35 = vadd.xlane.f32.xlu0 %v34
    %v36 = vpop.xlane.xlu0 %35
    %v37 = vmul.f32 %v33, 0.032258064
    %v38 = vmul.f32 %v36, 0.032258064
    %v39 = vrsqrt.pop %v37
    %v40 = vmul.f32 %v37, %v39
    %vm41 = vcmp.eq.f32.partialorder %v37, inf
    %v42 = vsel %vm41, %v37, %v40
    %vm43 = vcmp.eq.f32.partialorder %v37, 0.0
    %v44 = vand.u32 %v37, 2147483648
    %v45 = vsel %vm43, %v44, %v42
    %v46 = vrsqrt.pop %v38
    %v47 = vmul.f32 %v38, %v46
    %vm48 = vcmp.eq.f32.partialorder %v38, inf
    %v49 = vsel %vm48, %v38, %v47
    %vm50 = vcmp.eq.f32.partialorder %v38, 0.0
    %v51 = vand.u32 %v38, 2147483648
    %v52 = vsel %vm50, %v51, %v49
    %v53 = vld [vmem:[%s1] sm:$0x1]
    %v55 = vlaneseq
    %v56 = vshrl.u32 %v55, 7
    %v57 = vsub.s32 0, %v56
    %v58 = vrot.slane %v53, %v57
    %v60 = vmul.f32 %v58, %v27
    %v61 = vmul.f32 %v58, %v28
    %v62 = vadd.f32 %v45, 1e-06
    %v63 = vadd.f32 %v52, 1e-06
    %v64 = vrcp.pop %v62
    %v65 = vmul.f32 %v60, %v64
    %v66 = vrcp.pop %v63
    %v67 = vmul.f32 %v61, %v66
    %v68 = vld [vmem:[%s2] sm:$0x1]
    %v70 = vlaneseq
    %v71 = vshrl.u32 %v70, 7
    %v72 = vsub.s32 0, %v71
    %v73 = vrot.slane %v68, %v72
    %v75 = vadd.f32 %v65, %v73
    %v76 = vadd.f32 %v67, %v73
    %77 = vst.msk [vmem:[#allocation2] sm:$0xff] %vm17, %v75
    %78 = vst.msk [vmem:[#allocation2 + $0x8] sm:$0xff] %vm17, %v76
    // Predicated region
    $region14: #{decoder.37} parent=1 // pred_check
      _
    $region15: #{decoder.37} parent=1 // pred_check_branch
      %80 = sbr.rel (0) target = $region17
    $region16: #{decoder.37} parent=1 // pred_region
      %s82 = ssub.s32 256, 256
      %83 = vsyncadd [#allocation3], %s82
      %s84 = sshll.u32 [#allocation2], 4
      %s85 = int_to_ptr.vmem [resolvable:$true] %s84
      %90 = dma.vmem_to_hbm [thread:$0]  %s85, 256, %s3, [#allocation3], 128, 128, 8
    $region17: #{decoder.37} parent=1 // pred_fallthru
      _
    // Predicated region
    $region18: #{decoder.37} parent=1 // pred_check
      _
    $region19: #{decoder.37} parent=1 // pred_check_branch
      %92 = sbr.rel (0) target = $region21
    $region20: #{decoder.37} parent=1 // pred_region
      %93 = dma.done [#allocation3], 256
    $region21: #{decoder.37} parent=1 // pred_fallthru
      _
    %94 = vsyncpa [#allocation3], 1

// kernel: decoder.23
$region0: #{decoder.23}
  #allocation0 [shape = 'u32[]', space=smem, size = 0x4, offset = 0x4, fixed_abs, tag = 'smem constant byte address 0x4 - core index']
  #allocation1 [shape = 'u32[144,128]{1,0:T(1,128)}', space=vmem, size = 0x12000, scoped, tag = 'internal scratch']
  #allocation2 [shape = 'f32[16,64]{1,0:T(8,128)}', space=vmem, size = 0x2000, scoped, tag = 'scratch operand']
  %s0 = inlined_call_operand.vmem [shape: bf16[16,32], index: 0, kind: input, shape index: {}]
  %s1 = inlined_call_operand.vmem [shape: bf16[32,64], index: 1, kind: input, shape index: {}]
  %s2 = inlined_call_operand.vmem [shape: f32[1,64], index: 2, kind: input, shape index: {}]
  %s3 = inlined_call_operand.vmem [shape: bf16[16,64], index: 3, kind: output, shape index: {}]
  %s4 = sld [smem:[#allocation0]]
  $region30: #{decoder.23} parent=0
    _
  %s6 = ssub.s32 1, %s4
  %s7 = scalar_select 0, %s6, %s4
  // Predicated region
  $region2: #{decoder.23} parent=0 // pred_check
    _
  $region3: #{decoder.23} parent=0 // pred_check_branch
    %9 = sbr.rel (0) target = $region5
  $region4: #{decoder.23} parent=0 // pred_region
    _
  $region5: #{decoder.23} parent=0 // pred_fallthru
    _
  // Predicated region
  $region6: #{decoder.23} parent=0 // pred_check
    _
  $region7: #{decoder.23} parent=0 // pred_check_branch
    %11 = sbr.rel (0) target = $region9
  $region8: #{decoder.23} parent=0 // pred_region
    _
  $region9: #{decoder.23} parent=0 // pred_fallthru
    _
  // Predicated region
  $region10: #{decoder.23} parent=0 // pred_check
    _
  $region11: #{decoder.23} parent=0 // pred_check_branch
    %13 = sbr.rel (0) target = $region13
  $region12: #{decoder.23} parent=0 // pred_region
    _
  $region13: #{decoder.23} parent=0 // pred_fallthru
    _
  %p15 = scmp.eq.s32.totalorder 0, 0
  // Predicated region
  $region14: #{decoder.23} parent=0 // pred_check
    %p16 = pneg %p15
  $region15: #{decoder.23} parent=0 // pred_check_branch
    %18 = sbr.rel (%p16) target = $region17
  $region16: #{decoder.23} parent=0 // pred_region
    %vm19 = vcmask 523264
    %20 = vst.msk [vmem:[#allocation2] sm:$0xff] %vm19, 0.0
    %21 = vst.msk [vmem:[#allocation2 + $0x8] sm:$0xff] %vm19, 0.0
  $region17: #{decoder.23} parent=0 // pred_fallthru
    _
  %v22 = vld [vmem:[#allocation2] sm:$0xff]
  %v23 = vld [vmem:[#allocation2 + $0x8] sm:$0xff]
  %v24 = vld [vmem:[%s0] sm:$0xf]
  %v25 = vld [vmem:[%s0 + $0x4] sm:$0xf]
  %v26 = vld [vmem:[%s1] sm:$0xf]
  %v27 = vld [vmem:[%s1 + $0x4] sm:$0xf]
  %v28 = vld [vmem:[%s1 + $0x8] sm:$0xf]
  %v29 = vld [vmem:[%s1 + $0xc] sm:$0xf]
  %v32 = vunpack.c.l.b16 %v24
  %v33 = vunpack.c.l.b16 %v25
  %v34 = vpack.c.b16 %v33, %v32
  %v39 = vunpack.c.l.b16 %v26
  %v40 = vunpack.c.l.b16 %v27
  %v41 = vunpack.c.l.b16 %v28
  %v42 = vunpack.c.l.b16 %v29
  %v43 = vpack.c.b16 %v40, %v39
  %v44 = vpack.c.b16 %v42, %v41
  %vm47 = vcmask 261120
  %v49 = vsel %vm47, %v34, 0
  %51 = vmatprep.subr.bf16.mxu0 0
  %52 = vmatpush1.bf16.msra.mxu0 0
  %53 = vmatprep.subr.bf16.mxu0 0
  %54 = vmatpush1.bf16.msra.mxu0 0
  %55 = vmatprep.subr.bf16.mxu0 0
  %56 = vmatpush1.bf16.msra.mxu0 0
  %57 = vmatprep.subr.bf16.mxu0 0
  %58 = vmatpush1.bf16.msra.mxu0 0
  %59 = vmatprep.subr.bf16.mxu0 0
  %60 = vmatpush1.bf16.msra.mxu0 0
  %61 = vmatprep.subr.bf16.mxu0 0
  %62 = vmatpush1.bf16.msra.mxu0 0
  %63 = vmatprep.subr.bf16.mxu0 0
  %64 = vmatpush1.bf16.msra.mxu0 %v44
  %65 = vmatprep.subr.bf16.mxu0 0
  %66 = vmatpush1.bf16.msra.mxu0 %v43
  %67 = vmatprep.subr.bf16.mxu0 0
  %68 = vmatpush2.bf16.msra.mxu0 0
  %69 = vmatprep.subr.bf16.mxu0 0
  %70 = vmatpush2.bf16.msra.mxu0 0
  %71 = vmatprep.subr.bf16.mxu0 0
  %72 = vmatpush2.bf16.msra.mxu0 0
  %73 = vmatprep.subr.bf16.mxu0 0
  %74 = vmatpush2.bf16.msra.mxu0 0
  %75 = vmatprep.subr.bf16.mxu0 0
  %76 = vmatpush2.bf16.msra.mxu0 0
  %77 = vmatprep.subr.bf16.mxu0 0
  %78 = vmatpush2.bf16.msra.mxu0 0
  %79 = vmatprep.subr.bf16.mxu0 0
  %80 = vmatpush2.bf16.msra.mxu0 0
  %81 = vmatprep.subr.bf16.mxu0 0
  %82 = vmatpush2.bf16.msra.mxu0 0
  %83 = vmatprep.mubr.bf16.mxu0 0
  %84 = vmatmul.mubr.bf16.gmra.mxu0 %v49
  %v85 = vpop.f32.mrf.mxu0
  %v86 = vadd.f32 0.0, %v85
  %v87 = vpop.f32.mrf.mxu0
  %v88 = vpop.f32.mrf.mxu0
  %v89 = vadd.f32 0.0, %v88
  %v90 = vpop.f32.mrf.mxu0
  %91 = vdwg.mxu0
  %v92 = vadd.f32 %v22, %v86
  %v93 = vadd.f32 %v23, %v89
  %vm94 = vcmask 523264
  %95 = vst.msk [vmem:[#allocation2] sm:$0xff] %vm94, %v92
  %96 = vst.msk [vmem:[#allocation2 + $0x8] sm:$0xff] %vm94, %v93
  // Predicated region
  $region18: #{decoder.23} parent=0 // pred_check
    %p97 = pneg %p15
  $region19: #{decoder.23} parent=0 // pred_check_branch
    %99 = sbr.rel (%p97) target = $region21
  $region20: #{decoder.23} parent=0 // pred_region
    %v100 = vld [vmem:[#allocation2] sm:$0xff]
    %v101 = vld [vmem:[#allocation2 + $0x8] sm:$0xff]
    %v102 = vld [vmem:[%s2] sm:$0x1]
    %v104 = vlaneseq
    %v105 = vshrl.u32 %v104, 7
    %v106 = vsub.s32 0, %v105
    %v107 = vrot.slane %v102, %v106
    %v109 = vadd.f32 %v100, %v107
    %v110 = vadd.f32 %v101, %v107
    %v111 = vpack.c.bf16 %v110, %v109
    %v113 = vunpack.c.l.b16 %v111
    %v114 = vunpack.c.h.b16 %v111
    %v115 = vpack.c.b16 %v113, %v113
    %v116 = vpack.c.b16 %v114, %v114
    %vm119 = vcmask 519168
    %120 = vst.msk [vmem:[%s3] sm:$0xf] %vm119, %v115
    %121 = vst.msk [vmem:[%s3 + $0x4] sm:$0xf] %vm119, %v116
  $region21: #{decoder.23} parent=0 // pred_fallthru
    _
  // Predicated region
  $region22: #{decoder.23} parent=0 // pred_check
    _
  $region23: #{decoder.23} parent=0 // pred_check_branch
    %123 = sbr.rel (0) target = $region25
  $region24: #{decoder.23} parent=0 // pred_region
    _
  $region25: #{decoder.23} parent=0 // pred_fallthru
    _
  // Predicated region
  $region26: #{decoder.23} parent=0 // pred_check
    _
  $region27: #{decoder.23} parent=0 // pred_check_branch
    %125 = sbr.rel (0) target = $region29
  $region28: #{decoder.23} parent=0 // pred_region
    _
  $region29: #{decoder.23} parent=0 // pred_fallthru
    _

// kernel: decoder.27
$region0: #{decoder.27}
  #allocation0 [shape = 'u32[]', space=smem, size = 0x4, offset = 0x4, fixed_abs, tag = 'smem constant byte address 0x4 - core index']
  #allocation1 [shape = 'u32[144,128]{1,0:T(1,128)}', space=vmem, size = 0x12000, scoped, tag = 'internal scratch']
  #allocation2 [shape = 'f32[16,32]{1,0:T(8,128)}', space=vmem, size = 0x2000, scoped, tag = 'scratch operand']
  %s0 = inlined_call_operand.vmem [shape: bf16[16,128], index: 0, kind: input, shape index: {}]
  %s1 = inlined_call_operand.vmem [shape: bf16[128,32], index: 1, kind: input, shape index: {}]
  %s2 = inlined_call_operand.vmem [shape: f32[1,32], index: 2, kind: input, shape index: {}]
  %s3 = inlined_call_operand.vmem [shape: f32[16,32], index: 3, kind: input, shape index: {}]
  %s4 = inlined_call_operand.vmem [shape: f32[1,32], index: 4, kind: input, shape index: {}]
  %s5 = inlined_call_operand.vmem [shape: f32[1,32], index: 5, kind: input, shape index: {}]
  %s6 = inlined_call_operand.vmem [shape: f32[16,32], index: 6, kind: output, shape index: {}]
  %s7 = sld [smem:[#allocation0]]
  $region42: #{decoder.27} parent=0
    _
  %s9 = ssub.s32 1, %s7
  %s10 = scalar_select 0, %s9, %s7
  // Predicated region
  $region2: #{decoder.27} parent=0 // pred_check
    _
  $region3: #{decoder.27} parent=0 // pred_check_branch
    %12 = sbr.rel (0) target = $region5
  $region4: #{decoder.27} parent=0 // pred_region
    _
  $region5: #{decoder.27} parent=0 // pred_fallthru
    _
  // Predicated region
  $region6: #{decoder.27} parent=0 // pred_check
    _
  $region7: #{decoder.27} parent=0 // pred_check_branch
    %14 = sbr.rel (0) target = $region9
  $region8: #{decoder.27} parent=0 // pred_region
    _
  $region9: #{decoder.27} parent=0 // pred_fallthru
    _
  // Predicated region
  $region10: #{decoder.27} parent=0 // pred_check
    _
  $region11: #{decoder.27} parent=0 // pred_check_branch
    %16 = sbr.rel (0) target = $region13
  $region12: #{decoder.27} parent=0 // pred_region
    _
  $region13: #{decoder.27} parent=0 // pred_fallthru
    _
  // Predicated region
  $region14: #{decoder.27} parent=0 // pred_check
    _
  $region15: #{decoder.27} parent=0 // pred_check_branch
    %18 = sbr.rel (0) target = $region17
  $region16: #{decoder.27} parent=0 // pred_region
    _
  $region17: #{decoder.27} parent=0 // pred_fallthru
    _
  // Predicated region
  $region18: #{decoder.27} parent=0 // pred_check
    _
  $region19: #{decoder.27} parent=0 // pred_check_branch
    %20 = sbr.rel (0) target = $region21
  $region20: #{decoder.27} parent=0 // pred_region
    _
  $region21: #{decoder.27} parent=0 // pred_fallthru
    _
  // Predicated region
  $region22: #{decoder.27} parent=0 // pred_check
    _
  $region23: #{decoder.27} parent=0 // pred_check_branch
    %22 = sbr.rel (0) target = $region25
  $region24: #{decoder.27} parent=0 // pred_region
    _
  $region25: #{decoder.27} parent=0 // pred_fallthru
    _
  %p24 = scmp.eq.s32.totalorder 0, 0
  // Predicated region
  $region26: #{decoder.27} parent=0 // pred_check
    %p25 = pneg %p24
  $region27: #{decoder.27} parent=0 // pred_check_branch
    %27 = sbr.rel (%p25) target = $region29
  $region28: #{decoder.27} parent=0 // pred_region
    %vm28 = vcmask 261120
    %29 = vst.msk [vmem:[#allocation2] sm:$0xff] %vm28, 0.0
    %30 = vst.msk [vmem:[#allocation2 + $0x8] sm:$0xff] %vm28, 0.0
  $region29: #{decoder.27} parent=0 // pred_fallthru
    _
  %v31 = vld [vmem:[#allocation2] sm:$0xff]
  %v32 = vld [vmem:[#allocation2 + $0x8] sm:$0xff]
  %v33 = vld [vmem:[%s0] sm:$0xf]
  %v34 = vld [vmem:[%s0 + $0x4] sm:$0xf]
  %v35 = vld [vmem:[%s1] sm:$0xf]
  %v36 = vld [vmem:[%s1 + $0x4] sm:$0xf]
  %v37 = vld [vmem:[%s1 + $0x8] sm:$0xf]
  %v38 = vld [vmem:[%s1 + $0xc] sm:$0xf]
  %v39 = vld [vmem:[%s1 + $0x10] sm:$0xf]
  %v40 = vld [vmem:[%s1 + $0x14] sm:$0xf]
  %v41 = vld [vmem:[%s1 + $0x18] sm:$0xf]
  %v42 = vld [vmem:[%s1 + $0x1c] sm:$0xf]
  %v43 = vld [vmem:[%s1 + $0x20] sm:$0xf]
  %v44 = vld [vmem:[%s1 + $0x24] sm:$0xf]
  %v45 = vld [vmem:[%s1 + $0x28] sm:$0xf]
  %v46 = vld [vmem:[%s1 + $0x2c] sm:$0xf]
  %v47 = vld [vmem:[%s1 + $0x30] sm:$0xf]
  %v48 = vld [vmem:[%s1 + $0x34] sm:$0xf]
  %v49 = vld [vmem:[%s1 + $0x38] sm:$0xf]
  %v50 = vld [vmem:[%s1 + $0x3c] sm:$0xf]
  %v53 = vunpack.c.l.b16 %v33
  %v54 = vunpack.c.l.b16 %v34
  %v55 = vpack.c.b16 %v54, %v53
  %v73 = vunpack.c.l.b16 %v35
  %v74 = vunpack.c.l.b16 %v36
  %v75 = vunpack.c.l.b16 %v37
  %v76 = vunpack.c.l.b16 %v38
  %v77 = vunpack.c.l.b16 %v39
  %v78 = vunpack.c.l.b16 %v40
  %v79 = vunpack.c.l.b16 %v41
  %v80 = vunpack.c.l.b16 %v42
  %v81 = vunpack.c.l.b16 %v43
  %v82 = vunpack.c.l.b16 %v44
  %v83 = vunpack.c.l.b16 %v45
  %v84 = vunpack.c.l.b16 %v46
  %v85 = vunpack.c.l.b16 %v47
  %v86 = vunpack.c.l.b16 %v48
  %v87 = vunpack.c.l.b16 %v49
  %v88 = vunpack.c.l.b16 %v50
  %v89 = vpack.c.b16 %v74, %v73
  %v90 = vpack.c.b16 %v76, %v75
  %v91 = vpack.c.b16 %v78, %v77
  %v92 = vpack.c.b16 %v80, %v79
  %v93 = vpack.c.b16 %v82, %v81
  %v94 = vpack.c.b16 %v84, %v83
  %v95 = vpack.c.b16 %v86, %v85
  %v96 = vpack.c.b16 %v88, %v87
  %105 = vmatprep.subr.bf16.mxu0 0
  %106 = vmatpush1.bf16.msra.mxu0 %v96
  %107 = vmatprep.subr.bf16.mxu0 0
  %108 = vmatpush1.bf16.msra.mxu0 %v95
  %109 = vmatprep.subr.bf16.mxu0 0
  %110 = vmatpush1.bf16.msra.mxu0 %v94
  %111 = vmatprep.subr.bf16.mxu0 0
  %112 = vmatpush1.bf16.msra.mxu0 %v93
  %113 = vmatprep.subr.bf16.mxu0 0
  %114 = vmatpush1.bf16.msra.mxu0 %v92
  %115 = vmatprep.subr.bf16.mxu0 0
  %116 = vmatpush1.bf16.msra.mxu0 %v91
  %117 = vmatprep.subr.bf16.mxu0 0
  %118 = vmatpush1.bf16.msra.mxu0 %v90
  %119 = vmatprep.subr.bf16.mxu0 0
  %120 = vmatpush1.bf16.msra.mxu0 %v89
  %121 = vmatprep.subr.bf16.mxu0 0
  %122 = vmatpush2.bf16.msra.mxu0 0
  %123 = vmatprep.subr.bf16.mxu0 0
  %124 = vmatpush2.bf16.msra.mxu0 0
  %125 = vmatprep.subr.bf16.mxu0 0
  %126 = vmatpush2.bf16.msra.mxu0 0
  %127 = vmatprep.subr.bf16.mxu0 0
  %128 = vmatpush2.bf16.msra.mxu0 0
  %129 = vmatprep.subr.bf16.mxu0 0
  %130 = vmatpush2.bf16.msra.mxu0 0
  %131 = vmatprep.subr.bf16.mxu0 0
  %132 = vmatpush2.bf16.msra.mxu0 0
  %133 = vmatprep.subr.bf16.mxu0 0
  %134 = vmatpush2.bf16.msra.mxu0 0
  %135 = vmatprep.subr.bf16.mxu0 0
  %136 = vmatpush2.bf16.msra.mxu0 0
  %137 = vmatprep.mubr.bf16.mxu0 0
  %138 = vmatmul.mubr.bf16.gmra.mxu0 %v55
  %v139 = vpop.f32.mrf.mxu0
  %v140 = vadd.f32 0.0, %v139
  %v141 = vpop.f32.mrf.mxu0
  %v142 = vpop.f32.mrf.mxu0
  %v143 = vadd.f32 0.0, %v142
  %v144 = vpop.f32.mrf.mxu0
  %145 = vdwg.mxu0
  %v146 = vadd.f32 %v31, %v140
  %v147 = vadd.f32 %v32, %v143
  %vm148 = vcmask 261120
  %149 = vst.msk [vmem:[#allocation2] sm:$0xff] %vm148, %v146
  %150 = vst.msk [vmem:[#allocation2 + $0x8] sm:$0xff] %vm148, %v147
  // Predicated region
  $region30: #{decoder.27} parent=0 // pred_check
    %p151 = pneg %p24
  $region31: #{decoder.27} parent=0 // pred_check_branch
    %153 = sbr.rel (%p151) target = $region33
  $region32: #{decoder.27} parent=0 // pred_region
    %v154 = vld [vmem:[#allocation2] sm:$0xff]
    %v155 = vld [vmem:[#allocation2 + $0x8] sm:$0xff]
    %v156 = vld [vmem:[%s2] sm:$0x1]
    %v158 = vlaneseq
    %v159 = vshrl.u32 %v158, 7
    %v160 = vsub.s32 0, %v159
    %v161 = vrot.slane %v156, %v160
    %v163 = vadd.f32 %v154, %v161
    %v164 = vadd.f32 %v155, %v161
    %v165 = vld [vmem:[%s3] sm:$0xff]
    %v166 = vld [vmem:[%s3 + $0x8] sm:$0xff]
    %v167 = vadd.f32 %v163, %v165
    %v168 = vadd.f32 %v164, %v166
    %v169 = vsel %vm148, %v167, 0.0
    %170 = vadd.xlane.f32.xlu0 %v169
    %v171 = vpop.xlane.xlu0 %170
    %v172 = vsel %vm148, %v168, 0.0
    %173 = vadd.xlane.f32.xlu0 %v172
    %v174 = vpop.xlane.xlu0 %173
    %v175 = vrcp.pop 32.0
    %v176 = vmul.f32 %v171, %v175
    %v177 = vmul.f32 %v174, %v175
    %v178 = vsub.f32 %v167, %v176
    %v179 = vsub.f32 %v168, %v177
    %v180 = vmul.f32 %v178, %v178
    %v181 = vmul.f32 %v179, %v179
    %v182 = vsel %vm148, %v180, 0.0
    %183 = vadd.xlane.f32.xlu0 %v182
    %v184 = vpop.xlane.xlu0 %183
    %v185 = vsel %vm148, %v181, 0.0
    %186 = vadd.xlane.f32.xlu0 %v185
    %v187 = vpop.xlane.xlu0 %186
    %v188 = vmul.f32 %v184, 0.032258064
    %v189 = vmul.f32 %v187, 0.032258064
    %v190 = vrsqrt.pop %v188
    %v191 = vmul.f32 %v188, %v190
    %vm192 = vcmp.eq.f32.partialorder %v188, inf
    %v193 = vsel %vm192, %v188, %v191
    %vm194 = vcmp.eq.f32.partialorder %v188, 0.0
    %v195 = vand.u32 %v188, 2147483648
    %v196 = vsel %vm194, %v195, %v193
    %v197 = vrsqrt.pop %v189
    %v198 = vmul.f32 %v189, %v197
    %vm199 = vcmp.eq.f32.partialorder %v189, inf
    %v200 = vsel %vm199, %v189, %v198
    %vm201 = vcmp.eq.f32.partialorder %v189, 0.0
    %v202 = vand.u32 %v189, 2147483648
    %v203 = vsel %vm201, %v202, %v200
    %v204 = vld [vmem:[%s4] sm:$0x1]
    %v206 = vlaneseq
    %v207 = vshrl.u32 %v206, 7
    %v208 = vsub.s32 0, %v207
    %v209 = vrot.slane %v204, %v208
    %v211 = vmul.f32 %v209, %v178
    %v212 = vmul.f32 %v209, %v179
    %v213 = vadd.f32 %v196, 1e-06
    %v214 = vadd.f32 %v203, 1e-06
    %v215 = vrcp.pop %v213
    %v216 = vmul.f32 %v211, %v215
    %v217 = vrcp.pop %v214
    %v218 = vmul.f32 %v212, %v217
    %v219 = vld [vmem:[%s5] sm:$0x1]
    %v221 = vlaneseq
    %v222 = vshrl.u32 %v221, 7
    %v223 = vsub.s32 0, %v222
    %v224 = vrot.slane %v219, %v223
    %v226 = vadd.f32 %v216, %v224
    %v227 = vadd.f32 %v218, %v224
    %228 = vst.msk [vmem:[%s6] sm:$0xff] %vm148, %v226
    %229 = vst.msk [vmem:[%s6 + $0x8] sm:$0xff] %vm148, %v227
  $region33: #{decoder.27} parent=0 // pred_fallthru
    _
  // Predicated region
  $region34: #{decoder.27} parent=0 // pred_check
    _
  $region35: #{decoder.27} parent=0 // pred_check_branch
    %231 = sbr.rel (0) target = $region37
  $region36: #{decoder.27} parent=0 // pred_region
    _
  $region37: #{decoder.27} parent=0 // pred_fallthru
    _
  // Predicated region
  $region38: #{decoder.27} parent=0 // pred_check
    _
  $region39: #{decoder.27} parent=0 // pred_check_branch
    %233 = sbr.rel (0) target = $region41
  $region40: #{decoder.27} parent=0 // pred_region
    _
  $region41: #{decoder.27} parent=0 // pred_fallthru
    _

</llo_original>
